<compile_context>
chip_gen: v7x
topology: tpu7x:2x2x1
jax: 0.10.0
libtpu: 0.0.40
codegen_flags: <defaults>
</compile_context>

<pallas_src>
import functools

import jax
import jax.numpy as jnp
from jax.experimental import pallas as pl
from jax.experimental.pallas import tpu as pltpu

# Raised from the 16/32 MiB scoped defaults (v5e/v6e have 128 MiB physical)
# while still leaving headroom on v7x's 64 MiB physical VMEM.
VMEM_LIMIT_BYTES = 48 * 1024 * 1024


def _pooled_row_tile(hp: int, cap: int = 64) -> int:
    """Pooled rows per grid step: divides hp, gives >=2 steps when possible."""
    tp = min(hp, cap)
    if hp > 1:
        tp = min(tp, max(hp // 2, 1))     # at least 2 row tiles (pipelining)
    while hp % tp:
        tp -= 1
    return tp


# ----------------------------------------------------------------------------
# Kernel 1: fused Conv2d(3x3, pad=1) + bias + ReLU + MaxPool2d(2,2)
#   grid = (N, pooled-row tiles); the padding halo is built once per image in
#   a VMEM scratch; the 9 taps become a single (rows, 9*Cin) x (9*Cin, Cout)
#   MXU dot; the 2x2 max-pool is fused into the epilogue.
# ----------------------------------------------------------------------------
def _conv3x3_relu_pool_kernel(x_ref, w_ref, b_ref, o_ref, pad_ref, *,
                              H, W, Cin, Cout, TP):
    # x_ref : (1, H, W, Cin)       bf16  full image, resident across row tiles
    # w_ref : (9*Cin, Cout)        bf16  resident im2col weight, rows (ky,kx,ci)
    # b_ref : (1, Cout)            f32   resident
    # o_ref : (1, TP, W//2, Cout)  bf16  one pooled-row tile
    # pad_ref: (H+2, W+2, Cin)     bf16  VMEM scratch: zero halo + interior
    r = pl.program_id(1)

    @pl.when(r == 0)                       # once per image (row axis stays on
    def _fill_padded_scratch():            # one core: it is "arbitrary")
        pad_ref[...] = jnp.zeros((H + 2, W + 2, Cin), jnp.bfloat16)
        pad_ref[1:H + 1, 1:W + 1, :] = x_ref[0]

    RT = 2 * TP                            # conv rows covered by this tile
    y0 = r * RT                            # first conv row == padded row of tap dy=0

    # in-kernel im2col: one slab, one MXU dot (K = 9*Cin)
    taps = []
    for dy in range(3):
        for dx in range(3):
            taps.append(pad_ref[pl.ds(y0 + dy, RT), dx:dx + W, :])
    patches = jnp.concatenate(taps, axis=-1).reshape(RT * W, 9 * Cin)

    acc = jnp.dot(patches, w_ref[...], preferred_element_type=jnp.float32)
    acc = jnp.maximum(acc + b_ref[...], 0.0)           # bias + ReLU on f32

    # fused 2x2 max-pool
    y = acc.reshape(TP, 2, W // 2, 2, Cout)
    y = jnp.max(jnp.max(y, axis=3), axis=1)            # (TP, W//2, Cout)
    # TODO(synk): for v5e, merge (W//2 * Cout) into the store lane dim when
    #             Cout < 128 so stores are unmasked.
    o_ref[0] = y.astype(o_ref.dtype)


def conv3x3_relu_pool(x_nhwc, w_oihw, b):
    """nn.Conv2d(Cin, Cout, 3, padding=1) + ReLU + MaxPool2d(2, 2), fused."""
    N, H, W, Cin = x_nhwc.shape
    Cout = w_oihw.shape[0]
    assert H % 2 == 0 and W % 2 == 0
    hp, wp = H // 2, W // 2
    TP = _pooled_row_tile(hp)
    R = hp // TP

    # (Cout, Cin, 3, 3) -> (ky, kx, Cin, Cout) -> (9*Cin, Cout): row order
    # matches the in-kernel (dy, dx, ci) patch concat order.
    w_mat = jnp.transpose(w_oihw, (2, 3, 1, 0)).reshape(9 * Cin, Cout)
    w_mat = w_mat.astype(jnp.bfloat16)
    b2 = b.reshape(1, Cout).astype(jnp.float32)

    kernel = functools.partial(_conv3x3_relu_pool_kernel,
                               H=H, W=W, Cin=Cin, Cout=Cout, TP=TP)
    return pl.pallas_call(
        kernel,
        out_shape=jax.ShapeDtypeStruct((N, hp, wp, Cout), jnp.bfloat16),
        grid=(N, R),
        in_specs=[
            # full image, constant over r -> DMA'd once per image, resident
            pl.BlockSpec((1, H, W, Cin), lambda n, r: (n, 0, 0, 0)),
            pl.BlockSpec((9 * Cin, Cout), lambda n, r: (0, 0)),   # resident
            pl.BlockSpec((1, Cout), lambda n, r: (0, 0)),         # resident
        ],
        out_specs=pl.BlockSpec((1, TP, wp, Cout), lambda n, r: (n, r, 0, 0)),
        scratch_shapes=[pltpu.VMEM((H + 2, W + 2, Cin), jnp.bfloat16)],
        compiler_params=pltpu.CompilerParams(
            # the row axis must stay on one core (scratch init at r == 0),
            # so only the batch axis is megacore-parallel.
            dimension_semantics=("parallel", "arbitrary"),
            vmem_limit_bytes=VMEM_LIMIT_BYTES),
    )(x_nhwc.astype(jnp.bfloat16), w_mat, b2)


# ----------------------------------------------------------------------------
# Kernel 2: the whole decoder as one fused 3-matmul kernel.
#   ConvTranspose2d(k=2, s=2) has stride == kernel, i.e. zero spatial mixing:
#   every enc3 pixel independently produces an 8x8 output patch.  dec2/dec3
#   use block-diagonal weights so the (di, dj) sub-pixel positions stay
#   blocked in the column dimension and no intermediate activation or
#   de-interleave transpose ever hits HBM.
# ----------------------------------------------------------------------------
def _decoder_kernel(x_ref, w1_ref, b1_ref, w2_ref, b2_ref, w3_ref, b3_ref,
                    o_ref):
    h = jnp.dot(x_ref[...], w1_ref[...], preferred_element_type=jnp.float32)
    h = jnp.maximum(h + b1_ref[...], 0.0).astype(jnp.bfloat16)   # dec1 + ReLU
    h = jnp.dot(h, w2_ref[...], preferred_element_type=jnp.float32)
    h = jnp.maximum(h + b2_ref[...], 0.0).astype(jnp.bfloat16)   # dec2 + ReLU
    h = jnp.dot(h, w3_ref[...], preferred_element_type=jnp.float32)
    h = h + b3_ref[...]                                          # dec3 logits
    # sigmoid: exp + reciprocal both land on the otherwise-idle EUP slot.
    y = pl.reciprocal(1.0 + jnp.exp(-h), approx=True)
    o_ref[...] = jnp.clip(y, 0.0, 1.0).astype(o_ref.dtype)


def decoder_fused(x2d, params, tile_m=2048):
    """Fused ConvT(128->64)+ReLU, ConvT(64->32)+ReLU, ConvT(32->1)+Sigmoid."""
    M, K1 = x2d.shape
    c1i, c1o = params["dec1_w"].shape[:2]       # 128, 64
    c2i, c2o = params["dec2_w"].shape[:2]       # 64, 32
    c3i, c3o = params["dec3_w"].shape[:2]       # 32, 1
    assert K1 == c1i and c1o == c2i and c2o == c3i

    def conv_t_mat(w):   # (Cin, Cout, 2, 2) -> (Cin, 4*Cout), cols (di, dj, co)
        cin, cout = w.shape[:2]
        return jnp.transpose(w, (0, 2, 3, 1)).reshape(cin, 4 * cout)

    w1 = conv_t_mat(params["dec1_w"]).astype(jnp.bfloat16)            # (128, 256)
    b1 = jnp.tile(params["dec1_b"], 4).reshape(1, 4 * c1o).astype(jnp.float32)
    w2 = jnp.kron(jnp.eye(4, dtype=jnp.float32),
                  conv_t_mat(params["dec2_w"])).astype(jnp.bfloat16)  # (256, 512)
    b2 = jnp.tile(params["dec2_b"], 16).reshape(1, 16 * c2o).astype(jnp.float32)
    w3 = jnp.kron(jnp.eye(16, dtype=jnp.float32),
                  conv_t_mat(params["dec3_w"])).astype(jnp.bfloat16)  # (512, 64)
    b3 = jnp.tile(params["dec3_b"], 64).reshape(1, 64 * c3o).astype(jnp.float32)

    n1, n2, n3 = 4 * c1o, 16 * c2o, 64 * c3o
    tm = min(tile_m, M)                      # tm == M (full) or a multiple of 8

    return pl.pallas_call(
        _decoder_kernel,
        out_shape=jax.ShapeDtypeStruct((M, n3), jnp.float32),
        grid=(pl.cdiv(M, tm),),
        in_specs=[
            pl.BlockSpec((tm, K1), lambda i: (i, 0)),
            pl.BlockSpec((K1, n1), lambda i: (0, 0)),   # weights/bias resident
            pl.BlockSpec((1, n1), lambda i: (0, 0)),
            pl.BlockSpec((n1, n2), lambda i: (0, 0)),
            pl.BlockSpec((1, n2), lambda i: (0, 0)),
            pl.BlockSpec((n2, n3), lambda i: (0, 0)),
            pl.BlockSpec((1, n3), lambda i: (0, 0)),
        ],
        out_specs=pl.BlockSpec((tm, n3), lambda i: (i, 0)),
        compiler_params=pltpu.CompilerParams(
            dimension_semantics=("parallel",),
            vmem_limit_bytes=VMEM_LIMIT_BYTES),
    )(x2d.astype(jnp.bfloat16), w1, b1, w2, b2, w3, b3)


# ----------------------------------------------------------------------------
# UNet_old forward
# ----------------------------------------------------------------------------
def unet_old_forward(params, img1_nchw, img2_nchw):
    N, _, H, W = img1_nchw.shape
    assert H % 8 == 0 and W % 8 == 0

    # torch.cat((img1, img2), dim=1) + NCHW->NHWC + bf16 cast: one fused XLA
    # pass over the raw inputs.
    # TODO(synk): fold this prep into the enc1 kernel (two inputs with their
    #             own BlockSpecs) to avoid the extra input pass entirely.
    x = jnp.concatenate([img1_nchw, img2_nchw], axis=1)           # (N, 4, H, W)
    x = jnp.transpose(x, (0, 2, 3, 1)).astype(jnp.bfloat16)       # (N, H, W, 4)

    # encoder: (conv3x3 + ReLU + maxpool2x2) x 3, each stage one fused kernel
    x = conv3x3_relu_pool(x, params["enc1_w"], params["enc1_b"])  # (N,H/2,W/2,32)
    x = conv3x3_relu_pool(x, params["enc2_w"], params["enc2_b"])  # (N,H/4,W/4,64)
    x = conv3x3_relu_pool(x, params["enc3_w"], params["enc3_b"])  # (N,H/8,W/8,128)

    # decoder: all three stride-2 ConvTransposes fused into one kernel
    h3, w3 = H // 8, W // 8
    x2d = x.reshape(N * h3 * w3, x.shape[-1])     # lane dim unchanged: free
    y = decoder_fused(x2d, params)                # (M, 64) f32, cols (di1,dj1,di2,dj2,di3,dj3)

    # single sub-pixel de-interleave on the minimal-size final output
    # TODO(synk): move this permutation into the decoder kernel epilogue.
    y = y.reshape(N, h3, w3, 2, 2, 2, 2, 2, 2)
    y = jnp.transpose(y, (0, 1, 3, 5, 7, 2, 4, 6, 8)).reshape(N, H, W)
    return y[:, None, :, :]                       # NCHW (N, 1, H, W)


# ----------------------------------------------------------------------------
# Deterministic parameter init (shapes match the nn.Module __init__)
# ----------------------------------------------------------------------------
def init_params(key):
    def w_init(k, shape, fan_in):
        bound = (1.0 / fan_in) ** 0.5
        return jax.random.uniform(k, shape, jnp.float32, -bound, bound)

    keys = jax.random.split(key, 12)
    p = {}
    # encoder convs: weight (Cout, Cin, 3, 3)
    p["enc1_w"] = w_init(keys[0], (32, 4, 3, 3), 4 * 9)
    p["enc1_b"] = w_init(keys[1], (32,), 4 * 9)
    p["enc2_w"] = w_init(keys[2], (64, 32, 3, 3), 32 * 9)
    p["enc2_b"] = w_init(keys[3], (64,), 32 * 9)
    p["enc3_w"] = w_init(keys[4], (128, 64, 3, 3), 64 * 9)
    p["enc3_b"] = w_init(keys[5], (128,), 64 * 9)
    # decoder conv-transposes: weight (Cin, Cout, 2, 2)
    p["dec1_w"] = w_init(keys[6], (128, 64, 2, 2), 128 * 4)
    p["dec1_b"] = w_init(keys[7], (64,), 128 * 4)
    p["dec2_w"] = w_init(keys[8], (64, 32, 2, 2), 64 * 4)
    p["dec2_b"] = w_init(keys[9], (32,), 64 * 4)
    p["dec3_w"] = w_init(keys[10], (32, 1, 2, 2), 32 * 4)
    p["dec3_b"] = w_init(keys[11], (1,), 32 * 4)
    return p


if __name__ == "__main__":
    key = jax.random.PRNGKey(0)
    k_params, k_img1, k_img2 = jax.random.split(key, 3)

    params = init_params(k_params)

    # two 2-channel NCHW images; cat -> 4 input channels as the module expects
    img1 = jax.random.normal(k_img1, (2, 2, 16, 16), jnp.float32)
    img2 = jax.random.normal(k_img2, (2, 2, 16, 16), jnp.float32)

    out = jax.jit(unet_old_forward)(params, img1, img2)
    out = jax.block_until_ready(out)

    assert out.shape == (2, 1, 16, 16), out.shape
    assert bool(jnp.all(jnp.isfinite(out)))
    assert bool(jnp.all((out >= 0.0) & (out <= 1.0)))  # sigmoid output range
    print("KERNEL_OK")
</pallas_src>

<mosaic_0001>
module attributes {stable_mosaic.version = 11 : i64} {
  func.func @_conv3x3_relu_pool_kernel(%arg0: i32, %arg1: i32, %arg2: memref<1x16x16x4xbf16, #tpu.memory_space<vmem>>, %arg3: memref<36x32xbf16, #tpu.memory_space<vmem>>, %arg4: memref<1x32xf32, #tpu.memory_space<vmem>>, %arg5: memref<1x4x8x32xbf16, #tpu.memory_space<vmem>>, %arg6: memref<18x18x4xbf16, #tpu.memory_space<vmem>>) attributes {dimension_semantics = [#tpu.dimension_semantics<parallel>, #tpu.dimension_semantics<arbitrary>], iteration_bounds = array<i64: 2, 2>, scalar_prefetch = 0 : i64, scratch_operands = 1 : i64, tpu.core_type = #tpu.core_type<tc>, window_params = [{transform_indices = @transform_0, window_bounds = array<i64: 1, 16, 16, 4>}, {pipeline_mode = #tpu.pipeline_mode<synchronous>, transform_indices = @transform_1, window_bounds = array<i64: 36, 32>}, {pipeline_mode = #tpu.pipeline_mode<synchronous>, transform_indices = @transform_2, window_bounds = array<i64: 1, 32>}, {transform_indices = @transform_3, window_bounds = array<i64: 1, 4, 8, 32>}]} {
    %c0_i32 = arith.constant 0 : i32
    %0 = arith.cmpi eq, %arg1, %c0_i32 : i32
    %1 = arith.extui %0 : i1 to i32
    %c0_i32_0 = arith.constant 0 : i32
    %2 = arith.cmpi ne, %1, %c0_i32_0 : i32
    scf.if %2 {
      %cst_34 = arith.constant 0.000000e+00 : bf16
      %47 = vector.broadcast %cst_34 : bf16 to vector<18x18x4xbf16>
      %c0_35 = arith.constant 0 : index
      %c0_36 = arith.constant 0 : index
      %c0_37 = arith.constant 0 : index
      %48 = vector.load %arg6[%c0_35, %c0_36, %c0_37] : memref<18x18x4xbf16, #tpu.memory_space<vmem>>, vector<18x18x4xbf16>
      tpu.vector_store %arg6[%c0_35, %c0_36, %c0_37], %47 {strides = array<i32>} : memref<18x18x4xbf16, #tpu.memory_space<vmem>>, vector<18x18x4xbf16>,
      %c0_38 = arith.constant 0 : index
      %c0_39 = arith.constant 0 : index
      %c0_40 = arith.constant 0 : index
      %c0_41 = arith.constant 0 : index
      %49 = vector.load %arg2[%c0_38, %c0_39, %c0_40, %c0_41] : memref<1x16x16x4xbf16, #tpu.memory_space<vmem>>, vector<1x16x16x4xbf16>
      %50 = vector.shape_cast %49 : vector<1x16x16x4xbf16> to vector<16x16x4xbf16>
      %c1_42 = arith.constant 1 : index
      %c1_43 = arith.constant 1 : index
      %c0_44 = arith.constant 0 : index
      %51 = vector.load %arg6[%c1_42, %c1_43, %c0_44] : memref<18x18x4xbf16, #tpu.memory_space<vmem>>, vector<16x16x4xbf16>
      tpu.vector_store %arg6[%c1_42, %c1_43, %c0_44], %50 {strides = array<i32>} : memref<18x18x4xbf16, #tpu.memory_space<vmem>>, vector<16x16x4xbf16>,
    } else {
    }
    %c8_i32 = arith.constant 8 : i32
    %3 = arith.muli %arg1, %c8_i32 : i32
    %c0_i32_1 = arith.constant 0 : i32
    %4 = arith.addi %3, %c0_i32_1 : i32
    %5 = arith.index_cast %4 : i32 to index
    %c0 = arith.constant 0 : index
    %c0_2 = arith.constant 0 : index
    %6 = vector.load %arg6[%5, %c0, %c0_2] : memref<18x18x4xbf16, #tpu.memory_space<vmem>>, vector<8x16x4xbf16>
    %c0_i32_3 = arith.constant 0 : i32
    %7 = arith.addi %3, %c0_i32_3 : i32
    %8 = arith.index_cast %7 : i32 to index
    %c1 = arith.constant 1 : index
    %c0_4 = arith.constant 0 : index
    %9 = vector.load %arg6[%8, %c1, %c0_4] : memref<18x18x4xbf16, #tpu.memory_space<vmem>>, vector<8x16x4xbf16>
    %c0_i32_5 = arith.constant 0 : i32
    %10 = arith.addi %3, %c0_i32_5 : i32
    %11 = arith.index_cast %10 : i32 to index
    %c2 = arith.constant 2 : index
    %c0_6 = arith.constant 0 : index
    %12 = vector.load %arg6[%11, %c2, %c0_6] : memref<18x18x4xbf16, #tpu.memory_space<vmem>>, vector<8x16x4xbf16>
    %c1_i32 = arith.constant 1 : i32
    %13 = arith.addi %3, %c1_i32 : i32
    %14 = arith.index_cast %13 : i32 to index
    %c0_7 = arith.constant 0 : index
    %c0_8 = arith.constant 0 : index
    %15 = vector.load %arg6[%14, %c0_7, %c0_8] : memref<18x18x4xbf16, #tpu.memory_space<vmem>>, vector<8x16x4xbf16>
    %c1_i32_9 = arith.constant 1 : i32
    %16 = arith.addi %3, %c1_i32_9 : i32
    %17 = arith.index_cast %16 : i32 to index
    %c1_10 = arith.constant 1 : index
    %c0_11 = arith.constant 0 : index
    %18 = vector.load %arg6[%17, %c1_10, %c0_11] : memref<18x18x4xbf16, #tpu.memory_space<vmem>>, vector<8x16x4xbf16>
    %c1_i32_12 = arith.constant 1 : i32
    %19 = arith.addi %3, %c1_i32_12 : i32
    %20 = arith.index_cast %19 : i32 to index
    %c2_13 = arith.constant 2 : index
    %c0_14 = arith.constant 0 : index
    %21 = vector.load %arg6[%20, %c2_13, %c0_14] : memref<18x18x4xbf16, #tpu.memory_space<vmem>>, vector<8x16x4xbf16>
    %c2_i32 = arith.constant 2 : i32
    %22 = arith.addi %3, %c2_i32 : i32
    %23 = arith.index_cast %22 : i32 to index
    %c0_15 = arith.constant 0 : index
    %c0_16 = arith.constant 0 : index
    %24 = vector.load %arg6[%23, %c0_15, %c0_16] : memref<18x18x4xbf16, #tpu.memory_space<vmem>>, vector<8x16x4xbf16>
    %c2_i32_17 = arith.constant 2 : i32
    %25 = arith.addi %3, %c2_i32_17 : i32
    %26 = arith.index_cast %25 : i32 to index
    %c1_18 = arith.constant 1 : index
    %c0_19 = arith.constant 0 : index
    %27 = vector.load %arg6[%26, %c1_18, %c0_19] : memref<18x18x4xbf16, #tpu.memory_space<vmem>>, vector<8x16x4xbf16>
    %c2_i32_20 = arith.constant 2 : i32
    %28 = arith.addi %3, %c2_i32_20 : i32
    %29 = arith.index_cast %28 : i32 to index
    %c2_21 = arith.constant 2 : index
    %c0_22 = arith.constant 0 : index
    %30 = vector.load %arg6[%29, %c2_21, %c0_22] : memref<18x18x4xbf16, #tpu.memory_space<vmem>>, vector<8x16x4xbf16>
    %31 = tpu.concatenate %6, %9, %12, %15, %18, %21, %24, %27, %30 in 2 : vector<8x16x4xbf16>, vector<8x16x4xbf16>, vector<8x16x4xbf16>, vector<8x16x4xbf16>, vector<8x16x4xbf16>, vector<8x16x4xbf16>, vector<8x16x4xbf16>, vector<8x16x4xbf16>, vector<8x16x4xbf16> -> vector<8x16x36xbf16>
    %32 = vector.shape_cast %31 : vector<8x16x36xbf16> to vector<128x36xbf16>
    %c0_23 = arith.constant 0 : index
    %c0_24 = arith.constant 0 : index
    %33 = vector.load %arg3[%c0_23, %c0_24] : memref<36x32xbf16, #tpu.memory_space<vmem>>, vector<36x32xbf16>
    %cst = arith.constant dense<0.000000e+00> : vector<128x32xf32>
    %34 = tpu.matmul %32, %33, %cst {dimension_numbers = #tpu.dot_dimension_numbers<[1], [0], [0], [1], [0, 0, 1, 1], [], []>} : vector<128x36xbf16>, vector<36x32xbf16>, vector<128x32xf32> -> vector<128x32xf32>
    %c0_25 = arith.constant 0 : index
    %c0_26 = arith.constant 0 : index
    %35 = vector.load %arg4[%c0_25, %c0_26] : memref<1x32xf32, #tpu.memory_space<vmem>>, vector<1x32xf32>
    %36 = vector.broadcast %35 : vector<1x32xf32> to vector<128x32xf32>
    %37 = arith.addf %34, %36 : vector<128x32xf32>
    %cst_27 = arith.constant 0.000000e+00 : f32
    %38 = vector.broadcast %cst_27 : f32 to vector<128x32xf32>
    %39 = arith.maximumf %37, %38 : vector<128x32xf32>
    %40 = vector.shape_cast %39 : vector<128x32xf32> to vector<4x2x8x2x32xf32>
    %cst_28 = arith.constant dense<0xFF800000> : vector<4x2x8x32xf32>
    %41 = vector.multi_reduction <maximumf>, %40, %cst_28 [3] : vector<4x2x8x2x32xf32> to vector<4x2x8x32xf32>
    %cst_29 = arith.constant dense<0xFF800000> : vector<4x8x32xf32>
    %42 = vector.multi_reduction <maximumf>, %41, %cst_29 [1] : vector<4x2x8x32xf32> to vector<4x8x32xf32>
    %43 = arith.truncf %42 : vector<4x8x32xf32> to vector<4x8x32xbf16>
    %c0_30 = arith.constant 0 : index
    %c0_31 = arith.constant 0 : index
    %c0_32 = arith.constant 0 : index
    %c0_33 = arith.constant 0 : index
    %44 = vector.load %arg5[%c0_30, %c0_31, %c0_32, %c0_33] : memref<1x4x8x32xbf16, #tpu.memory_space<vmem>>, vector<1x4x8x32xbf16>
    %45 = vector.shape_cast %44 : vector<1x4x8x32xbf16> to vector<4x8x32xbf16>
    %46 = vector.shape_cast %43 : vector<4x8x32xbf16> to vector<1x4x8x32xbf16>
    tpu.vector_store %arg5[%c0_30, %c0_31, %c0_32, %c0_33], %46 {strides = array<i32>} : memref<1x4x8x32xbf16, #tpu.memory_space<vmem>>, vector<1x4x8x32xbf16>,
    return
  }
  func.func @transform_0(%arg0: i32, %arg1: i32) -> (i32, i32, i32, i32) {
    %c0_i32 = arith.constant 0 : i32
    %c0_i32_0 = arith.constant 0 : i32
    %c0_i32_1 = arith.constant 0 : i32
    %c0_i32_2 = arith.constant 0 : i32
    return %arg0, %c0_i32, %c0_i32_0, %c0_i32_1 : i32, i32, i32, i32
  }
  func.func @transform_1(%arg0: i32, %arg1: i32) -> (i32, i32) {
    %c0_i32 = arith.constant 0 : i32
    %c0_i32_0 = arith.constant 0 : i32
    %c0_i32_1 = arith.constant 0 : i32
    return %c0_i32, %c0_i32_0 : i32, i32
  }
  func.func @transform_2(%arg0: i32, %arg1: i32) -> (i32, i32) {
    %c0_i32 = arith.constant 0 : i32
    %c0_i32_0 = arith.constant 0 : i32
    %c0_i32_1 = arith.constant 0 : i32
    return %c0_i32, %c0_i32_0 : i32, i32
  }
  func.func @transform_3(%arg0: i32, %arg1: i32) -> (i32, i32, i32, i32) {
    %c0_i32 = arith.constant 0 : i32
    %c0_i32_0 = arith.constant 0 : i32
    %c0_i32_1 = arith.constant 0 : i32
    return %arg0, %arg1, %c0_i32, %c0_i32_0 : i32, i32, i32, i32
  }
}

module attributes {stable_mosaic.version = 11 : i64} {
  func.func @_conv3x3_relu_pool_kernel(%arg0: i32, %arg1: i32, %arg2: memref<1x8x8x32xbf16, #tpu.memory_space<vmem>>, %arg3: memref<288x64xbf16, #tpu.memory_space<vmem>>, %arg4: memref<1x64xf32, #tpu.memory_space<vmem>>, %arg5: memref<1x2x4x64xbf16, #tpu.memory_space<vmem>>, %arg6: memref<10x10x32xbf16, #tpu.memory_space<vmem>>) attributes {dimension_semantics = [#tpu.dimension_semantics<parallel>, #tpu.dimension_semantics<arbitrary>], iteration_bounds = array<i64: 2, 2>, scalar_prefetch = 0 : i64, scratch_operands = 1 : i64, tpu.core_type = #tpu.core_type<tc>, window_params = [{transform_indices = @transform_0, window_bounds = array<i64: 1, 8, 8, 32>}, {pipeline_mode = #tpu.pipeline_mode<synchronous>, transform_indices = @transform_1, window_bounds = array<i64: 288, 64>}, {pipeline_mode = #tpu.pipeline_mode<synchronous>, transform_indices = @transform_2, window_bounds = array<i64: 1, 64>}, {transform_indices = @transform_3, window_bounds = array<i64: 1, 2, 4, 64>}]} {
    %c0_i32 = arith.constant 0 : i32
    %0 = arith.cmpi eq, %arg1, %c0_i32 : i32
    %1 = arith.extui %0 : i1 to i32
    %c0_i32_0 = arith.constant 0 : i32
    %2 = arith.cmpi ne, %1, %c0_i32_0 : i32
    scf.if %2 {
      %cst_34 = arith.constant 0.000000e+00 : bf16
      %47 = vector.broadcast %cst_34 : bf16 to vector<10x10x32xbf16>
      %c0_35 = arith.constant 0 : index
      %c0_36 = arith.constant 0 : index
      %c0_37 = arith.constant 0 : index
      %48 = vector.load %arg6[%c0_35, %c0_36, %c0_37] : memref<10x10x32xbf16, #tpu.memory_space<vmem>>, vector<10x10x32xbf16>
      tpu.vector_store %arg6[%c0_35, %c0_36, %c0_37], %47 {strides = array<i32>} : memref<10x10x32xbf16, #tpu.memory_space<vmem>>, vector<10x10x32xbf16>,
      %c0_38 = arith.constant 0 : index
      %c0_39 = arith.constant 0 : index
      %c0_40 = arith.constant 0 : index
      %c0_41 = arith.constant 0 : index
      %49 = vector.load %arg2[%c0_38, %c0_39, %c0_40, %c0_41] : memref<1x8x8x32xbf16, #tpu.memory_space<vmem>>, vector<1x8x8x32xbf16>
      %50 = vector.shape_cast %49 : vector<1x8x8x32xbf16> to vector<8x8x32xbf16>
      %c1_42 = arith.constant 1 : index
      %c1_43 = arith.constant 1 : index
      %c0_44 = arith.constant 0 : index
      %51 = vector.load %arg6[%c1_42, %c1_43, %c0_44] : memref<10x10x32xbf16, #tpu.memory_space<vmem>>, vector<8x8x32xbf16>
      tpu.vector_store %arg6[%c1_42, %c1_43, %c0_44], %50 {strides = array<i32>} : memref<10x10x32xbf16, #tpu.memory_space<vmem>>, vector<8x8x32xbf16>,
    } else {
    }
    %c4_i32 = arith.constant 4 : i32
    %3 = arith.muli %arg1, %c4_i32 : i32
    %c0_i32_1 = arith.constant 0 : i32
    %4 = arith.addi %3, %c0_i32_1 : i32
    %5 = arith.index_cast %4 : i32 to index
    %c0 = arith.constant 0 : index
    %c0_2 = arith.constant 0 : index
    %6 = vector.load %arg6[%5, %c0, %c0_2] : memref<10x10x32xbf16, #tpu.memory_space<vmem>>, vector<4x8x32xbf16>
    %c0_i32_3 = arith.constant 0 : i32
    %7 = arith.addi %3, %c0_i32_3 : i32
    %8 = arith.index_cast %7 : i32 to index
    %c1 = arith.constant 1 : index
    %c0_4 = arith.constant 0 : index
    %9 = vector.load %arg6[%8, %c1, %c0_4] : memref<10x10x32xbf16, #tpu.memory_space<vmem>>, vector<4x8x32xbf16>
    %c0_i32_5 = arith.constant 0 : i32
    %10 = arith.addi %3, %c0_i32_5 : i32
    %11 = arith.index_cast %10 : i32 to index
    %c2 = arith.constant 2 : index
    %c0_6 = arith.constant 0 : index
    %12 = vector.load %arg6[%11, %c2, %c0_6] : memref<10x10x32xbf16, #tpu.memory_space<vmem>>, vector<4x8x32xbf16>
    %c1_i32 = arith.constant 1 : i32
    %13 = arith.addi %3, %c1_i32 : i32
    %14 = arith.index_cast %13 : i32 to index
    %c0_7 = arith.constant 0 : index
    %c0_8 = arith.constant 0 : index
    %15 = vector.load %arg6[%14, %c0_7, %c0_8] : memref<10x10x32xbf16, #tpu.memory_space<vmem>>, vector<4x8x32xbf16>
    %c1_i32_9 = arith.constant 1 : i32
    %16 = arith.addi %3, %c1_i32_9 : i32
    %17 = arith.index_cast %16 : i32 to index
    %c1_10 = arith.constant 1 : index
    %c0_11 = arith.constant 0 : index
    %18 = vector.load %arg6[%17, %c1_10, %c0_11] : memref<10x10x32xbf16, #tpu.memory_space<vmem>>, vector<4x8x32xbf16>
    %c1_i32_12 = arith.constant 1 : i32
    %19 = arith.addi %3, %c1_i32_12 : i32
    %20 = arith.index_cast %19 : i32 to index
    %c2_13 = arith.constant 2 : index
    %c0_14 = arith.constant 0 : index
    %21 = vector.load %arg6[%20, %c2_13, %c0_14] : memref<10x10x32xbf16, #tpu.memory_space<vmem>>, vector<4x8x32xbf16>
    %c2_i32 = arith.constant 2 : i32
    %22 = arith.addi %3, %c2_i32 : i32
    %23 = arith.index_cast %22 : i32 to index
    %c0_15 = arith.constant 0 : index
    %c0_16 = arith.constant 0 : index
    %24 = vector.load %arg6[%23, %c0_15, %c0_16] : memref<10x10x32xbf16, #tpu.memory_space<vmem>>, vector<4x8x32xbf16>
    %c2_i32_17 = arith.constant 2 : i32
    %25 = arith.addi %3, %c2_i32_17 : i32
    %26 = arith.index_cast %25 : i32 to index
    %c1_18 = arith.constant 1 : index
    %c0_19 = arith.constant 0 : index
    %27 = vector.load %arg6[%26, %c1_18, %c0_19] : memref<10x10x32xbf16, #tpu.memory_space<vmem>>, vector<4x8x32xbf16>
    %c2_i32_20 = arith.constant 2 : i32
    %28 = arith.addi %3, %c2_i32_20 : i32
    %29 = arith.index_cast %28 : i32 to index
    %c2_21 = arith.constant 2 : index
    %c0_22 = arith.constant 0 : index
    %30 = vector.load %arg6[%29, %c2_21, %c0_22] : memref<10x10x32xbf16, #tpu.memory_space<vmem>>, vector<4x8x32xbf16>
    %31 = tpu.concatenate %6, %9, %12, %15, %18, %21, %24, %27, %30 in 2 : vector<4x8x32xbf16>, vector<4x8x32xbf16>, vector<4x8x32xbf16>, vector<4x8x32xbf16>, vector<4x8x32xbf16>, vector<4x8x32xbf16>, vector<4x8x32xbf16>, vector<4x8x32xbf16>, vector<4x8x32xbf16> -> vector<4x8x288xbf16>
    %32 = vector.shape_cast %31 : vector<4x8x288xbf16> to vector<32x288xbf16>
    %c0_23 = arith.constant 0 : index
    %c0_24 = arith.constant 0 : index
    %33 = vector.load %arg3[%c0_23, %c0_24] : memref<288x64xbf16, #tpu.memory_space<vmem>>, vector<288x64xbf16>
    %cst = arith.constant dense<0.000000e+00> : vector<32x64xf32>
    %34 = tpu.matmul %32, %33, %cst {dimension_numbers = #tpu.dot_dimension_numbers<[1], [0], [0], [1], [0, 0, 1, 1], [], []>} : vector<32x288xbf16>, vector<288x64xbf16>, vector<32x64xf32> -> vector<32x64xf32>
    %c0_25 = arith.constant 0 : index
    %c0_26 = arith.constant 0 : index
    %35 = vector.load %arg4[%c0_25, %c0_26] : memref<1x64xf32, #tpu.memory_space<vmem>>, vector<1x64xf32>
    %36 = vector.broadcast %35 : vector<1x64xf32> to vector<32x64xf32>
    %37 = arith.addf %34, %36 : vector<32x64xf32>
    %cst_27 = arith.constant 0.000000e+00 : f32
    %38 = vector.broadcast %cst_27 : f32 to vector<32x64xf32>
    %39 = arith.maximumf %37, %38 : vector<32x64xf32>
    %40 = vector.shape_cast %39 : vector<32x64xf32> to vector<2x2x4x2x64xf32>
    %cst_28 = arith.constant dense<0xFF800000> : vector<2x2x4x64xf32>
    %41 = vector.multi_reduction <maximumf>, %40, %cst_28 [3] : vector<2x2x4x2x64xf32> to vector<2x2x4x64xf32>
    %cst_29 = arith.constant dense<0xFF800000> : vector<2x4x64xf32>
    %42 = vector.multi_reduction <maximumf>, %41, %cst_29 [1] : vector<2x2x4x64xf32> to vector<2x4x64xf32>
    %43 = arith.truncf %42 : vector<2x4x64xf32> to vector<2x4x64xbf16>
    %c0_30 = arith.constant 0 : index
    %c0_31 = arith.constant 0 : index
    %c0_32 = arith.constant 0 : index
    %c0_33 = arith.constant 0 : index
    %44 = vector.load %arg5[%c0_30, %c0_31, %c0_32, %c0_33] : memref<1x2x4x64xbf16, #tpu.memory_space<vmem>>, vector<1x2x4x64xbf16>
    %45 = vector.shape_cast %44 : vector<1x2x4x64xbf16> to vector<2x4x64xbf16>
    %46 = vector.shape_cast %43 : vector<2x4x64xbf16> to vector<1x2x4x64xbf16>
    tpu.vector_store %arg5[%c0_30, %c0_31, %c0_32, %c0_33], %46 {strides = array<i32>} : memref<1x2x4x64xbf16, #tpu.memory_space<vmem>>, vector<1x2x4x64xbf16>,
    return
  }
  func.func @transform_0(%arg0: i32, %arg1: i32) -> (i32, i32, i32, i32) {
    %c0_i32 = arith.constant 0 : i32
    %c0_i32_0 = arith.constant 0 : i32
    %c0_i32_1 = arith.constant 0 : i32
    %c0_i32_2 = arith.constant 0 : i32
    return %arg0, %c0_i32, %c0_i32_0, %c0_i32_1 : i32, i32, i32, i32
  }
  func.func @transform_1(%arg0: i32, %arg1: i32) -> (i32, i32) {
    %c0_i32 = arith.constant 0 : i32
    %c0_i32_0 = arith.constant 0 : i32
    %c0_i32_1 = arith.constant 0 : i32
    return %c0_i32, %c0_i32_0 : i32, i32
  }
  func.func @transform_2(%arg0: i32, %arg1: i32) -> (i32, i32) {
    %c0_i32 = arith.constant 0 : i32
    %c0_i32_0 = arith.constant 0 : i32
    %c0_i32_1 = arith.constant 0 : i32
    return %c0_i32, %c0_i32_0 : i32, i32
  }
  func.func @transform_3(%arg0: i32, %arg1: i32) -> (i32, i32, i32, i32) {
    %c0_i32 = arith.constant 0 : i32
    %c0_i32_0 = arith.constant 0 : i32
    %c0_i32_1 = arith.constant 0 : i32
    return %arg0, %arg1, %c0_i32, %c0_i32_0 : i32, i32, i32, i32
  }
}

module attributes {stable_mosaic.version = 11 : i64} {
  func.func @_conv3x3_relu_pool_kernel(%arg0: i32, %arg1: i32, %arg2: memref<1x4x4x64xbf16, #tpu.memory_space<vmem>>, %arg3: memref<576x128xbf16, #tpu.memory_space<vmem>>, %arg4: memref<1x128xf32, #tpu.memory_space<vmem>>, %arg5: memref<1x1x2x128xbf16, #tpu.memory_space<vmem>>, %arg6: memref<6x6x64xbf16, #tpu.memory_space<vmem>>) attributes {dimension_semantics = [#tpu.dimension_semantics<parallel>, #tpu.dimension_semantics<arbitrary>], iteration_bounds = array<i64: 2, 2>, scalar_prefetch = 0 : i64, scratch_operands = 1 : i64, tpu.core_type = #tpu.core_type<tc>, window_params = [{transform_indices = @transform_0, window_bounds = array<i64: 1, 4, 4, 64>}, {pipeline_mode = #tpu.pipeline_mode<synchronous>, transform_indices = @transform_1, window_bounds = array<i64: 576, 128>}, {pipeline_mode = #tpu.pipeline_mode<synchronous>, transform_indices = @transform_2, window_bounds = array<i64: 1, 128>}, {transform_indices = @transform_3, window_bounds = array<i64: 1, 1, 2, 128>}]} {
    %c0_i32 = arith.constant 0 : i32
    %0 = arith.cmpi eq, %arg1, %c0_i32 : i32
    %1 = arith.extui %0 : i1 to i32
    %c0_i32_0 = arith.constant 0 : i32
    %2 = arith.cmpi ne, %1, %c0_i32_0 : i32
    scf.if %2 {
      %cst_35 = arith.constant 0.000000e+00 : bf16
      %47 = vector.broadcast %cst_35 : bf16 to vector<6x6x64xbf16>
      %c0_36 = arith.constant 0 : index
      %c0_37 = arith.constant 0 : index
      %c0_38 = arith.constant 0 : index
      %48 = vector.load %arg6[%c0_36, %c0_37, %c0_38] : memref<6x6x64xbf16, #tpu.memory_space<vmem>>, vector<6x6x64xbf16>
      tpu.vector_store %arg6[%c0_36, %c0_37, %c0_38], %47 {strides = array<i32>} : memref<6x6x64xbf16, #tpu.memory_space<vmem>>, vector<6x6x64xbf16>,
      %c0_39 = arith.constant 0 : index
      %c0_40 = arith.constant 0 : index
      %c0_41 = arith.constant 0 : index
      %c0_42 = arith.constant 0 : index
      %49 = vector.load %arg2[%c0_39, %c0_40, %c0_41, %c0_42] : memref<1x4x4x64xbf16, #tpu.memory_space<vmem>>, vector<1x4x4x64xbf16>
      %50 = vector.shape_cast %49 : vector<1x4x4x64xbf16> to vector<4x4x64xbf16>
      %c1_43 = arith.constant 1 : index
      %c1_44 = arith.constant 1 : index
      %c0_45 = arith.constant 0 : index
      %51 = vector.load %arg6[%c1_43, %c1_44, %c0_45] : memref<6x6x64xbf16, #tpu.memory_space<vmem>>, vector<4x4x64xbf16>
      tpu.vector_store %arg6[%c1_43, %c1_44, %c0_45], %50 {strides = array<i32>} : memref<6x6x64xbf16, #tpu.memory_space<vmem>>, vector<4x4x64xbf16>,
    } else {
    }
    %c2_i32 = arith.constant 2 : i32
    %3 = arith.muli %arg1, %c2_i32 : i32
    %c0_i32_1 = arith.constant 0 : i32
    %4 = arith.addi %3, %c0_i32_1 : i32
    %5 = arith.index_cast %4 : i32 to index
    %c0 = arith.constant 0 : index
    %c0_2 = arith.constant 0 : index
    %6 = vector.load %arg6[%5, %c0, %c0_2] : memref<6x6x64xbf16, #tpu.memory_space<vmem>>, vector<2x4x64xbf16>
    %c0_i32_3 = arith.constant 0 : i32
    %7 = arith.addi %3, %c0_i32_3 : i32
    %8 = arith.index_cast %7 : i32 to index
    %c1 = arith.constant 1 : index
    %c0_4 = arith.constant 0 : index
    %9 = vector.load %arg6[%8, %c1, %c0_4] : memref<6x6x64xbf16, #tpu.memory_space<vmem>>, vector<2x4x64xbf16>
    %c0_i32_5 = arith.constant 0 : i32
    %10 = arith.addi %3, %c0_i32_5 : i32
    %11 = arith.index_cast %10 : i32 to index
    %c2 = arith.constant 2 : index
    %c0_6 = arith.constant 0 : index
    %12 = vector.load %arg6[%11, %c2, %c0_6] : memref<6x6x64xbf16, #tpu.memory_space<vmem>>, vector<2x4x64xbf16>
    %c1_i32 = arith.constant 1 : i32
    %13 = arith.addi %3, %c1_i32 : i32
    %14 = arith.index_cast %13 : i32 to index
    %c0_7 = arith.constant 0 : index
    %c0_8 = arith.constant 0 : index
    %15 = vector.load %arg6[%14, %c0_7, %c0_8] : memref<6x6x64xbf16, #tpu.memory_space<vmem>>, vector<2x4x64xbf16>
    %c1_i32_9 = arith.constant 1 : i32
    %16 = arith.addi %3, %c1_i32_9 : i32
    %17 = arith.index_cast %16 : i32 to index
    %c1_10 = arith.constant 1 : index
    %c0_11 = arith.constant 0 : index
    %18 = vector.load %arg6[%17, %c1_10, %c0_11] : memref<6x6x64xbf16, #tpu.memory_space<vmem>>, vector<2x4x64xbf16>
    %c1_i32_12 = arith.constant 1 : i32
    %19 = arith.addi %3, %c1_i32_12 : i32
    %20 = arith.index_cast %19 : i32 to index
    %c2_13 = arith.constant 2 : index
    %c0_14 = arith.constant 0 : index
    %21 = vector.load %arg6[%20, %c2_13, %c0_14] : memref<6x6x64xbf16, #tpu.memory_space<vmem>>, vector<2x4x64xbf16>
    %c2_i32_15 = arith.constant 2 : i32
    %22 = arith.addi %3, %c2_i32_15 : i32
    %23 = arith.index_cast %22 : i32 to index
    %c0_16 = arith.constant 0 : index
    %c0_17 = arith.constant 0 : index
    %24 = vector.load %arg6[%23, %c0_16, %c0_17] : memref<6x6x64xbf16, #tpu.memory_space<vmem>>, vector<2x4x64xbf16>
    %c2_i32_18 = arith.constant 2 : i32
    %25 = arith.addi %3, %c2_i32_18 : i32
    %26 = arith.index_cast %25 : i32 to index
    %c1_19 = arith.constant 1 : index
    %c0_20 = arith.constant 0 : index
    %27 = vector.load %arg6[%26, %c1_19, %c0_20] : memref<6x6x64xbf16, #tpu.memory_space<vmem>>, vector<2x4x64xbf16>
    %c2_i32_21 = arith.constant 2 : i32
    %28 = arith.addi %3, %c2_i32_21 : i32
    %29 = arith.index_cast %28 : i32 to index
    %c2_22 = arith.constant 2 : index
    %c0_23 = arith.constant 0 : index
    %30 = vector.load %arg6[%29, %c2_22, %c0_23] : memref<6x6x64xbf16, #tpu.memory_space<vmem>>, vector<2x4x64xbf16>
    %31 = tpu.concatenate %6, %9, %12, %15, %18, %21, %24, %27, %30 in 2 : vector<2x4x64xbf16>, vector<2x4x64xbf16>, vector<2x4x64xbf16>, vector<2x4x64xbf16>, vector<2x4x64xbf16>, vector<2x4x64xbf16>, vector<2x4x64xbf16>, vector<2x4x64xbf16>, vector<2x4x64xbf16> -> vector<2x4x576xbf16>
    %32 = vector.shape_cast %31 : vector<2x4x576xbf16> to vector<8x576xbf16>
    %c0_24 = arith.constant 0 : index
    %c0_25 = arith.constant 0 : index
    %33 = vector.load %arg3[%c0_24, %c0_25] : memref<576x128xbf16, #tpu.memory_space<vmem>>, vector<576x128xbf16>
    %cst = arith.constant dense<0.000000e+00> : vector<8x128xf32>
    %34 = tpu.matmul %32, %33, %cst {dimension_numbers = #tpu.dot_dimension_numbers<[1], [0], [0], [1], [0, 0, 1, 1], [], []>} : vector<8x576xbf16>, vector<576x128xbf16>, vector<8x128xf32> -> vector<8x128xf32>
    %c0_26 = arith.constant 0 : index
    %c0_27 = arith.constant 0 : index
    %35 = vector.load %arg4[%c0_26, %c0_27] : memref<1x128xf32, #tpu.memory_space<vmem>>, vector<1x128xf32>
    %36 = vector.broadcast %35 : vector<1x128xf32> to vector<8x128xf32>
    %37 = arith.addf %34, %36 : vector<8x128xf32>
    %cst_28 = arith.constant 0.000000e+00 : f32
    %38 = vector.broadcast %cst_28 : f32 to vector<8x128xf32>
    %39 = arith.maximumf %37, %38 : vector<8x128xf32>
    %40 = vector.shape_cast %39 : vector<8x128xf32> to vector<1x2x2x2x128xf32>
    %cst_29 = arith.constant dense<0xFF800000> : vector<1x2x2x128xf32>
    %41 = vector.multi_reduction <maximumf>, %40, %cst_29 [3] : vector<1x2x2x2x128xf32> to vector<1x2x2x128xf32>
    %cst_30 = arith.constant dense<0xFF800000> : vector<1x2x128xf32>
    %42 = vector.multi_reduction <maximumf>, %41, %cst_30 [1] : vector<1x2x2x128xf32> to vector<1x2x128xf32>
    %43 = arith.truncf %42 : vector<1x2x128xf32> to vector<1x2x128xbf16>
    %c0_31 = arith.constant 0 : index
    %c0_32 = arith.constant 0 : index
    %c0_33 = arith.constant 0 : index
    %c0_34 = arith.constant 0 : index
    %44 = vector.load %arg5[%c0_31, %c0_32, %c0_33, %c0_34] : memref<1x1x2x128xbf16, #tpu.memory_space<vmem>>, vector<1x1x2x128xbf16>
    %45 = vector.shape_cast %44 : vector<1x1x2x128xbf16> to vector<1x2x128xbf16>
    %46 = vector.shape_cast %43 : vector<1x2x128xbf16> to vector<1x1x2x128xbf16>
    tpu.vector_store %arg5[%c0_31, %c0_32, %c0_33, %c0_34], %46 {strides = array<i32>} : memref<1x1x2x128xbf16, #tpu.memory_space<vmem>>, vector<1x1x2x128xbf16>,
    return
  }
  func.func @transform_0(%arg0: i32, %arg1: i32) -> (i32, i32, i32, i32) {
    %c0_i32 = arith.constant 0 : i32
    %c0_i32_0 = arith.constant 0 : i32
    %c0_i32_1 = arith.constant 0 : i32
    %c0_i32_2 = arith.constant 0 : i32
    return %arg0, %c0_i32, %c0_i32_0, %c0_i32_1 : i32, i32, i32, i32
  }
  func.func @transform_1(%arg0: i32, %arg1: i32) -> (i32, i32) {
    %c0_i32 = arith.constant 0 : i32
    %c0_i32_0 = arith.constant 0 : i32
    %c0_i32_1 = arith.constant 0 : i32
    return %c0_i32, %c0_i32_0 : i32, i32
  }
  func.func @transform_2(%arg0: i32, %arg1: i32) -> (i32, i32) {
    %c0_i32 = arith.constant 0 : i32
    %c0_i32_0 = arith.constant 0 : i32
    %c0_i32_1 = arith.constant 0 : i32
    return %c0_i32, %c0_i32_0 : i32, i32
  }
  func.func @transform_3(%arg0: i32, %arg1: i32) -> (i32, i32, i32, i32) {
    %c0_i32 = arith.constant 0 : i32
    %c0_i32_0 = arith.constant 0 : i32
    %c0_i32_1 = arith.constant 0 : i32
    return %arg0, %arg1, %c0_i32, %c0_i32_0 : i32, i32, i32, i32
  }
}

module attributes {stable_mosaic.version = 11 : i64} {
  func.func @_decoder_kernel(%arg0: i32, %arg1: memref<8x128xbf16, #tpu.memory_space<vmem>>, %arg2: memref<128x256xbf16, #tpu.memory_space<vmem>>, %arg3: memref<1x256xf32, #tpu.memory_space<vmem>>, %arg4: memref<256x512xbf16, #tpu.memory_space<vmem>>, %arg5: memref<1x512xf32, #tpu.memory_space<vmem>>, %arg6: memref<512x64xbf16, #tpu.memory_space<vmem>>, %arg7: memref<1x64xf32, #tpu.memory_space<vmem>>, %arg8: memref<8x64xf32, #tpu.memory_space<vmem>>) attributes {dimension_semantics = [#tpu.dimension_semantics<parallel>], iteration_bounds = array<i64: 1>, scalar_prefetch = 0 : i64, scratch_operands = 0 : i64, tpu.core_type = #tpu.core_type<tc>, window_params = [{transform_indices = @transform_0, window_bounds = array<i64: 8, 128>}, {pipeline_mode = #tpu.pipeline_mode<synchronous>, transform_indices = @transform_1, window_bounds = array<i64: 128, 256>}, {pipeline_mode = #tpu.pipeline_mode<synchronous>, transform_indices = @transform_2, window_bounds = array<i64: 1, 256>}, {pipeline_mode = #tpu.pipeline_mode<synchronous>, transform_indices = @transform_3, window_bounds = array<i64: 256, 512>}, {pipeline_mode = #tpu.pipeline_mode<synchronous>, transform_indices = @transform_4, window_bounds = array<i64: 1, 512>}, {pipeline_mode = #tpu.pipeline_mode<synchronous>, transform_indices = @transform_5, window_bounds = array<i64: 512, 64>}, {pipeline_mode = #tpu.pipeline_mode<synchronous>, transform_indices = @transform_6, window_bounds = array<i64: 1, 64>}, {transform_indices = @transform_7, window_bounds = array<i64: 8, 64>}]} {
    %c0 = arith.constant 0 : index
    %c0_0 = arith.constant 0 : index
    %0 = vector.load %arg1[%c0, %c0_0] : memref<8x128xbf16, #tpu.memory_space<vmem>>, vector<8x128xbf16>
    %c0_1 = arith.constant 0 : index
    %c0_2 = arith.constant 0 : index
    %1 = vector.load %arg2[%c0_1, %c0_2] : memref<128x256xbf16, #tpu.memory_space<vmem>>, vector<128x256xbf16>
    %cst = arith.constant dense<0.000000e+00> : vector<8x256xf32>
    %2 = tpu.matmul %0, %1, %cst {dimension_numbers = #tpu.dot_dimension_numbers<[1], [0], [0], [1], [0, 0, 1, 1], [], []>} : vector<8x128xbf16>, vector<128x256xbf16>, vector<8x256xf32> -> vector<8x256xf32>
    %c0_3 = arith.constant 0 : index
    %c0_4 = arith.constant 0 : index
    %3 = vector.load %arg3[%c0_3, %c0_4] : memref<1x256xf32, #tpu.memory_space<vmem>>, vector<1x256xf32>
    %4 = vector.broadcast %3 : vector<1x256xf32> to vector<8x256xf32>
    %5 = arith.addf %2, %4 : vector<8x256xf32>
    %cst_5 = arith.constant 0.000000e+00 : f32
    %6 = vector.broadcast %cst_5 : f32 to vector<8x256xf32>
    %7 = arith.maximumf %5, %6 : vector<8x256xf32>
    %8 = arith.truncf %7 : vector<8x256xf32> to vector<8x256xbf16>
    %c0_6 = arith.constant 0 : index
    %c0_7 = arith.constant 0 : index
    %9 = vector.load %arg4[%c0_6, %c0_7] : memref<256x512xbf16, #tpu.memory_space<vmem>>, vector<256x512xbf16>
    %cst_8 = arith.constant dense<0.000000e+00> : vector<8x512xf32>
    %10 = tpu.matmul %8, %9, %cst_8 {dimension_numbers = #tpu.dot_dimension_numbers<[1], [0], [0], [1], [0, 0, 1, 1], [], []>} : vector<8x256xbf16>, vector<256x512xbf16>, vector<8x512xf32> -> vector<8x512xf32>
    %c0_9 = arith.constant 0 : index
    %c0_10 = arith.constant 0 : index
    %11 = vector.load %arg5[%c0_9, %c0_10] : memref<1x512xf32, #tpu.memory_space<vmem>>, vector<1x512xf32>
    %12 = vector.broadcast %11 : vector<1x512xf32> to vector<8x512xf32>
    %13 = arith.addf %10, %12 : vector<8x512xf32>
    %cst_11 = arith.constant 0.000000e+00 : f32
    %14 = vector.broadcast %cst_11 : f32 to vector<8x512xf32>
    %15 = arith.maximumf %13, %14 : vector<8x512xf32>
    %16 = arith.truncf %15 : vector<8x512xf32> to vector<8x512xbf16>
    %c0_12 = arith.constant 0 : index
    %c0_13 = arith.constant 0 : index
    %17 = vector.load %arg6[%c0_12, %c0_13] : memref<512x64xbf16, #tpu.memory_space<vmem>>, vector<512x64xbf16>
    %cst_14 = arith.constant dense<0.000000e+00> : vector<8x64xf32>
    %18 = tpu.matmul %16, %17, %cst_14 {dimension_numbers = #tpu.dot_dimension_numbers<[1], [0], [0], [1], [0, 0, 1, 1], [], []>} : vector<8x512xbf16>, vector<512x64xbf16>, vector<8x64xf32> -> vector<8x64xf32>
    %c0_15 = arith.constant 0 : index
    %c0_16 = arith.constant 0 : index
    %19 = vector.load %arg7[%c0_15, %c0_16] : memref<1x64xf32, #tpu.memory_space<vmem>>, vector<1x64xf32>
    %20 = vector.broadcast %19 : vector<1x64xf32> to vector<8x64xf32>
    %21 = arith.addf %18, %20 : vector<8x64xf32>
    %cst_17 = arith.constant 0.000000e+00 : f32
    %22 = vector.broadcast %cst_17 : f32 to vector<8x64xf32>
    %23 = arith.subf %22, %21 : vector<8x64xf32>
    %24 = math.exp %23 : vector<8x64xf32>
    %cst_18 = arith.constant 1.000000e+00 : f32
    %25 = vector.broadcast %cst_18 : f32 to vector<8x64xf32>
    %26 = arith.addf %25, %24 : vector<8x64xf32>
    %27 = tpu.reciprocal %26 {approx = true} : vector<8x64xf32> -> vector<8x64xf32>
    %cst_19 = arith.constant 0.000000e+00 : f32
    %cst_20 = arith.constant 1.000000e+00 : f32
    %28 = vector.broadcast %cst_19 : f32 to vector<8x64xf32>
    %29 = arith.maximumf %28, %27 : vector<8x64xf32>
    %30 = vector.broadcast %cst_20 : f32 to vector<8x64xf32>
    %31 = arith.minimumf %30, %29 : vector<8x64xf32>
    %c0_21 = arith.constant 0 : index
    %c0_22 = arith.constant 0 : index
    %32 = vector.load %arg8[%c0_21, %c0_22] : memref<8x64xf32, #tpu.memory_space<vmem>>, vector<8x64xf32>
    tpu.vector_store %arg8[%c0_21, %c0_22], %31 {strides = array<i32>} : memref<8x64xf32, #tpu.memory_space<vmem>>, vector<8x64xf32>,
    return
  }
  func.func @transform_0(%arg0: i32) -> (i32, i32) {
    %c0_i32 = arith.constant 0 : i32
    %c0_i32_0 = arith.constant 0 : i32
    return %arg0, %c0_i32 : i32, i32
  }
  func.func @transform_1(%arg0: i32) -> (i32, i32) {
    %c0_i32 = arith.constant 0 : i32
    %c0_i32_0 = arith.constant 0 : i32
    %c0_i32_1 = arith.constant 0 : i32
    return %c0_i32, %c0_i32_0 : i32, i32
  }
  func.func @transform_2(%arg0: i32) -> (i32, i32) {
    %c0_i32 = arith.constant 0 : i32
    %c0_i32_0 = arith.constant 0 : i32
    %c0_i32_1 = arith.constant 0 : i32
    return %c0_i32, %c0_i32_0 : i32, i32
  }
  func.func @transform_3(%arg0: i32) -> (i32, i32) {
    %c0_i32 = arith.constant 0 : i32
    %c0_i32_0 = arith.constant 0 : i32
    %c0_i32_1 = arith.constant 0 : i32
    return %c0_i32, %c0_i32_0 : i32, i32
  }
  func.func @transform_4(%arg0: i32) -> (i32, i32) {
    %c0_i32 = arith.constant 0 : i32
    %c0_i32_0 = arith.constant 0 : i32
    %c0_i32_1 = arith.constant 0 : i32
    return %c0_i32, %c0_i32_0 : i32, i32
  }
  func.func @transform_5(%arg0: i32) -> (i32, i32) {
    %c0_i32 = arith.constant 0 : i32
    %c0_i32_0 = arith.constant 0 : i32
    %c0_i32_1 = arith.constant 0 : i32
    return %c0_i32, %c0_i32_0 : i32, i32
  }
  func.func @transform_6(%arg0: i32) -> (i32, i32) {
    %c0_i32 = arith.constant 0 : i32
    %c0_i32_0 = arith.constant 0 : i32
    %c0_i32_1 = arith.constant 0 : i32
    return %c0_i32, %c0_i32_0 : i32, i32
  }
  func.func @transform_7(%arg0: i32) -> (i32, i32) {
    %c0_i32 = arith.constant 0 : i32
    %c0_i32_0 = arith.constant 0 : i32
    return %arg0, %c0_i32 : i32, i32
  }
}

</mosaic_0001>

<llo_original>
// kernel: unet_old_forward.6
$region0: #{unet_old_forward.6}
  #allocation0 [shape = 'u32[]', space=smem, size = 0x4, offset = 0x4, fixed_abs, tag = 'smem constant byte address 0x4 - core index']
  #allocation1 [shape = 'u32[144,128]{1,0:T(1,128)}', space=vmem, size = 0x12000, scoped, tag = 'internal scratch']
  #allocation2 [shape = 'bf16[6,6,64]{2,1,0:T(8,128)(2,1)}', space=vmem, size = 0x3000, scoped, tag = 'scratch operand']
  %s0 = inlined_call_operand.vmem [shape: bf16[2,4,4,64], index: 0, kind: input, shape index: {}]
  %s1 = inlined_call_operand.vmem [shape: bf16[576,128], index: 1, kind: input, shape index: {}]
  %s2 = inlined_call_operand.vmem [shape: f32[1,128], index: 2, kind: input, shape index: {}]
  %s3 = inlined_call_operand.vmem [shape: bf16[2,2,2,128], index: 3, kind: output, shape index: {}]
  %s4 = sld [smem:[#allocation0]]
  $region49: #{unet_old_forward.6} parent=0
    _
  %s6 = ssub.s32 1, %s4
  %s7 = scalar_select 0, %s6, %s4
  loop: start=0, step=1, limit=6
  $region2: #{unet_old_forward.6} parent=0 // loop_pre_header
    _
  $region3: #{unet_old_forward.6} parent=0 // loop_header
    %s9 = sphi 0, %s13
    %p10 = scmp.ge.s32.totalorder %s9, 6
    %s16 = sphi 0, %s28
    %s17 = sphi 0, %s24
    %s18 = sphi 0, %s16
    %s19 = sphi 0, %s17
    %s20 = sphi 0, %s18
    %s21 = sphi 0, %s19
    %s31 = sphi 0, %s33
    %s34 = sphi 0, %s31
    %s35 = sphi 0, %s34
    %s51 = sphi 0, %s35
    %s55 = sphi 0, %s55
    %s57 = sphi 0, %s55
    %s58 = sphi 0, %s57
    %s72 = sphi 0, %s58
    %s76 = sphi 0, %s76
    %s78 = sphi 0, %s76
    %s79 = sphi 0, %s78
    %s93 = sphi 0, %s79
    %s101 = sphi 0, %s103
    %s104 = sphi 0, %s101
    %s105 = sphi 0, %s104
    %s121 = sphi 0, %s105
  $region4: #{unet_old_forward.6} parent=0 // loop_header_branch
    %12 = sbr.rel (%p10) target = $region8
  $region5: #{unet_old_forward.6} parent=0 // loop_body
    %s14 = ssub.s32 %s9, 1
    %s15 = ssub.s32 %s9, 2
    %s22 = sadd.s32 1, %s17
    %p23 = scmp.ge.s32.totalorder %s22, 2
    %s24 = scalar_select %p23, 0, %s22
    %s25 = sadd.s32 1, %s16
    %s26 = scalar_select %p23, %s25, %s16
    %p27 = scmp.ge.s32.totalorder %s26, 2
    %s28 = scalar_select %p27, 0, %s26
    %s29 = ssub.s32 %s16, %s28
    %p30 = scmp.eq.s32.totalorder %s29, 0
    %s32 = sadd.s32 %s31, 1
    %s33 = scalar_select %p30, %s31, %s32
    %p36 = pneg %p30
    %p37 = scmp.eq.s32.totalorder %s9, 3
    %p38 = por %p36, %p37
    %p39 = scmp.ne.s32.totalorder %s31, %s34
    %p40 = scmp.eq.s32.totalorder %s9, 0
    %p41 = por %p39, %p40
    %p42 = scmp.ne.s32.totalorder %s31, %s34
    %p43 = scmp.eq.s32.totalorder %s14, 3
    %p44 = por %p42, %p43
    %p45 = scmp.ne.s32.totalorder %s34, %s35
    %p46 = scmp.eq.s32.totalorder %s14, 0
    %p47 = por %p45, %p46
    %p48 = scmp.ne.s32.totalorder %s34, %s35
    %p49 = scmp.eq.s32.totalorder %s15, 3
    %p50 = por %p48, %p49
    %p52 = scmp.ne.s32.totalorder %s35, %s51
    %p53 = scmp.eq.s32.totalorder %s15, 0
    %p54 = por %p52, %p53
    %s56 = sadd.s32 %s55, 1
    %p59 = scmp.eq.s32.totalorder %s9, 3
    %p60 = scmp.ne.s32.totalorder %s55, %s57
    %p61 = scmp.eq.s32.totalorder %s9, 0
    %p62 = por %p60, %p61
    %p63 = scmp.ne.s32.totalorder %s55, %s57
    %p64 = scmp.eq.s32.totalorder %s14, 3
    %p65 = por %p63, %p64
    %p66 = scmp.ne.s32.totalorder %s57, %s58
    %p67 = scmp.eq.s32.totalorder %s14, 0
    %p68 = por %p66, %p67
    %p69 = scmp.ne.s32.totalorder %s57, %s58
    %p70 = scmp.eq.s32.totalorder %s15, 3
    %p71 = por %p69, %p70
    %p73 = scmp.ne.s32.totalorder %s58, %s72
    %p74 = scmp.eq.s32.totalorder %s15, 0
    %p75 = por %p73, %p74
    %s77 = sadd.s32 %s76, 1
    %p80 = scmp.eq.s32.totalorder %s9, 3
    %p81 = scmp.ne.s32.totalorder %s76, %s78
    %p82 = scmp.eq.s32.totalorder %s9, 0
    %p83 = por %p81, %p82
    %p84 = scmp.ne.s32.totalorder %s76, %s78
    %p85 = scmp.eq.s32.totalorder %s14, 3
    %p86 = por %p84, %p85
    %p87 = scmp.ne.s32.totalorder %s78, %s79
    %p88 = scmp.eq.s32.totalorder %s14, 0
    %p89 = por %p87, %p88
    %p90 = scmp.ne.s32.totalorder %s78, %s79
    %p91 = scmp.eq.s32.totalorder %s15, 3
    %p92 = por %p90, %p91
    %p94 = scmp.ne.s32.totalorder %s79, %s93
    %p95 = scmp.eq.s32.totalorder %s15, 0
    %p96 = por %p94, %p95
    %s97 = ssub.s32 %s16, %s28
    %s98 = ssub.s32 %s17, %s24
    %s99 = sor.u32 %s97, %s98
    %p100 = scmp.eq.s32.totalorder %s99, 0
    %s102 = sadd.s32 %s101, 1
    %s103 = scalar_select %p100, %s101, %s102
    %p106 = pneg %p100
    %p107 = scmp.eq.s32.totalorder %s9, 3
    %p108 = por %p106, %p107
    %p109 = scmp.ne.s32.totalorder %s101, %s104
    %p110 = scmp.eq.s32.totalorder %s9, 0
    %p111 = por %p109, %p110
    %p112 = scmp.ne.s32.totalorder %s101, %s104
    %p113 = scmp.eq.s32.totalorder %s14, 3
    %p114 = por %p112, %p113
    %p115 = scmp.ne.s32.totalorder %s104, %s105
    %p116 = scmp.eq.s32.totalorder %s14, 0
    %p117 = por %p115, %p116
    %p118 = scmp.ne.s32.totalorder %s104, %s105
    %p119 = scmp.eq.s32.totalorder %s15, 3
    %p120 = por %p118, %p119
    %p122 = scmp.ne.s32.totalorder %s105, %s121
    %p123 = scmp.eq.s32.totalorder %s15, 0
    %p124 = por %p122, %p123
    %p125 = scmp.le.s32.totalorder 1, %s9
    %p126 = scmp.lt.s32.totalorder %s9, 5
    %p127 = pnand %p125, %p126
    %p128 = pneg %p127
    // Predicated region
    $region9: #{unet_old_forward.6} parent=5 // pred_check
      _
    $region10: #{unet_old_forward.6} parent=5 // pred_check_branch
      %130 = sbr.rel (%p127) target = $region12
    $region11: #{unet_old_forward.6} parent=5 // pred_region
      %s131 = ssub.s32 %s9, 1
      // Predicated region
      $region13: #{unet_old_forward.6} parent=11 // pred_check
        %p132 = pneg %p68
      $region14: #{unet_old_forward.6} parent=11 // pred_check_branch
        %134 = sbr.rel (%p132) target = $region16
      $region15: #{unet_old_forward.6} parent=11 // pred_region
        _
      $region16: #{unet_old_forward.6} parent=11 // pred_fallthru
        _
      // Predicated region
      $region17: #{unet_old_forward.6} parent=11 // pred_check
        %p135 = pneg %p89
      $region18: #{unet_old_forward.6} parent=11 // pred_check_branch
        %137 = sbr.rel (%p135) target = $region20
      $region19: #{unet_old_forward.6} parent=11 // pred_region
        _
      $region20: #{unet_old_forward.6} parent=11 // pred_fallthru
        _
    $region12: #{unet_old_forward.6} parent=5 // pred_fallthru
      _
    %p138 = scmp.lt.s32.totalorder %s9, 4
    // Predicated region
    $region21: #{unet_old_forward.6} parent=5 // pred_check
      %p139 = pneg %p138
    $region22: #{unet_old_forward.6} parent=5 // pred_check_branch
      %141 = sbr.rel (%p139) target = $region24
    $region23: #{unet_old_forward.6} parent=5 // pred_region
      // Predicated region
      $region25: #{unet_old_forward.6} parent=23 // pred_check
        %p142 = pneg %p41
      $region26: #{unet_old_forward.6} parent=23 // pred_check_branch
        %144 = sbr.rel (%p142) target = $region28
      $region27: #{unet_old_forward.6} parent=23 // pred_region
        %p145 = scmp.lt.s32.totalorder %s16, 1
        %s146 = scalar_select %p145, %s16, 1
        %s147 = smul.addr %s146, 4
        %s148 = smul.addr %s147, 2
        %s149 = scalar_lea.vmem %s0, %s148
      $region28: #{unet_old_forward.6} parent=23 // pred_fallthru
        _
    $region24: #{unet_old_forward.6} parent=5 // pred_fallthru
      _
    %p150 = scmp.le.s32.totalorder 1, %s9
    %p151 = scmp.lt.s32.totalorder %s9, 5
    %p152 = pnand %p150, %p151
    %p153 = pneg %p152
    // Predicated region
    $region29: #{unet_old_forward.6} parent=5 // pred_check
      _
    $region30: #{unet_old_forward.6} parent=5 // pred_check_branch
      %155 = sbr.rel (%p152) target = $region32
    $region31: #{unet_old_forward.6} parent=5 // pred_region
      %s156 = ssub.s32 %s9, 1
      %p157 = scmp.lt.s32.totalorder %s18, 1
      %s158 = scalar_select %p157, %s18, 1
      %s159 = smul.addr %s158, 4
      %s160 = smul.addr %s159, 2
      %s161 = scalar_lea.vmem %s0, %s160
      %p162 = pneg %p47
      %p163 = pneg %p44
      %p164 = pneg %p68
      %p165 = pneg %p65
      %p166 = pneg %p89
      %p167 = pneg %p86
      %p168 = pneg %p117
      %p169 = pneg %p114
      %p170 = scmp.lt.s32.totalorder %s18, 1
      %s171 = scalar_select %p170, %s18, 1
      %p172 = scmp.lt.s32.totalorder %s19, 1
      %s173 = scalar_select %p172, %s19, 1
      %s174 = smul.addr %s171, 2
      %s175 = sadd.s32 %s173, %s174
      %s176 = scalar_lea.vmem %s3, %s175
      %p177 = scmp.lt.s32.totalorder %s18, 1
      %s178 = scalar_select %p177, %s18, 1
      %s179 = smul.addr %s178, 4
      %s180 = smul.addr %s179, 2
      %s181 = scalar_lea.vmem %s0, %s180
      %p182 = scmp.lt.s32.totalorder %s18, 1
      %s183 = scalar_select %p182, %s18, 1
      %p184 = scmp.lt.s32.totalorder %s19, 1
      %s185 = scalar_select %p184, %s19, 1
      %s186 = smul.addr %s183, 2
      %s187 = sadd.s32 %s185, %s186
      %s188 = scalar_lea.vmem %s3, %s187
      %p190 = scmp.eq.s32.totalorder %s19, 0
      // Predicated region
      $region33: #{unet_old_forward.6} parent=31 // pred_check
        %p191 = pneg %p190
      $region34: #{unet_old_forward.6} parent=31 // pred_check_branch
        %193 = sbr.rel (%p191) target = $region36
      $region35: #{unet_old_forward.6} parent=31 // pred_region
        %vm194 = vcmask 518144
        %195 = vst.msk [vmem:[#allocation2] sm:$0x7] %vm194, 0
        %196 = vst.msk [vmem:[#allocation2 + $0x4] sm:$0x7] %vm194, 0
        %197 = vst.msk [vmem:[#allocation2 + $0x8] sm:$0x7] %vm194, 0
        %198 = vst.msk [vmem:[#allocation2 + $0xc] sm:$0x7] %vm194, 0
        %199 = vst.msk [vmem:[#allocation2 + $0x10] sm:$0x7] %vm194, 0
        %200 = vst.msk [vmem:[#allocation2 + $0x14] sm:$0x7] %vm194, 0
        %v201 = vld [vmem:[%s181] sm:$0x3]
        %v202 = vld [vmem:[%s181 + $0x2] sm:$0x3]
        %v203 = vld [vmem:[%s181 + $0x4] sm:$0x3]
        %v204 = vld [vmem:[%s181 + $0x6] sm:$0x3]
        %v210 = vunpack.c.l.s4 1983009808
        %v211 = vunpack.c.0.s8 %v210
        %v212 = vlaneseq
        %v213 = vshrl.u32 %v212, 7
        %v214 = vsub.s32 %v211, %v213
        %v215 = vrot.slane %v201, %v214
        %v217 = vunpack.c.l.s4 1983009808
        %v218 = vunpack.c.0.s8 %v217
        %v219 = vlaneseq
        %v220 = vshrl.u32 %v219, 7
        %v221 = vsub.s32 %v218, %v220
        %v222 = vrot.slane %v202, %v221
        %v224 = vunpack.c.l.s4 1983009808
        %v225 = vunpack.c.0.s8 %v224
        %v226 = vlaneseq
        %v227 = vshrl.u32 %v226, 7
        %v228 = vsub.s32 %v225, %v227
        %v229 = vrot.slane %v203, %v228
        %v231 = vunpack.c.l.s4 1983009808
        %v232 = vunpack.c.0.s8 %v231
        %v233 = vlaneseq
        %v234 = vshrl.u32 %v233, 7
        %v235 = vsub.s32 %v232, %v234
        %v236 = vrot.slane %v204, %v235
        %v238 = vshrl.u32 %v215, 16
        %v240 = vrot.slane %v238, 7
        %v241 = vshll.u32 %v215, 16
        %v243 = vor.u32 %v240, %v241
        %v245 = vshrl.u32 %v222, 16
        %v247 = vrot.slane %v245, 7
        %v248 = vshll.u32 %v222, 16
        %v250 = vor.u32 %v247, %v248
        %v252 = vshrl.u32 %v229, 16
        %v254 = vrot.slane %v252, 7
        %v255 = vshll.u32 %v229, 16
        %v257 = vor.u32 %v254, %v255
        %v259 = vshrl.u32 %v236, 16
        %v261 = vrot.slane %v259, 7
        %v262 = vshll.u32 %v236, 16
        %v264 = vor.u32 %v261, %v262
        %s269 = scalar_lea.vmem [#allocation2], 4
        %vm270 = vcmask 518144
        %vm271 = vsmask.f32 2306
        %vm272 = vmand %vm270, %vm271
        %v273 = vld [vmem:[%s269] sm:$0x7]
        %v274 = vsel %vm272, %v243, %v273
        %275 = vst [vmem:[%s269] sm:$0x7] %v274
        %v276 = vld [vmem:[%s269 + $0x4] sm:$0x7]
        %v277 = vsel %vm272, %v250, %v276
        %278 = vst [vmem:[%s269 + $0x4] sm:$0x7] %v277
        %v279 = vld [vmem:[%s269 + $0x8] sm:$0x7]
        %v280 = vsel %vm272, %v257, %v279
        %281 = vst [vmem:[%s269 + $0x8] sm:$0x7] %v280
        %v282 = vld [vmem:[%s269 + $0xc] sm:$0x7]
        %v283 = vsel %vm272, %v264, %v282
        %284 = vst [vmem:[%s269 + $0xc] sm:$0x7] %v283
      $region36: #{unet_old_forward.6} parent=31 // pred_fallthru
        _
      %s285 = smul.u32 %s19, 2
      %s286 = smul.addr %s285, 4
      %s287 = scalar_lea.vmem [#allocation2], %s286
      %v288 = vld [vmem:[%s287] sm:$0x3]
      %v289 = vld [vmem:[%s287 + $0x4] sm:$0x3]
      %v290 = vld [vmem:[%s287] sm:$0x7]
      %v291 = vld [vmem:[%s287 + $0x4] sm:$0x7]
      %v292 = vld [vmem:[%s287] sm:$0x6]
      %v293 = vld [vmem:[%s287 + $0x4] sm:$0x6]
      %s294 = sadd.s32 %s285, 1
      %s295 = smul.addr %s294, 4
      %s296 = scalar_lea.vmem [#allocation2], %s295
      %v297 = vld [vmem:[%s296] sm:$0x3]
      %v298 = vld [vmem:[%s296 + $0x4] sm:$0x3]
      %v299 = vld [vmem:[%s296] sm:$0x7]
      %v300 = vld [vmem:[%s296 + $0x4] sm:$0x7]
      %v301 = vld [vmem:[%s296] sm:$0x6]
      %v302 = vld [vmem:[%s296 + $0x4] sm:$0x6]
      %s303 = sadd.s32 %s285, 2
      %s304 = smul.addr %s303, 4
      %s305 = scalar_lea.vmem [#allocation2], %s304
      %v306 = vld [vmem:[%s305] sm:$0x3]
      %v307 = vld [vmem:[%s305 + $0x4] sm:$0x3]
      %v308 = vld [vmem:[%s305] sm:$0x7]
      %v309 = vld [vmem:[%s305 + $0x4] sm:$0x7]
      %v310 = vld [vmem:[%s305] sm:$0x6]
      %v311 = vld [vmem:[%s305 + $0x4] sm:$0x6]
      %v314 = vunpack.c.l.b16 %v290
      %v315 = vunpack.c.l.b16 %v291
      %v316 = vpack.c.b16 %v314, %v314
      %v317 = vpack.c.b16 %v315, %v315
      %v319 = vshrl.u32 %v316, 16
      %v321 = vshll.u32 %v316, 16
      %v323 = vrot.slane %v321, 1
      %v324 = vor.u32 %v319, %v323
      %v326 = vshrl.u32 %v317, 16
      %v328 = vshll.u32 %v317, 16
      %v330 = vrot.slane %v328, 1
      %v331 = vor.u32 %v326, %v330
      %332 = vrot.lane.b32.xlu0 %v324, 64
      %v333 = vpop.permute.xlu0 %332
      %334 = vrot.lane.b32.xlu0 %v331, 64
      %v335 = vpop.permute.xlu0 %334
      %v338 = vunpack.c.l.b16 %v292
      %v339 = vunpack.c.l.b16 %v293
      %v340 = vpack.c.b16 %v338, %v338
      %v341 = vpack.c.b16 %v339, %v339
      %v342 = vrot.slane %v340, 1
      %v343 = vrot.slane %v341, 1
      %v346 = vunpack.c.l.b16 %v297
      %v347 = vunpack.c.l.b16 %v298
      %v348 = vpack.c.b16 %v346, %v346
      %v349 = vpack.c.b16 %v347, %v347
      %350 = vrot.lane.b32.xlu0 %v348, 64
      %v351 = vpop.permute.xlu0 %350
      %352 = vrot.lane.b32.xlu0 %v349, 64
      %v353 = vpop.permute.xlu0 %352
      %v356 = vunpack.c.l.b16 %v299
      %v357 = vunpack.c.l.b16 %v300
      %v358 = vpack.c.b16 %v356, %v356
      %v359 = vpack.c.b16 %v357, %v357
      %v361 = vshrl.u32 %v358, 16
      %v363 = vshll.u32 %v358, 16
      %v365 = vrot.slane %v363, 1
      %v366 = vor.u32 %v361, %v365
      %v368 = vshrl.u32 %v359, 16
      %v370 = vshll.u32 %v359, 16
      %v372 = vrot.slane %v370, 1
      %v373 = vor.u32 %v368, %v372
      %v376 = vunpack.c.l.b16 %v301
      %v377 = vunpack.c.l.b16 %v302
      %v378 = vpack.c.b16 %v376, %v376
      %v379 = vpack.c.b16 %v377, %v377
      %v380 = vrot.slane %v378, 1
      %v381 = vrot.slane %v379, 1
      %382 = vrot.lane.b32.xlu0 %v380, 64
      %v383 = vpop.permute.xlu0 %382
      %384 = vrot.lane.b32.xlu0 %v381, 64
      %v385 = vpop.permute.xlu0 %384
      %v388 = vunpack.c.l.b16 %v308
      %v389 = vunpack.c.l.b16 %v309
      %v390 = vpack.c.b16 %v388, %v388
      %v391 = vpack.c.b16 %v389, %v389
      %v393 = vshrl.u32 %v390, 16
      %v395 = vshll.u32 %v390, 16
      %v397 = vrot.slane %v395, 1
      %v398 = vor.u32 %v393, %v397
      %v400 = vshrl.u32 %v391, 16
      %v402 = vshll.u32 %v391, 16
      %v404 = vrot.slane %v402, 1
      %v405 = vor.u32 %v400, %v404
      %406 = vrot.lane.b32.xlu0 %v398, 64
      %v407 = vpop.permute.xlu0 %406
      %408 = vrot.lane.b32.xlu0 %v405, 64
      %v409 = vpop.permute.xlu0 %408
      %v412 = vunpack.c.l.b16 %v310
      %v413 = vunpack.c.l.b16 %v311
      %v414 = vpack.c.b16 %v412, %v412
      %v415 = vpack.c.b16 %v413, %v413
      %v416 = vrot.slane %v414, 1
      %v417 = vrot.slane %v415, 1
      %vm418 = vcmask 523264
      %v421 = vsel %vm418, %v288, %v333
      %v424 = vsel %vm418, %v289, %v335
      %v427 = vsel %vm418, %v342, %v351
      %v430 = vsel %vm418, %v343, %v353
      %v433 = vsel %vm418, %v366, %v383
      %v436 = vsel %vm418, %v373, %v385
      %v439 = vsel %vm418, %v306, %v407
      %v442 = vsel %vm418, %v307, %v409
      %v451 = vcombine.low %v421, %v427
      %v452 = vcombine.low %v433, %v439
      %v454 = vunpack.c.l.s4 1983009808
      %v455 = vunpack.c.0.s8 %v454
      %v456 = vlaneseq
      %v457 = vshrl.u32 %v456, 7
      %v458 = vsub.s32 %v455, %v457
      %v459 = vrot.slane %v451, %v458
      %v461 = vunpack.c.l.s4 1983009808
      %v462 = vunpack.c.0.s8 %v461
      %v463 = vlaneseq
      %v464 = vshrl.u32 %v463, 7
      %v465 = vsub.s32 %v462, %v464
      %v466 = vrot.slane %v452, %v465
      %v467 = vcombine.low %v459, %v466
      %v469 = vunpack.c.l.s4 1983009808
      %v470 = vunpack.c.0.s8 %v469
      %v471 = vlaneseq
      %v472 = vshrl.u32 %v471, 7
      %v473 = vsub.s32 %v470, %v472
      %v474 = vrot.slane %v416, %v473
      %v475 = vcombine.low %v424, %v430
      %v476 = vcombine.low %v436, %v442
      %v478 = vunpack.c.l.s4 1983009808
      %v479 = vunpack.c.0.s8 %v478
      %v480 = vlaneseq
      %v481 = vshrl.u32 %v480, 7
      %v482 = vsub.s32 %v479, %v481
      %v483 = vrot.slane %v475, %v482
      %v485 = vunpack.c.l.s4 1983009808
      %v486 = vunpack.c.0.s8 %v485
      %v487 = vlaneseq
      %v488 = vshrl.u32 %v487, 7
      %v489 = vsub.s32 %v486, %v488
      %v490 = vrot.slane %v476, %v489
      %v491 = vcombine.low %v483, %v490
      %v493 = vunpack.c.l.s4 1983009808
      %v494 = vunpack.c.0.s8 %v493
      %v495 = vlaneseq
      %v496 = vshrl.u32 %v495, 7
      %v497 = vsub.s32 %v494, %v496
      %v498 = vrot.slane %v417, %v497
      %v499 = vld [vmem:[%s1] sm:$0xf]
      %v500 = vld [vmem:[%s1 + $0x4] sm:$0xf]
      %v501 = vld [vmem:[%s1 + $0x8] sm:$0xf]
      %v502 = vld [vmem:[%s1 + $0xc] sm:$0xf]
      %v503 = vld [vmem:[%s1 + $0x10] sm:$0xf]
      %v504 = vld [vmem:[%s1 + $0x14] sm:$0xf]
      %v505 = vld [vmem:[%s1 + $0x18] sm:$0xf]
      %v506 = vld [vmem:[%s1 + $0x1c] sm:$0xf]
      %v507 = vld [vmem:[%s1 + $0x20] sm:$0xf]
      %v508 = vld [vmem:[%s1 + $0x24] sm:$0xf]
      %v509 = vld [vmem:[%s1 + $0x28] sm:$0xf]
      %v510 = vld [vmem:[%s1 + $0x2c] sm:$0xf]
      %v511 = vld [vmem:[%s1 + $0x30] sm:$0xf]
      %v512 = vld [vmem:[%s1 + $0x34] sm:$0xf]
      %v513 = vld [vmem:[%s1 + $0x38] sm:$0xf]
      %v514 = vld [vmem:[%s1 + $0x3c] sm:$0xf]
      %v515 = vld [vmem:[%s1 + $0x40] sm:$0xf]
      %v516 = vld [vmem:[%s1 + $0x44] sm:$0xf]
      %v517 = vld [vmem:[%s1 + $0x48] sm:$0xf]
      %v518 = vld [vmem:[%s1 + $0x4c] sm:$0xf]
      %v519 = vld [vmem:[%s1 + $0x50] sm:$0xf]
      %v520 = vld [vmem:[%s1 + $0x54] sm:$0xf]
      %v521 = vld [vmem:[%s1 + $0x58] sm:$0xf]
      %v522 = vld [vmem:[%s1 + $0x5c] sm:$0xf]
      %v523 = vld [vmem:[%s1 + $0x60] sm:$0xf]
      %v524 = vld [vmem:[%s1 + $0x64] sm:$0xf]
      %v525 = vld [vmem:[%s1 + $0x68] sm:$0xf]
      %v526 = vld [vmem:[%s1 + $0x6c] sm:$0xf]
      %v527 = vld [vmem:[%s1 + $0x70] sm:$0xf]
      %v528 = vld [vmem:[%s1 + $0x74] sm:$0xf]
      %v529 = vld [vmem:[%s1 + $0x78] sm:$0xf]
      %v530 = vld [vmem:[%s1 + $0x7c] sm:$0xf]
      %v531 = vld [vmem:[%s1 + $0x80] sm:$0xf]
      %v532 = vld [vmem:[%s1 + $0x84] sm:$0xf]
      %v533 = vld [vmem:[%s1 + $0x88] sm:$0xf]
      %v534 = vld [vmem:[%s1 + $0x8c] sm:$0xf]
      %v535 = vld [vmem:[%s1 + $0x90] sm:$0xf]
      %v536 = vld [vmem:[%s1 + $0x94] sm:$0xf]
      %v537 = vld [vmem:[%s1 + $0x98] sm:$0xf]
      %v538 = vld [vmem:[%s1 + $0x9c] sm:$0xf]
      %v539 = vld [vmem:[%s1 + $0xa0] sm:$0xf]
      %v540 = vld [vmem:[%s1 + $0xa4] sm:$0xf]
      %v541 = vld [vmem:[%s1 + $0xa8] sm:$0xf]
      %v542 = vld [vmem:[%s1 + $0xac] sm:$0xf]
      %v543 = vld [vmem:[%s1 + $0xb0] sm:$0xf]
      %v544 = vld [vmem:[%s1 + $0xb4] sm:$0xf]
      %v545 = vld [vmem:[%s1 + $0xb8] sm:$0xf]
      %v546 = vld [vmem:[%s1 + $0xbc] sm:$0xf]
      %v547 = vld [vmem:[%s1 + $0xc0] sm:$0xf]
      %v548 = vld [vmem:[%s1 + $0xc4] sm:$0xf]
      %v549 = vld [vmem:[%s1 + $0xc8] sm:$0xf]
      %v550 = vld [vmem:[%s1 + $0xcc] sm:$0xf]
      %v551 = vld [vmem:[%s1 + $0xd0] sm:$0xf]
      %v552 = vld [vmem:[%s1 + $0xd4] sm:$0xf]
      %v553 = vld [vmem:[%s1 + $0xd8] sm:$0xf]
      %v554 = vld [vmem:[%s1 + $0xdc] sm:$0xf]
      %v555 = vld [vmem:[%s1 + $0xe0] sm:$0xf]
      %v556 = vld [vmem:[%s1 + $0xe4] sm:$0xf]
      %v557 = vld [vmem:[%s1 + $0xe8] sm:$0xf]
      %v558 = vld [vmem:[%s1 + $0xec] sm:$0xf]
      %v559 = vld [vmem:[%s1 + $0xf0] sm:$0xf]
      %v560 = vld [vmem:[%s1 + $0xf4] sm:$0xf]
      %v561 = vld [vmem:[%s1 + $0xf8] sm:$0xf]
      %v562 = vld [vmem:[%s1 + $0xfc] sm:$0xf]
      %v563 = vld [vmem:[%s1 + $0x100] sm:$0xf]
      %v564 = vld [vmem:[%s1 + $0x104] sm:$0xf]
      %v565 = vld [vmem:[%s1 + $0x108] sm:$0xf]
      %v566 = vld [vmem:[%s1 + $0x10c] sm:$0xf]
      %v567 = vld [vmem:[%s1 + $0x110] sm:$0xf]
      %v568 = vld [vmem:[%s1 + $0x114] sm:$0xf]
      %v569 = vld [vmem:[%s1 + $0x118] sm:$0xf]
      %v570 = vld [vmem:[%s1 + $0x11c] sm:$0xf]
      %v571 = vld [vmem:[%s2] sm:$0x1]
      %v573 = vlaneseq
      %v574 = vshrl.u32 %v573, 7
      %v575 = vsub.s32 0, %v574
      %v576 = vrot.slane %v571, %v575
      %v578 = vcombine.low %v467, %v491
      %v579 = vcombine.high %v467, %v491
      %v581 = vunpack.c.l.s4 1983009808
      %v582 = vunpack.c.0.s8 %v581
      %v583 = vlaneseq
      %v584 = vshrl.u32 %v583, 7
      %v585 = vsub.s32 %v582, %v584
      %v586 = vrot.slane %v578, %v585
      %v588 = vunpack.c.l.s4 1983009808
      %v589 = vunpack.c.0.s8 %v588
      %v590 = vlaneseq
      %v591 = vshrl.u32 %v590, 7
      %v592 = vsub.s32 %v589, %v591
      %v593 = vrot.slane %v579, %v592
      %v594 = vcombine.high %v586, %v586
      %v595 = vcombine.high %v593, %v593
      %v596 = vcombine.low %v474, %v498
      %v598 = vunpack.c.l.s4 1983009808
      %v599 = vunpack.c.0.s8 %v598
      %v600 = vlaneseq
      %v601 = vshrl.u32 %v600, 7
      %v602 = vsub.s32 %v599, %v601
      %v603 = vrot.slane %v596, %v602
      %v680 = vunpack.c.l.b16 %v499
      %v681 = vunpack.c.l.b16 %v500
      %v682 = vunpack.c.l.b16 %v501
      %v683 = vunpack.c.l.b16 %v502
      %v684 = vunpack.c.l.b16 %v503
      %v685 = vunpack.c.l.b16 %v504
      %v686 = vunpack.c.l.b16 %v505
      %v687 = vunpack.c.l.b16 %v506
      %v688 = vunpack.c.l.b16 %v507
      %v689 = vunpack.c.l.b16 %v508
      %v690 = vunpack.c.l.b16 %v509
      %v691 = vunpack.c.l.b16 %v510
      %v692 = vunpack.c.l.b16 %v511
      %v693 = vunpack.c.l.b16 %v512
      %v694 = vunpack.c.l.b16 %v513
      %v695 = vunpack.c.l.b16 %v514
      %v696 = vunpack.c.l.b16 %v515
      %v697 = vunpack.c.l.b16 %v516
      %v698 = vunpack.c.l.b16 %v517
      %v699 = vunpack.c.l.b16 %v518
      %v700 = vunpack.c.l.b16 %v519
      %v701 = vunpack.c.l.b16 %v520
      %v702 = vunpack.c.l.b16 %v521
      %v703 = vunpack.c.l.b16 %v522
      %v704 = vunpack.c.l.b16 %v523
      %v705 = vunpack.c.l.b16 %v524
      %v706 = vunpack.c.l.b16 %v525
      %v707 = vunpack.c.l.b16 %v526
      %v708 = vunpack.c.l.b16 %v527
      %v709 = vunpack.c.l.b16 %v528
      %v710 = vunpack.c.l.b16 %v529
      %v711 = vunpack.c.l.b16 %v530
      %v712 = vunpack.c.l.b16 %v531
      %v713 = vunpack.c.l.b16 %v532
      %v714 = vunpack.c.l.b16 %v533
      %v715 = vunpack.c.l.b16 %v534
      %v716 = vunpack.c.l.b16 %v535
      %v717 = vunpack.c.l.b16 %v536
      %v718 = vunpack.c.l.b16 %v537
      %v719 = vunpack.c.l.b16 %v538
      %v720 = vunpack.c.l.b16 %v539
      %v721 = vunpack.c.l.b16 %v540
      %v722 = vunpack.c.l.b16 %v541
      %v723 = vunpack.c.l.b16 %v542
      %v724 = vunpack.c.l.b16 %v543
      %v725 = vunpack.c.l.b16 %v544
      %v726 = vunpack.c.l.b16 %v545
      %v727 = vunpack.c.l.b16 %v546
      %v728 = vunpack.c.l.b16 %v547
      %v729 = vunpack.c.l.b16 %v548
      %v730 = vunpack.c.l.b16 %v549
      %v731 = vunpack.c.l.b16 %v550
      %v732 = vunpack.c.l.b16 %v551
      %v733 = vunpack.c.l.b16 %v552
      %v734 = vunpack.c.l.b16 %v553
      %v735 = vunpack.c.l.b16 %v554
      %v736 = vunpack.c.l.b16 %v555
      %v737 = vunpack.c.l.b16 %v556
      %v738 = vunpack.c.l.b16 %v557
      %v739 = vunpack.c.l.b16 %v558
      %v740 = vunpack.c.l.b16 %v559
      %v741 = vunpack.c.l.b16 %v560
      %v742 = vunpack.c.l.b16 %v561
      %v743 = vunpack.c.l.b16 %v562
      %v744 = vunpack.c.l.b16 %v563
      %v745 = vunpack.c.l.b16 %v564
      %v746 = vunpack.c.l.b16 %v565
      %v747 = vunpack.c.l.b16 %v566
      %v748 = vunpack.c.l.b16 %v567
      %v749 = vunpack.c.l.b16 %v568
      %v750 = vunpack.c.l.b16 %v569
      %v751 = vunpack.c.l.b16 %v570
      %v752 = vpack.c.b16 %v681, %v680
      %v753 = vpack.c.b16 %v683, %v682
      %v754 = vpack.c.b16 %v685, %v684
      %v755 = vpack.c.b16 %v687, %v686
      %v756 = vpack.c.b16 %v689, %v688
      %v757 = vpack.c.b16 %v691, %v690
      %v758 = vpack.c.b16 %v693, %v692
      %v759 = vpack.c.b16 %v695, %v694
      %v760 = vpack.c.b16 %v697, %v696
      %v761 = vpack.c.b16 %v699, %v698
      %v762 = vpack.c.b16 %v701, %v700
      %v763 = vpack.c.b16 %v703, %v702
      %v764 = vpack.c.b16 %v705, %v704
      %v765 = vpack.c.b16 %v707, %v706
      %v766 = vpack.c.b16 %v709, %v708
      %v767 = vpack.c.b16 %v711, %v710
      %v768 = vpack.c.b16 %v713, %v712
      %v769 = vpack.c.b16 %v715, %v714
      %v770 = vpack.c.b16 %v717, %v716
      %v771 = vpack.c.b16 %v719, %v718
      %v772 = vpack.c.b16 %v721, %v720
      %v773 = vpack.c.b16 %v723, %v722
      %v774 = vpack.c.b16 %v725, %v724
      %v775 = vpack.c.b16 %v727, %v726
      %v776 = vpack.c.b16 %v729, %v728
      %v777 = vpack.c.b16 %v731, %v730
      %v778 = vpack.c.b16 %v733, %v732
      %v779 = vpack.c.b16 %v735, %v734
      %v780 = vpack.c.b16 %v737, %v736
      %v781 = vpack.c.b16 %v739, %v738
      %v782 = vpack.c.b16 %v741, %v740
      %v783 = vpack.c.b16 %v743, %v742
      %v784 = vpack.c.b16 %v745, %v744
      %v785 = vpack.c.b16 %v747, %v746
      %v786 = vpack.c.b16 %v749, %v748
      %v787 = vpack.c.b16 %v751, %v750
      %v825 = vsel %vm418, %v603, 0
      %827 = vmatprep.subr.bf16.mxu0 0
      %828 = vmatpush1.bf16.msra.mxu0 %v752
      %829 = vmatprep.subr.bf16.mxu0 0
      %830 = vmatpush1.bf16.msra.mxu0 %v753
      %831 = vmatprep.subr.bf16.mxu0 0
      %832 = vmatpush1.bf16.msra.mxu0 %v754
      %833 = vmatprep.subr.bf16.mxu0 0
      %834 = vmatpush1.bf16.msra.mxu0 %v755
      %835 = vmatprep.subr.bf16.mxu0 0
      %836 = vmatpush1.bf16.msra.mxu0 %v756
      %837 = vmatprep.subr.bf16.mxu0 0
      %838 = vmatpush1.bf16.msra.mxu0 %v757
      %839 = vmatprep.subr.bf16.mxu0 0
      %840 = vmatpush1.bf16.msra.mxu0 %v758
      %841 = vmatprep.subr.bf16.mxu0 0
      %842 = vmatpush1.bf16.msra.mxu0 %v759
      %843 = vmatprep.subr.bf16.mxu0 0
      %844 = vmatpush1.bf16.msra.mxu0 %v760
      %845 = vmatprep.subr.bf16.mxu0 0
      %846 = vmatpush1.bf16.msra.mxu0 %v761
      %847 = vmatprep.subr.bf16.mxu0 0
      %848 = vmatpush1.bf16.msra.mxu0 %v762
      %849 = vmatprep.subr.bf16.mxu0 0
      %850 = vmatpush1.bf16.msra.mxu0 %v763
      %851 = vmatprep.subr.bf16.mxu0 0
      %852 = vmatpush1.bf16.msra.mxu0 %v764
      %853 = vmatprep.subr.bf16.mxu0 0
      %854 = vmatpush1.bf16.msra.mxu0 %v765
      %855 = vmatprep.subr.bf16.mxu0 0
      %856 = vmatpush1.bf16.msra.mxu0 %v766
      %857 = vmatprep.subr.bf16.mxu0 0
      %858 = vmatpush1.bf16.msra.mxu0 %v767
      %859 = vmatprep.mubr.bf16.mxu0 %v594
      %860 = vmatmul.mubr.bf16.gmra.mrb[0].mxu0 %v586
      %v861 = vpop.f32.mrb[0].mxu0
      %v862 = vadd.f32 %v576, %v861
      %v863 = vpop.f32.mrb[0].mxu0
      %v864 = vpop.f32.mrb[0].mxu0
      %v865 = vpop.f32.mrb[0].mxu0
      %866 = vdwg.mxu0
      %867 = vmatprep.subr.bf16.mxu0 0
      %868 = vmatpush1.bf16.msra.mxu0 %v768
      %869 = vmatprep.subr.bf16.mxu0 0
      %870 = vmatpush1.bf16.msra.mxu0 %v769
      %871 = vmatprep.subr.bf16.mxu0 0
      %872 = vmatpush1.bf16.msra.mxu0 %v770
      %873 = vmatprep.subr.bf16.mxu0 0
      %874 = vmatpush1.bf16.msra.mxu0 %v771
      %875 = vmatprep.subr.bf16.mxu0 0
      %876 = vmatpush1.bf16.msra.mxu0 %v772
      %877 = vmatprep.subr.bf16.mxu0 0
      %878 = vmatpush1.bf16.msra.mxu0 %v773
      %879 = vmatprep.subr.bf16.mxu0 0
      %880 = vmatpush1.bf16.msra.mxu0 %v774
      %881 = vmatprep.subr.bf16.mxu0 0
      %882 = vmatpush1.bf16.msra.mxu0 %v775
      %883 = vmatprep.subr.bf16.mxu0 0
      %884 = vmatpush1.bf16.msra.mxu0 %v776
      %885 = vmatprep.subr.bf16.mxu0 0
      %886 = vmatpush1.bf16.msra.mxu0 %v777
      %887 = vmatprep.subr.bf16.mxu0 0
      %888 = vmatpush1.bf16.msra.mxu0 %v778
      %889 = vmatprep.subr.bf16.mxu0 0
      %890 = vmatpush1.bf16.msra.mxu0 %v779
      %891 = vmatprep.subr.bf16.mxu0 0
      %892 = vmatpush1.bf16.msra.mxu0 %v780
      %893 = vmatprep.subr.bf16.mxu0 0
      %894 = vmatpush1.bf16.msra.mxu0 %v781
      %895 = vmatprep.subr.bf16.mxu0 0
      %896 = vmatpush1.bf16.msra.mxu0 %v782
      %897 = vmatprep.subr.bf16.mxu0 0
      %898 = vmatpush1.bf16.msra.mxu0 %v783
      %899 = vmatprep.mubr.bf16.mxu0 %v595
      %900 = vmatmul.mubr.bf16.gmra.mrb[0].mxu0 %v593
      %v901 = vpop.f32.mrb[0].mxu0
      %v902 = vadd.f32 %v862, %v901
      %v903 = vpop.f32.mrb[0].mxu0
      %v904 = vpop.f32.mrb[0].mxu0
      %v905 = vpop.f32.mrb[0].mxu0
      %906 = vdwg.mxu0
      %907 = vmatprep.subr.bf16.mxu0 0
      %908 = vmatpush1.bf16.msra.mxu0 %v784
      %909 = vmatprep.subr.bf16.mxu0 0
      %910 = vmatpush1.bf16.msra.mxu0 %v785
      %911 = vmatprep.subr.bf16.mxu0 0
      %912 = vmatpush1.bf16.msra.mxu0 %v786
      %913 = vmatprep.subr.bf16.mxu0 0
      %914 = vmatpush1.bf16.msra.mxu0 %v787
      %915 = vmatprep.subr.bf16.mxu0 0
      %916 = vmatpush1.bf16.msra.mxu0 0
      %917 = vmatprep.subr.bf16.mxu0 0
      %918 = vmatpush1.bf16.msra.mxu0 0
      %919 = vmatprep.subr.bf16.mxu0 0
      %920 = vmatpush1.bf16.msra.mxu0 0
      %921 = vmatprep.subr.bf16.mxu0 0
      %922 = vmatpush1.bf16.msra.mxu0 0
      %923 = vmatprep.subr.bf16.mxu0 0
      %924 = vmatpush1.bf16.msra.mxu0 0
      %925 = vmatprep.subr.bf16.mxu0 0
      %926 = vmatpush1.bf16.msra.mxu0 0
      %927 = vmatprep.subr.bf16.mxu0 0
      %928 = vmatpush1.bf16.msra.mxu0 0
      %929 = vmatprep.subr.bf16.mxu0 0
      %930 = vmatpush1.bf16.msra.mxu0 0
      %931 = vmatprep.subr.bf16.mxu0 0
      %932 = vmatpush1.bf16.msra.mxu0 0
      %933 = vmatprep.subr.bf16.mxu0 0
      %934 = vmatpush1.bf16.msra.mxu0 0
      %935 = vmatprep.subr.bf16.mxu0 0
      %936 = vmatpush1.bf16.msra.mxu0 0
      %937 = vmatprep.subr.bf16.mxu0 0
      %938 = vmatpush1.bf16.msra.mxu0 0
      %939 = vmatprep.mubr.bf16.mxu0 0
      %940 = vmatmul.mubr.bf16.gmra.mrb[0].mxu0 %v825
      %v941 = vpop.f32.mrb[0].mxu0
      %v942 = vadd.f32 %v902, %v941
      %v943 = vpop.f32.mrb[0].mxu0
      %v944 = vpop.f32.mrb[0].mxu0
      %v945 = vpop.f32.mrb[0].mxu0
      %946 = vdwg.mxu0
      %v947 = vmax.f32 %v942, 0.0
      %v949 = vcombine.high %v947, %v947
      %v951 = vunpack.c.l.s4 1983009808
      %v952 = vunpack.c.0.s8 %v951
      %v953 = vlaneseq
      %v954 = vshrl.u32 %v953, 7
      %v955 = vsub.s32 %v952, %v954
      %v956 = vrot.slane %v947, %v955
      %v958 = vunpack.c.l.s4 1983009808
      %v959 = vunpack.c.0.s8 %v958
      %v960 = vlaneseq
      %v961 = vshrl.u32 %v960, 7
      %v962 = vsub.s32 %v959, %v961
      %v963 = vrot.slane %v949, %v962
      %v964 = vcombine.high %v956, %v956
      %v965 = vcombine.high %v963, %v963
      %vm970 = vcmask 1041408
      %v971 = vsel %vm970, %v956, -inf
      %v972 = vrot.slane %v971, 4
      %v973 = vmax.f32 %v971, %v972
      %v974 = vrot.slane %v973, 2
      %v975 = vmax.f32 %v973, %v974
      %v976 = vrot.slane %v975, 1
      %v977 = vmax.f32 %v975, %v976
      %v978 = vsel %vm970, %v964, -inf
      %v979 = vrot.slane %v978, 4
      %v980 = vmax.f32 %v978, %v979
      %v981 = vrot.slane %v980, 2
      %v982 = vmax.f32 %v980, %v981
      %v983 = vrot.slane %v982, 1
      %v984 = vmax.f32 %v982, %v983
      %v985 = vsel %vm970, %v963, -inf
      %v986 = vrot.slane %v985, 4
      %v987 = vmax.f32 %v985, %v986
      %v988 = vrot.slane %v987, 2
      %v989 = vmax.f32 %v987, %v988
      %v990 = vrot.slane %v989, 1
      %v991 = vmax.f32 %v989, %v990
      %v992 = vsel %vm970, %v965, -inf
      %v993 = vrot.slane %v992, 4
      %v994 = vmax.f32 %v992, %v993
      %v995 = vrot.slane %v994, 2
      %v996 = vmax.f32 %v994, %v995
      %v997 = vrot.slane %v996, 1
      %v998 = vmax.f32 %v996, %v997
      %v999 = vmax.f32 %v977, %v991
      %v1000 = vmax.f32 %v984, %v998
      %v1001 = vpack.c.bf16 %v999, %v999
      %v1002 = vpack.c.bf16 %v1000, %v1000
      %v1006 = vunpack.c.l.s4 1966171168
      %v1007 = vunpack.c.0.s8 %v1006
      %v1008 = vlaneseq
      %v1009 = vshrl.u32 %v1008, 7
      %v1010 = vsub.s32 %v1007, %v1009
      %v1011 = vrot.slane %v1001, %v1010
      %v1013 = vunpack.c.l.s4 1966171168
      %v1014 = vunpack.c.0.s8 %v1013
      %v1015 = vlaneseq
      %v1016 = vshrl.u32 %v1015, 7
      %v1017 = vsub.s32 %v1014, %v1016
      %v1018 = vrot.slane %v1011, %v1017
      %v1020 = vunpack.c.l.s4 1966171168
      %v1021 = vunpack.c.0.s8 %v1020
      %v1022 = vlaneseq
      %v1023 = vshrl.u32 %v1022, 7
      %v1024 = vsub.s32 %v1021, %v1023
      %v1025 = vrot.slane %v1002, %v1024
      %v1027 = vunpack.c.l.s4 1966171168
      %v1028 = vunpack.c.0.s8 %v1027
      %v1029 = vlaneseq
      %v1030 = vshrl.u32 %v1029, 7
      %v1031 = vsub.s32 %v1028, %v1030
      %v1032 = vrot.slane %v1025, %v1031
      %v1034 = vunpack.c.l.s4 1935823168
      %v1035 = vunpack.c.0.s8 %v1034
      %v1036 = vlaneseq
      %v1037 = vshrl.u32 %v1036, 7
      %v1038 = vsub.s32 %v1035, %v1037
      %v1039 = vrot.slane %v1018, %v1038
      %v1041 = vunpack.c.l.s4 1935823168
      %v1042 = vunpack.c.0.s8 %v1041
      %v1043 = vlaneseq
      %v1044 = vshrl.u32 %v1043, 7
      %v1045 = vsub.s32 %v1042, %v1044
      %v1046 = vrot.slane %v1039, %v1045
      %v1048 = vunpack.c.l.s4 1935823168
      %v1049 = vunpack.c.0.s8 %v1048
      %v1050 = vlaneseq
      %v1051 = vshrl.u32 %v1050, 7
      %v1052 = vsub.s32 %v1049, %v1051
      %v1053 = vrot.slane %v1032, %v1052
      %v1055 = vunpack.c.l.s4 1935823168
      %v1056 = vunpack.c.0.s8 %v1055
      %v1057 = vlaneseq
      %v1058 = vshrl.u32 %v1057, 7
      %v1059 = vsub.s32 %v1056, %v1058
      %v1060 = vrot.slane %v1053, %v1059
      %v1061 = vunpack.c.l.b16 %v1046
      %v1062 = vunpack.c.l.b16 %v1060
      %v1063 = vrot.slane %v1062, 7
      %vm1064 = vcmask 1041409
      %v1065 = vsel %vm1064, %v1063, %v1061
      %v1066 = vpack.c.b16 %v1065, %v1065
      %v1068 = vunpack.c.l.s4 1966171168
      %v1069 = vunpack.c.0.s8 %v1068
      %v1070 = vlaneseq
      %v1071 = vshrl.u32 %v1070, 7
      %v1072 = vsub.s32 %v1069, %v1071
      %v1073 = vrot.slane %v1066, %v1072
      %v1075 = vunpack.c.l.s4 1966171168
      %v1076 = vunpack.c.0.s8 %v1075
      %v1077 = vlaneseq
      %v1078 = vshrl.u32 %v1077, 7
      %v1079 = vsub.s32 %v1076, %v1078
      %v1080 = vrot.slane %v1073, %v1079
      %1082 = vst [vmem:[%s188] sm:$0x1] %v1080
      %p1083 = scmp.lt.s32.totalorder %s18, 1
      %s1084 = scalar_select %p1083, %s18, 1
      %p1085 = scmp.lt.s32.totalorder %s19, 1
      %s1086 = scalar_select %p1085, %s19, 1
      %s1087 = smul.addr %s1084, 2
      %s1088 = sadd.s32 %s1086, %s1087
      %s1089 = scalar_lea.vmem %s3, %s1088
      // Predicated region
      $region37: #{unet_old_forward.6} parent=31 // pred_check
        %p1090 = pneg %p114
      $region38: #{unet_old_forward.6} parent=31 // pred_check_branch
        %1092 = sbr.rel (%p1090) target = $region40
      $region39: #{unet_old_forward.6} parent=31 // pred_region
        _
      $region40: #{unet_old_forward.6} parent=31 // pred_fallthru
        _
    $region32: #{unet_old_forward.6} parent=5 // pred_fallthru
      _
    %p1093 = scmp.le.s32.totalorder 2, %s9
    // Predicated region
    $region41: #{unet_old_forward.6} parent=5 // pred_check
      %p1094 = pneg %p1093
    $region42: #{unet_old_forward.6} parent=5 // pred_check_branch
      %1096 = sbr.rel (%p1094) target = $region44
    $region43: #{unet_old_forward.6} parent=5 // pred_region
      %s1097 = ssub.s32 %s9, 2
      // Predicated region
      $region45: #{unet_old_forward.6} parent=43 // pred_check
        %p1098 = pneg %p120
      $region46: #{unet_old_forward.6} parent=43 // pred_check_branch
        %1100 = sbr.rel (%p1098) target = $region48
      $region47: #{unet_old_forward.6} parent=43 // pred_region
        %p1101 = scmp.lt.s32.totalorder %s20, 1
        %s1102 = scalar_select %p1101, %s20, 1
        %p1103 = scmp.lt.s32.totalorder %s21, 1
        %s1104 = scalar_select %p1103, %s21, 1
        %s1105 = smul.addr %s1102, 2
        %s1106 = sadd.s32 %s1104, %s1105
        %s1107 = scalar_lea.vmem %s3, %s1106
      $region48: #{unet_old_forward.6} parent=43 // pred_fallthru
        _
    $region44: #{unet_old_forward.6} parent=5 // pred_fallthru
      _
  $region6: #{unet_old_forward.6} parent=0 // loop_footer
    %s13 = sadd.s32 1, %s9
  $region7: #{unet_old_forward.6} parent=0 // loop_footer_branch
    %8 = sbr.rel target = $region3
  $region8: #{unet_old_forward.6} parent=0 // loop_exit
    _

// kernel: unet_old_forward.5
$region0: #{unet_old_forward.5}
  #allocation0 [shape = 'u32[]', space=smem, size = 0x4, offset = 0x4, fixed_abs, tag = 'smem constant byte address 0x4 - core index']
  #allocation1 [shape = 'u32[144,128]{1,0:T(1,128)}', space=vmem, size = 0x12000, scoped, tag = 'internal scratch']
  #allocation2 [shape = 'bf16[10,10,32]{2,1,0:T(8,128)(2,1)}', space=vmem, size = 0xa000, scoped, tag = 'scratch operand']
  %s0 = inlined_call_operand.vmem [shape: bf16[2,8,8,32], index: 0, kind: input, shape index: {}]
  %s1 = inlined_call_operand.vmem [shape: bf16[288,64], index: 1, kind: input, shape index: {}]
  %s2 = inlined_call_operand.vmem [shape: f32[1,64], index: 2, kind: input, shape index: {}]
  %s3 = inlined_call_operand.vmem [shape: bf16[2,4,4,64], index: 3, kind: output, shape index: {}]
  %s4 = sld [smem:[#allocation0]]
  $region49: #{unet_old_forward.5} parent=0
    _
  %s6 = ssub.s32 1, %s4
  %s7 = scalar_select 0, %s6, %s4
  loop: start=0, step=1, limit=6
  $region2: #{unet_old_forward.5} parent=0 // loop_pre_header
    _
  $region3: #{unet_old_forward.5} parent=0 // loop_header
    %s9 = sphi 0, %s13
    %p10 = scmp.ge.s32.totalorder %s9, 6
    %s16 = sphi 0, %s28
    %s17 = sphi 0, %s24
    %s18 = sphi 0, %s16
    %s19 = sphi 0, %s17
    %s20 = sphi 0, %s18
    %s21 = sphi 0, %s19
    %s31 = sphi 0, %s33
    %s34 = sphi 0, %s31
    %s35 = sphi 0, %s34
    %s51 = sphi 0, %s35
    %s55 = sphi 0, %s55
    %s57 = sphi 0, %s55
    %s58 = sphi 0, %s57
    %s72 = sphi 0, %s58
    %s76 = sphi 0, %s76
    %s78 = sphi 0, %s76
    %s79 = sphi 0, %s78
    %s93 = sphi 0, %s79
    %s101 = sphi 0, %s103
    %s104 = sphi 0, %s101
    %s105 = sphi 0, %s104
    %s121 = sphi 0, %s105
  $region4: #{unet_old_forward.5} parent=0 // loop_header_branch
    %12 = sbr.rel (%p10) target = $region8
  $region5: #{unet_old_forward.5} parent=0 // loop_body
    %s14 = ssub.s32 %s9, 1
    %s15 = ssub.s32 %s9, 2
    %s22 = sadd.s32 1, %s17
    %p23 = scmp.ge.s32.totalorder %s22, 2
    %s24 = scalar_select %p23, 0, %s22
    %s25 = sadd.s32 1, %s16
    %s26 = scalar_select %p23, %s25, %s16
    %p27 = scmp.ge.s32.totalorder %s26, 2
    %s28 = scalar_select %p27, 0, %s26
    %s29 = ssub.s32 %s16, %s28
    %p30 = scmp.eq.s32.totalorder %s29, 0
    %s32 = sadd.s32 %s31, 1
    %s33 = scalar_select %p30, %s31, %s32
    %p36 = pneg %p30
    %p37 = scmp.eq.s32.totalorder %s9, 3
    %p38 = por %p36, %p37
    %p39 = scmp.ne.s32.totalorder %s31, %s34
    %p40 = scmp.eq.s32.totalorder %s9, 0
    %p41 = por %p39, %p40
    %p42 = scmp.ne.s32.totalorder %s31, %s34
    %p43 = scmp.eq.s32.totalorder %s14, 3
    %p44 = por %p42, %p43
    %p45 = scmp.ne.s32.totalorder %s34, %s35
    %p46 = scmp.eq.s32.totalorder %s14, 0
    %p47 = por %p45, %p46
    %p48 = scmp.ne.s32.totalorder %s34, %s35
    %p49 = scmp.eq.s32.totalorder %s15, 3
    %p50 = por %p48, %p49
    %p52 = scmp.ne.s32.totalorder %s35, %s51
    %p53 = scmp.eq.s32.totalorder %s15, 0
    %p54 = por %p52, %p53
    %s56 = sadd.s32 %s55, 1
    %p59 = scmp.eq.s32.totalorder %s9, 3
    %p60 = scmp.ne.s32.totalorder %s55, %s57
    %p61 = scmp.eq.s32.totalorder %s9, 0
    %p62 = por %p60, %p61
    %p63 = scmp.ne.s32.totalorder %s55, %s57
    %p64 = scmp.eq.s32.totalorder %s14, 3
    %p65 = por %p63, %p64
    %p66 = scmp.ne.s32.totalorder %s57, %s58
    %p67 = scmp.eq.s32.totalorder %s14, 0
    %p68 = por %p66, %p67
    %p69 = scmp.ne.s32.totalorder %s57, %s58
    %p70 = scmp.eq.s32.totalorder %s15, 3
    %p71 = por %p69, %p70
    %p73 = scmp.ne.s32.totalorder %s58, %s72
    %p74 = scmp.eq.s32.totalorder %s15, 0
    %p75 = por %p73, %p74
    %s77 = sadd.s32 %s76, 1
    %p80 = scmp.eq.s32.totalorder %s9, 3
    %p81 = scmp.ne.s32.totalorder %s76, %s78
    %p82 = scmp.eq.s32.totalorder %s9, 0
    %p83 = por %p81, %p82
    %p84 = scmp.ne.s32.totalorder %s76, %s78
    %p85 = scmp.eq.s32.totalorder %s14, 3
    %p86 = por %p84, %p85
    %p87 = scmp.ne.s32.totalorder %s78, %s79
    %p88 = scmp.eq.s32.totalorder %s14, 0
    %p89 = por %p87, %p88
    %p90 = scmp.ne.s32.totalorder %s78, %s79
    %p91 = scmp.eq.s32.totalorder %s15, 3
    %p92 = por %p90, %p91
    %p94 = scmp.ne.s32.totalorder %s79, %s93
    %p95 = scmp.eq.s32.totalorder %s15, 0
    %p96 = por %p94, %p95
    %s97 = ssub.s32 %s16, %s28
    %s98 = ssub.s32 %s17, %s24
    %s99 = sor.u32 %s97, %s98
    %p100 = scmp.eq.s32.totalorder %s99, 0
    %s102 = sadd.s32 %s101, 1
    %s103 = scalar_select %p100, %s101, %s102
    %p106 = pneg %p100
    %p107 = scmp.eq.s32.totalorder %s9, 3
    %p108 = por %p106, %p107
    %p109 = scmp.ne.s32.totalorder %s101, %s104
    %p110 = scmp.eq.s32.totalorder %s9, 0
    %p111 = por %p109, %p110
    %p112 = scmp.ne.s32.totalorder %s101, %s104
    %p113 = scmp.eq.s32.totalorder %s14, 3
    %p114 = por %p112, %p113
    %p115 = scmp.ne.s32.totalorder %s104, %s105
    %p116 = scmp.eq.s32.totalorder %s14, 0
    %p117 = por %p115, %p116
    %p118 = scmp.ne.s32.totalorder %s104, %s105
    %p119 = scmp.eq.s32.totalorder %s15, 3
    %p120 = por %p118, %p119
    %p122 = scmp.ne.s32.totalorder %s105, %s121
    %p123 = scmp.eq.s32.totalorder %s15, 0
    %p124 = por %p122, %p123
    %p125 = scmp.le.s32.totalorder 1, %s9
    %p126 = scmp.lt.s32.totalorder %s9, 5
    %p127 = pnand %p125, %p126
    %p128 = pneg %p127
    // Predicated region
    $region9: #{unet_old_forward.5} parent=5 // pred_check
      _
    $region10: #{unet_old_forward.5} parent=5 // pred_check_branch
      %130 = sbr.rel (%p127) target = $region12
    $region11: #{unet_old_forward.5} parent=5 // pred_region
      %s131 = ssub.s32 %s9, 1
      // Predicated region
      $region13: #{unet_old_forward.5} parent=11 // pred_check
        %p132 = pneg %p68
      $region14: #{unet_old_forward.5} parent=11 // pred_check_branch
        %134 = sbr.rel (%p132) target = $region16
      $region15: #{unet_old_forward.5} parent=11 // pred_region
        _
      $region16: #{unet_old_forward.5} parent=11 // pred_fallthru
        _
      // Predicated region
      $region17: #{unet_old_forward.5} parent=11 // pred_check
        %p135 = pneg %p89
      $region18: #{unet_old_forward.5} parent=11 // pred_check_branch
        %137 = sbr.rel (%p135) target = $region20
      $region19: #{unet_old_forward.5} parent=11 // pred_region
        _
      $region20: #{unet_old_forward.5} parent=11 // pred_fallthru
        _
    $region12: #{unet_old_forward.5} parent=5 // pred_fallthru
      _
    %p138 = scmp.lt.s32.totalorder %s9, 4
    // Predicated region
    $region21: #{unet_old_forward.5} parent=5 // pred_check
      %p139 = pneg %p138
    $region22: #{unet_old_forward.5} parent=5 // pred_check_branch
      %141 = sbr.rel (%p139) target = $region24
    $region23: #{unet_old_forward.5} parent=5 // pred_region
      // Predicated region
      $region25: #{unet_old_forward.5} parent=23 // pred_check
        %p142 = pneg %p41
      $region26: #{unet_old_forward.5} parent=23 // pred_check_branch
        %144 = sbr.rel (%p142) target = $region28
      $region27: #{unet_old_forward.5} parent=23 // pred_region
        %p145 = scmp.lt.s32.totalorder %s16, 1
        %s146 = scalar_select %p145, %s16, 1
        %s147 = smul.addr %s146, 8
        %s148 = smul.addr %s147, 4
        %s149 = scalar_lea.vmem %s0, %s148
      $region28: #{unet_old_forward.5} parent=23 // pred_fallthru
        _
    $region24: #{unet_old_forward.5} parent=5 // pred_fallthru
      _
    %p150 = scmp.le.s32.totalorder 1, %s9
    %p151 = scmp.lt.s32.totalorder %s9, 5
    %p152 = pnand %p150, %p151
    %p153 = pneg %p152
    // Predicated region
    $region29: #{unet_old_forward.5} parent=5 // pred_check
      _
    $region30: #{unet_old_forward.5} parent=5 // pred_check_branch
      %155 = sbr.rel (%p152) target = $region32
    $region31: #{unet_old_forward.5} parent=5 // pred_region
      %s156 = ssub.s32 %s9, 1
      %p157 = scmp.lt.s32.totalorder %s18, 1
      %s158 = scalar_select %p157, %s18, 1
      %s159 = smul.addr %s158, 8
      %s160 = smul.addr %s159, 4
      %s161 = scalar_lea.vmem %s0, %s160
      %p162 = pneg %p47
      %p163 = pneg %p44
      %p164 = pneg %p68
      %p165 = pneg %p65
      %p166 = pneg %p89
      %p167 = pneg %p86
      %p168 = pneg %p117
      %p169 = pneg %p114
      %s170 = smul.u32 2, %s19
      %p171 = scmp.lt.s32.totalorder %s18, 1
      %s172 = scalar_select %p171, %s18, 1
      %p173 = scmp.lt.s32.totalorder %s170, 3
      %s174 = scalar_select %p173, %s170, 3
      %s175 = smul.addr %s172, 4
      %s176 = sadd.s32 %s174, %s175
      %s177 = smul.addr %s176, 2
      %s178 = scalar_lea.vmem %s3, %s177
      %p179 = scmp.lt.s32.totalorder %s18, 1
      %s180 = scalar_select %p179, %s18, 1
      %s181 = smul.addr %s180, 8
      %s182 = smul.addr %s181, 4
      %s183 = scalar_lea.vmem %s0, %s182
      %s184 = smul.u32 2, %s19
      %p185 = scmp.lt.s32.totalorder %s18, 1
      %s186 = scalar_select %p185, %s18, 1
      %p187 = scmp.lt.s32.totalorder %s184, 3
      %s188 = scalar_select %p187, %s184, 3
      %s189 = smul.addr %s186, 4
      %s190 = sadd.s32 %s188, %s189
      %s191 = smul.addr %s190, 2
      %s192 = scalar_lea.vmem %s3, %s191
      %s193 = smul.u32 2, %s19
      %p195 = scmp.eq.s32.totalorder %s19, 0
      // Predicated region
      $region33: #{unet_old_forward.5} parent=31 // pred_check
        %p196 = pneg %p195
      $region34: #{unet_old_forward.5} parent=31 // pred_check_branch
        %198 = sbr.rel (%p196) target = $region36
      $region35: #{unet_old_forward.5} parent=31 // pred_region
        %vm199 = vcmask 257024
        %200 = vst.msk [vmem:[#allocation2] sm:$0xf] %vm199, 0
        %vm201 = vcmask 253952
        %202 = vst.msk [vmem:[#allocation2 + $0x4] sm:$0x1] %vm201, 0
        %203 = vst.msk [vmem:[#allocation2 + $0x8] sm:$0xf] %vm199, 0
        %204 = vst.msk [vmem:[#allocation2 + $0xc] sm:$0x1] %vm201, 0
        %205 = vst.msk [vmem:[#allocation2 + $0x10] sm:$0xf] %vm199, 0
        %206 = vst.msk [vmem:[#allocation2 + $0x14] sm:$0x1] %vm201, 0
        %207 = vst.msk [vmem:[#allocation2 + $0x18] sm:$0xf] %vm199, 0
        %208 = vst.msk [vmem:[#allocation2 + $0x1c] sm:$0x1] %vm201, 0
        %209 = vst.msk [vmem:[#allocation2 + $0x20] sm:$0xf] %vm199, 0
        %210 = vst.msk [vmem:[#allocation2 + $0x24] sm:$0x1] %vm201, 0
        %211 = vst.msk [vmem:[#allocation2 + $0x28] sm:$0xf] %vm199, 0
        %212 = vst.msk [vmem:[#allocation2 + $0x2c] sm:$0x1] %vm201, 0
        %213 = vst.msk [vmem:[#allocation2 + $0x30] sm:$0xf] %vm199, 0
        %214 = vst.msk [vmem:[#allocation2 + $0x34] sm:$0x1] %vm201, 0
        %215 = vst.msk [vmem:[#allocation2 + $0x38] sm:$0xf] %vm199, 0
        %216 = vst.msk [vmem:[#allocation2 + $0x3c] sm:$0x1] %vm201, 0
        %217 = vst.msk [vmem:[#allocation2 + $0x40] sm:$0xf] %vm199, 0
        %218 = vst.msk [vmem:[#allocation2 + $0x44] sm:$0x1] %vm201, 0
        %219 = vst.msk [vmem:[#allocation2 + $0x48] sm:$0xf] %vm199, 0
        %220 = vst.msk [vmem:[#allocation2 + $0x4c] sm:$0x1] %vm201, 0
        %v221 = vld [vmem:[%s183] sm:$0xf]
        %v222 = vld [vmem:[%s183 + $0x4] sm:$0xf]
        %v223 = vld [vmem:[%s183 + $0x8] sm:$0xf]
        %v224 = vld [vmem:[%s183 + $0xc] sm:$0xf]
        %v225 = vld [vmem:[%s183 + $0x10] sm:$0xf]
        %v226 = vld [vmem:[%s183 + $0x14] sm:$0xf]
        %v227 = vld [vmem:[%s183 + $0x18] sm:$0xf]
        %v228 = vld [vmem:[%s183 + $0x1c] sm:$0xf]
        %v230 = vshrl.u32 %v221, 16
        %v232 = vrot.slane %v230, 7
        %v233 = vshll.u32 %v221, 16
        %v235 = vor.u32 %v232, %v233
        %v236 = vrot.slane %v232, 4
        %v238 = vshrl.u32 %v222, 16
        %v240 = vrot.slane %v238, 7
        %v241 = vshll.u32 %v222, 16
        %v243 = vor.u32 %v240, %v241
        %v244 = vrot.slane %v240, 4
        %v246 = vshrl.u32 %v223, 16
        %v248 = vrot.slane %v246, 7
        %v249 = vshll.u32 %v223, 16
        %v251 = vor.u32 %v248, %v249
        %v252 = vrot.slane %v248, 4
        %v254 = vshrl.u32 %v224, 16
        %v256 = vrot.slane %v254, 7
        %v257 = vshll.u32 %v224, 16
        %v259 = vor.u32 %v256, %v257
        %v260 = vrot.slane %v256, 4
        %v262 = vshrl.u32 %v225, 16
        %v264 = vrot.slane %v262, 7
        %v265 = vshll.u32 %v225, 16
        %v267 = vor.u32 %v264, %v265
        %v268 = vrot.slane %v264, 4
        %v270 = vshrl.u32 %v226, 16
        %v272 = vrot.slane %v270, 7
        %v273 = vshll.u32 %v226, 16
        %v275 = vor.u32 %v272, %v273
        %v276 = vrot.slane %v272, 4
        %v278 = vshrl.u32 %v227, 16
        %v280 = vrot.slane %v278, 7
        %v281 = vshll.u32 %v227, 16
        %v283 = vor.u32 %v280, %v281
        %v284 = vrot.slane %v280, 4
        %v286 = vshrl.u32 %v228, 16
        %v288 = vrot.slane %v286, 7
        %v289 = vshll.u32 %v228, 16
        %v291 = vor.u32 %v288, %v289
        %v292 = vrot.slane %v288, 4
        %s309 = scalar_lea.vmem [#allocation2], 8
        %vm310 = vcmask 257024
        %vm311 = vsmask.f32 7938
        %vm312 = vmand %vm310, %vm311
        %v313 = vld [vmem:[%s309] sm:$0xf]
        %v314 = vsel %vm312, %v235, %v313
        %315 = vst [vmem:[%s309] sm:$0xf] %v314
        %vm316 = vcmask 253952
        %vm317 = vsmask.f32 256
        %vm318 = vmand %vm316, %vm317
        %v319 = vld [vmem:[%s309 + $0x4] sm:$0x1]
        %v320 = vsel %vm318, %v236, %v319
        %321 = vst [vmem:[%s309 + $0x4] sm:$0x1] %v320
        %v322 = vld [vmem:[%s309 + $0x8] sm:$0xf]
        %v323 = vsel %vm312, %v243, %v322
        %324 = vst [vmem:[%s309 + $0x8] sm:$0xf] %v323
        %v325 = vld [vmem:[%s309 + $0xc] sm:$0x1]
        %v326 = vsel %vm318, %v244, %v325
        %327 = vst [vmem:[%s309 + $0xc] sm:$0x1] %v326
        %v328 = vld [vmem:[%s309 + $0x10] sm:$0xf]
        %v329 = vsel %vm312, %v251, %v328
        %330 = vst [vmem:[%s309 + $0x10] sm:$0xf] %v329
        %v331 = vld [vmem:[%s309 + $0x14] sm:$0x1]
        %v332 = vsel %vm318, %v252, %v331
        %333 = vst [vmem:[%s309 + $0x14] sm:$0x1] %v332
        %v334 = vld [vmem:[%s309 + $0x18] sm:$0xf]
        %v335 = vsel %vm312, %v259, %v334
        %336 = vst [vmem:[%s309 + $0x18] sm:$0xf] %v335
        %v337 = vld [vmem:[%s309 + $0x1c] sm:$0x1]
        %v338 = vsel %vm318, %v260, %v337
        %339 = vst [vmem:[%s309 + $0x1c] sm:$0x1] %v338
        %v340 = vld [vmem:[%s309 + $0x20] sm:$0xf]
        %v341 = vsel %vm312, %v267, %v340
        %342 = vst [vmem:[%s309 + $0x20] sm:$0xf] %v341
        %v343 = vld [vmem:[%s309 + $0x24] sm:$0x1]
        %v344 = vsel %vm318, %v268, %v343
        %345 = vst [vmem:[%s309 + $0x24] sm:$0x1] %v344
        %v346 = vld [vmem:[%s309 + $0x28] sm:$0xf]
        %v347 = vsel %vm312, %v275, %v346
        %348 = vst [vmem:[%s309 + $0x28] sm:$0xf] %v347
        %v349 = vld [vmem:[%s309 + $0x2c] sm:$0x1]
        %v350 = vsel %vm318, %v276, %v349
        %351 = vst [vmem:[%s309 + $0x2c] sm:$0x1] %v350
        %v352 = vld [vmem:[%s309 + $0x30] sm:$0xf]
        %v353 = vsel %vm312, %v283, %v352
        %354 = vst [vmem:[%s309 + $0x30] sm:$0xf] %v353
        %v355 = vld [vmem:[%s309 + $0x34] sm:$0x1]
        %v356 = vsel %vm318, %v284, %v355
        %357 = vst [vmem:[%s309 + $0x34] sm:$0x1] %v356
        %v358 = vld [vmem:[%s309 + $0x38] sm:$0xf]
        %v359 = vsel %vm312, %v291, %v358
        %360 = vst [vmem:[%s309 + $0x38] sm:$0xf] %v359
        %v361 = vld [vmem:[%s309 + $0x3c] sm:$0x1]
        %v362 = vsel %vm318, %v292, %v361
        %363 = vst [vmem:[%s309 + $0x3c] sm:$0x1] %v362
      $region36: #{unet_old_forward.5} parent=31 // pred_fallthru
        _
      %s364 = smul.u32 %s19, 4
      %s365 = smul.u32 %s364, 2
      %s366 = smul.addr %s365, 4
      %s367 = scalar_lea.vmem [#allocation2], %s366
      %v368 = vld [vmem:[%s367] sm:$0xf]
      %v369 = vld [vmem:[%s367 + $0x8] sm:$0xf]
      %v370 = vld [vmem:[%s367 + $0x10] sm:$0xf]
      %v371 = vld [vmem:[%s367 + $0x18] sm:$0xf]
      %v372 = vld [vmem:[%s367 + $0x4] sm:$0x1]
      %v373 = vld [vmem:[%s367 + $0xc] sm:$0x1]
      %v374 = vld [vmem:[%s367 + $0x14] sm:$0x1]
      %v375 = vld [vmem:[%s367 + $0x1c] sm:$0x1]
      %v376 = vld [vmem:[%s367] sm:$0xe]
      %v377 = vld [vmem:[%s367 + $0x8] sm:$0xe]
      %v378 = vld [vmem:[%s367 + $0x10] sm:$0xe]
      %v379 = vld [vmem:[%s367 + $0x18] sm:$0xe]
      %s380 = sadd.s32 %s364, 1
      %s381 = smul.u32 %s380, 2
      %s382 = smul.addr %s381, 4
      %s383 = scalar_lea.vmem [#allocation2], %s382
      %v384 = vld [vmem:[%s383] sm:$0xf]
      %v385 = vld [vmem:[%s383 + $0x8] sm:$0xf]
      %v386 = vld [vmem:[%s383 + $0x10] sm:$0xf]
      %v387 = vld [vmem:[%s383 + $0x18] sm:$0xf]
      %v388 = vld [vmem:[%s383 + $0x4] sm:$0x1]
      %v389 = vld [vmem:[%s383 + $0xc] sm:$0x1]
      %v390 = vld [vmem:[%s383 + $0x14] sm:$0x1]
      %v391 = vld [vmem:[%s383 + $0x1c] sm:$0x1]
      %v392 = vld [vmem:[%s383] sm:$0xe]
      %v393 = vld [vmem:[%s383 + $0x8] sm:$0xe]
      %v394 = vld [vmem:[%s383 + $0x10] sm:$0xe]
      %v395 = vld [vmem:[%s383 + $0x18] sm:$0xe]
      %s396 = sadd.s32 %s364, 2
      %s397 = smul.u32 %s396, 2
      %s398 = smul.addr %s397, 4
      %s399 = scalar_lea.vmem [#allocation2], %s398
      %v400 = vld [vmem:[%s399] sm:$0xf]
      %v401 = vld [vmem:[%s399 + $0x8] sm:$0xf]
      %v402 = vld [vmem:[%s399 + $0x10] sm:$0xf]
      %v403 = vld [vmem:[%s399 + $0x18] sm:$0xf]
      %v404 = vld [vmem:[%s399 + $0x4] sm:$0x1]
      %v405 = vld [vmem:[%s399 + $0xc] sm:$0x1]
      %v406 = vld [vmem:[%s399 + $0x14] sm:$0x1]
      %v407 = vld [vmem:[%s399 + $0x1c] sm:$0x1]
      %v408 = vld [vmem:[%s399] sm:$0xe]
      %v409 = vld [vmem:[%s399 + $0x8] sm:$0xe]
      %v410 = vld [vmem:[%s399 + $0x10] sm:$0xe]
      %v411 = vld [vmem:[%s399 + $0x18] sm:$0xe]
      %v420 = vunpack.c.l.b16 %v368
      %v421 = vunpack.c.l.b16 %v372
      %v422 = vunpack.c.l.b16 %v369
      %v423 = vunpack.c.l.b16 %v373
      %v424 = vunpack.c.l.b16 %v370
      %v425 = vunpack.c.l.b16 %v374
      %v426 = vunpack.c.l.b16 %v371
      %v427 = vunpack.c.l.b16 %v375
      %v428 = vpack.c.b16 %v421, %v420
      %v429 = vpack.c.b16 %v423, %v422
      %v430 = vpack.c.b16 %v425, %v424
      %v431 = vpack.c.b16 %v427, %v426
      %v433 = vshrl.u32 %v428, 16
      %v435 = vshll.u32 %v428, 16
      %v437 = vrot.slane %v435, 1
      %v438 = vor.u32 %v433, %v437
      %v440 = vshrl.u32 %v429, 16
      %v442 = vshll.u32 %v429, 16
      %v444 = vrot.slane %v442, 1
      %v445 = vor.u32 %v440, %v444
      %v447 = vshrl.u32 %v430, 16
      %v449 = vshll.u32 %v430, 16
      %v451 = vrot.slane %v449, 1
      %v452 = vor.u32 %v447, %v451
      %v454 = vshrl.u32 %v431, 16
      %v456 = vshll.u32 %v431, 16
      %v458 = vrot.slane %v456, 1
      %v459 = vor.u32 %v454, %v458
      %460 = vrot.lane.b32.xlu0 %v438, 32
      %v461 = vpop.permute.xlu0 %460
      %462 = vrot.lane.b32.xlu0 %v445, 32
      %v463 = vpop.permute.xlu0 %462
      %464 = vrot.lane.b32.xlu0 %v452, 32
      %v465 = vpop.permute.xlu0 %464
      %466 = vrot.lane.b32.xlu0 %v459, 32
      %v467 = vpop.permute.xlu0 %466
      %v472 = vunpack.c.l.b16 %v376
      %v473 = vunpack.c.l.b16 %v377
      %v474 = vunpack.c.l.b16 %v378
      %v475 = vunpack.c.l.b16 %v379
      %v476 = vpack.c.b16 %v421, %v472
      %v477 = vpack.c.b16 %v423, %v473
      %v478 = vpack.c.b16 %v425, %v474
      %v479 = vpack.c.b16 %v427, %v475
      %v480 = vrot.slane %v476, 1
      %v481 = vrot.slane %v477, 1
      %v482 = vrot.slane %v478, 1
      %v483 = vrot.slane %v479, 1
      %484 = vrot.lane.b32.xlu0 %v480, 64
      %v485 = vpop.permute.xlu0 %484
      %486 = vrot.lane.b32.xlu0 %v481, 64
      %v487 = vpop.permute.xlu0 %486
      %488 = vrot.lane.b32.xlu0 %v482, 64
      %v489 = vpop.permute.xlu0 %488
      %490 = vrot.lane.b32.xlu0 %v483, 64
      %v491 = vpop.permute.xlu0 %490
      %v496 = vunpack.c.l.b16 %v384
      %v497 = vunpack.c.l.b16 %v385
      %v498 = vunpack.c.l.b16 %v386
      %v499 = vunpack.c.l.b16 %v387
      %v500 = vpack.c.b16 %v496, %v496
      %v501 = vpack.c.b16 %v497, %v497
      %v502 = vpack.c.b16 %v498, %v498
      %v503 = vpack.c.b16 %v499, %v499
      %504 = vrot.lane.b32.xlu0 %v500, 96
      %v505 = vpop.permute.xlu0 %504
      %506 = vrot.lane.b32.xlu0 %v501, 96
      %v507 = vpop.permute.xlu0 %506
      %508 = vrot.lane.b32.xlu0 %v502, 96
      %v509 = vpop.permute.xlu0 %508
      %510 = vrot.lane.b32.xlu0 %v503, 96
      %v511 = vpop.permute.xlu0 %510
      %v516 = vunpack.c.l.b16 %v388
      %v517 = vunpack.c.l.b16 %v389
      %v518 = vunpack.c.l.b16 %v390
      %v519 = vunpack.c.l.b16 %v391
      %v520 = vpack.c.b16 %v516, %v496
      %v521 = vpack.c.b16 %v517, %v497
      %v522 = vpack.c.b16 %v518, %v498
      %v523 = vpack.c.b16 %v519, %v499
      %v525 = vshrl.u32 %v520, 16
      %v527 = vshll.u32 %v520, 16
      %v529 = vrot.slane %v527, 1
      %v530 = vor.u32 %v525, %v529
      %v532 = vshrl.u32 %v521, 16
      %v534 = vshll.u32 %v521, 16
      %v536 = vrot.slane %v534, 1
      %v537 = vor.u32 %v532, %v536
      %v539 = vshrl.u32 %v522, 16
      %v541 = vshll.u32 %v522, 16
      %v543 = vrot.slane %v541, 1
      %v544 = vor.u32 %v539, %v543
      %v546 = vshrl.u32 %v523, 16
      %v548 = vshll.u32 %v523, 16
      %v550 = vrot.slane %v548, 1
      %v551 = vor.u32 %v546, %v550
      %v556 = vunpack.c.l.b16 %v392
      %v557 = vunpack.c.l.b16 %v393
      %v558 = vunpack.c.l.b16 %v394
      %v559 = vunpack.c.l.b16 %v395
      %v560 = vpack.c.b16 %v516, %v556
      %v561 = vpack.c.b16 %v517, %v557
      %v562 = vpack.c.b16 %v518, %v558
      %v563 = vpack.c.b16 %v519, %v559
      %v564 = vrot.slane %v560, 1
      %v565 = vrot.slane %v561, 1
      %v566 = vrot.slane %v562, 1
      %v567 = vrot.slane %v563, 1
      %568 = vrot.lane.b32.xlu0 %v564, 32
      %v569 = vpop.permute.xlu0 %568
      %570 = vrot.lane.b32.xlu0 %v565, 32
      %v571 = vpop.permute.xlu0 %570
      %572 = vrot.lane.b32.xlu0 %v566, 32
      %v573 = vpop.permute.xlu0 %572
      %574 = vrot.lane.b32.xlu0 %v567, 32
      %v575 = vpop.permute.xlu0 %574
      %v580 = vunpack.c.l.b16 %v400
      %v581 = vunpack.c.l.b16 %v401
      %v582 = vunpack.c.l.b16 %v402
      %v583 = vunpack.c.l.b16 %v403
      %v584 = vpack.c.b16 %v580, %v580
      %v585 = vpack.c.b16 %v581, %v581
      %v586 = vpack.c.b16 %v582, %v582
      %v587 = vpack.c.b16 %v583, %v583
      %588 = vrot.lane.b32.xlu0 %v584, 64
      %v589 = vpop.permute.xlu0 %588
      %590 = vrot.lane.b32.xlu0 %v585, 64
      %v591 = vpop.permute.xlu0 %590
      %592 = vrot.lane.b32.xlu0 %v586, 64
      %v593 = vpop.permute.xlu0 %592
      %594 = vrot.lane.b32.xlu0 %v587, 64
      %v595 = vpop.permute.xlu0 %594
      %v600 = vunpack.c.l.b16 %v404
      %v601 = vunpack.c.l.b16 %v405
      %v602 = vunpack.c.l.b16 %v406
      %v603 = vunpack.c.l.b16 %v407
      %v604 = vpack.c.b16 %v600, %v580
      %v605 = vpack.c.b16 %v601, %v581
      %v606 = vpack.c.b16 %v602, %v582
      %v607 = vpack.c.b16 %v603, %v583
      %v609 = vshrl.u32 %v604, 16
      %v611 = vshll.u32 %v604, 16
      %v613 = vrot.slane %v611, 1
      %v614 = vor.u32 %v609, %v613
      %v616 = vshrl.u32 %v605, 16
      %v618 = vshll.u32 %v605, 16
      %v620 = vrot.slane %v618, 1
      %v621 = vor.u32 %v616, %v620
      %v623 = vshrl.u32 %v606, 16
      %v625 = vshll.u32 %v606, 16
      %v627 = vrot.slane %v625, 1
      %v628 = vor.u32 %v623, %v627
      %v630 = vshrl.u32 %v607, 16
      %v632 = vshll.u32 %v607, 16
      %v634 = vrot.slane %v632, 1
      %v635 = vor.u32 %v630, %v634
      %636 = vrot.lane.b32.xlu0 %v614, 96
      %v637 = vpop.permute.xlu0 %636
      %638 = vrot.lane.b32.xlu0 %v621, 96
      %v639 = vpop.permute.xlu0 %638
      %640 = vrot.lane.b32.xlu0 %v628, 96
      %v641 = vpop.permute.xlu0 %640
      %642 = vrot.lane.b32.xlu0 %v635, 96
      %v643 = vpop.permute.xlu0 %642
      %v648 = vunpack.c.l.b16 %v408
      %v649 = vunpack.c.l.b16 %v409
      %v650 = vunpack.c.l.b16 %v410
      %v651 = vunpack.c.l.b16 %v411
      %v652 = vpack.c.b16 %v600, %v648
      %v653 = vpack.c.b16 %v601, %v649
      %v654 = vpack.c.b16 %v602, %v650
      %v655 = vpack.c.b16 %v603, %v651
      %v656 = vrot.slane %v652, 1
      %v657 = vrot.slane %v653, 1
      %v658 = vrot.slane %v654, 1
      %v659 = vrot.slane %v655, 1
      %vm660 = vcmask 261120
      %v663 = vsel %vm660, %v368, %v461
      %v666 = vsel %vm660, %v369, %v463
      %v669 = vsel %vm660, %v370, %v465
      %v672 = vsel %vm660, %v371, %v467
      %vm673 = vcmask 523264
      %v675 = vsel %vm673, %v663, %v485
      %v677 = vsel %vm673, %v666, %v487
      %v679 = vsel %vm673, %v669, %v489
      %v681 = vsel %vm673, %v672, %v491
      %vm682 = vcmask 785408
      %v684 = vsel %vm682, %v675, %v505
      %v686 = vsel %vm682, %v677, %v507
      %v688 = vsel %vm682, %v679, %v509
      %v690 = vsel %vm682, %v681, %v511
      %v693 = vsel %vm660, %v530, %v569
      %v696 = vsel %vm660, %v537, %v571
      %v699 = vsel %vm660, %v544, %v573
      %v702 = vsel %vm660, %v551, %v575
      %v704 = vsel %vm673, %v693, %v589
      %v706 = vsel %vm673, %v696, %v591
      %v708 = vsel %vm673, %v699, %v593
      %v710 = vsel %vm673, %v702, %v595
      %v712 = vsel %vm682, %v704, %v637
      %v714 = vsel %vm682, %v706, %v639
      %v716 = vsel %vm682, %v708, %v641
      %v718 = vsel %vm682, %v710, %v643
      %v727 = vunpack.c.l.b16 %v684
      %v728 = vunpack.c.l.b16 %v712
      %v729 = vunpack.c.l.b16 %v656
      %v730 = vunpack.c.l.b16 %v686
      %v731 = vunpack.c.l.b16 %v714
      %v732 = vunpack.c.l.b16 %v657
      %v733 = vunpack.c.l.b16 %v688
      %v734 = vunpack.c.l.b16 %v716
      %v735 = vunpack.c.l.b16 %v658
      %v736 = vunpack.c.l.b16 %v690
      %v737 = vunpack.c.l.b16 %v718
      %v738 = vunpack.c.l.b16 %v659
      %v739 = vld [vmem:[%s1] sm:$0xf]
      %v740 = vld [vmem:[%s1 + $0x4] sm:$0xf]
      %v741 = vld [vmem:[%s1 + $0x8] sm:$0xf]
      %v742 = vld [vmem:[%s1 + $0xc] sm:$0xf]
      %v743 = vld [vmem:[%s1 + $0x10] sm:$0xf]
      %v744 = vld [vmem:[%s1 + $0x14] sm:$0xf]
      %v745 = vld [vmem:[%s1 + $0x18] sm:$0xf]
      %v746 = vld [vmem:[%s1 + $0x1c] sm:$0xf]
      %v747 = vld [vmem:[%s1 + $0x20] sm:$0xf]
      %v748 = vld [vmem:[%s1 + $0x24] sm:$0xf]
      %v749 = vld [vmem:[%s1 + $0x28] sm:$0xf]
      %v750 = vld [vmem:[%s1 + $0x2c] sm:$0xf]
      %v751 = vld [vmem:[%s1 + $0x30] sm:$0xf]
      %v752 = vld [vmem:[%s1 + $0x34] sm:$0xf]
      %v753 = vld [vmem:[%s1 + $0x38] sm:$0xf]
      %v754 = vld [vmem:[%s1 + $0x3c] sm:$0xf]
      %v755 = vld [vmem:[%s1 + $0x40] sm:$0xf]
      %v756 = vld [vmem:[%s1 + $0x44] sm:$0xf]
      %v757 = vld [vmem:[%s1 + $0x48] sm:$0xf]
      %v758 = vld [vmem:[%s1 + $0x4c] sm:$0xf]
      %v759 = vld [vmem:[%s1 + $0x50] sm:$0xf]
      %v760 = vld [vmem:[%s1 + $0x54] sm:$0xf]
      %v761 = vld [vmem:[%s1 + $0x58] sm:$0xf]
      %v762 = vld [vmem:[%s1 + $0x5c] sm:$0xf]
      %v763 = vld [vmem:[%s1 + $0x60] sm:$0xf]
      %v764 = vld [vmem:[%s1 + $0x64] sm:$0xf]
      %v765 = vld [vmem:[%s1 + $0x68] sm:$0xf]
      %v766 = vld [vmem:[%s1 + $0x6c] sm:$0xf]
      %v767 = vld [vmem:[%s1 + $0x70] sm:$0xf]
      %v768 = vld [vmem:[%s1 + $0x74] sm:$0xf]
      %v769 = vld [vmem:[%s1 + $0x78] sm:$0xf]
      %v770 = vld [vmem:[%s1 + $0x7c] sm:$0xf]
      %v771 = vld [vmem:[%s1 + $0x80] sm:$0xf]
      %v772 = vld [vmem:[%s1 + $0x84] sm:$0xf]
      %v773 = vld [vmem:[%s1 + $0x88] sm:$0xf]
      %v774 = vld [vmem:[%s1 + $0x8c] sm:$0xf]
      %v775 = vld [vmem:[%s2] sm:$0x1]
      %v777 = vlaneseq
      %v778 = vshrl.u32 %v777, 7
      %v779 = vsub.s32 0, %v778
      %v780 = vrot.slane %v775, %v779
      %v782 = vpack.c.b16 %v730, %v727
      %v783 = vpack.c.b16 %v731, %v728
      %v784 = vpack.c.b16 %v732, %v729
      %v785 = vpack.c.b16 %v736, %v733
      %v786 = vpack.c.b16 %v737, %v734
      %v787 = vpack.c.b16 %v738, %v735
      %v828 = vunpack.c.l.b16 %v739
      %v829 = vunpack.c.l.b16 %v740
      %v830 = vunpack.c.l.b16 %v741
      %v831 = vunpack.c.l.b16 %v742
      %v832 = vunpack.c.l.b16 %v743
      %v833 = vunpack.c.l.b16 %v744
      %v834 = vunpack.c.l.b16 %v745
      %v835 = vunpack.c.l.b16 %v746
      %v836 = vunpack.c.l.b16 %v747
      %v837 = vunpack.c.l.b16 %v748
      %v838 = vunpack.c.l.b16 %v749
      %v839 = vunpack.c.l.b16 %v750
      %v840 = vunpack.c.l.b16 %v751
      %v841 = vunpack.c.l.b16 %v752
      %v842 = vunpack.c.l.b16 %v753
      %v843 = vunpack.c.l.b16 %v754
      %v844 = vunpack.c.l.b16 %v755
      %v845 = vunpack.c.l.b16 %v756
      %v846 = vunpack.c.l.b16 %v757
      %v847 = vunpack.c.l.b16 %v758
      %v848 = vunpack.c.l.b16 %v759
      %v849 = vunpack.c.l.b16 %v760
      %v850 = vunpack.c.l.b16 %v761
      %v851 = vunpack.c.l.b16 %v762
      %v852 = vunpack.c.l.b16 %v763
      %v853 = vunpack.c.l.b16 %v764
      %v854 = vunpack.c.l.b16 %v765
      %v855 = vunpack.c.l.b16 %v766
      %v856 = vunpack.c.l.b16 %v767
      %v857 = vunpack.c.l.b16 %v768
      %v858 = vunpack.c.l.b16 %v769
      %v859 = vunpack.c.l.b16 %v770
      %v860 = vunpack.c.l.b16 %v771
      %v861 = vunpack.c.l.b16 %v772
      %v862 = vunpack.c.l.b16 %v773
      %v863 = vunpack.c.l.b16 %v774
      %v864 = vpack.c.b16 %v829, %v828
      %v865 = vpack.c.b16 %v831, %v830
      %v866 = vpack.c.b16 %v833, %v832
      %v867 = vpack.c.b16 %v835, %v834
      %v868 = vpack.c.b16 %v837, %v836
      %v869 = vpack.c.b16 %v839, %v838
      %v870 = vpack.c.b16 %v841, %v840
      %v871 = vpack.c.b16 %v843, %v842
      %v872 = vpack.c.b16 %v845, %v844
      %v873 = vpack.c.b16 %v847, %v846
      %v874 = vpack.c.b16 %v849, %v848
      %v875 = vpack.c.b16 %v851, %v850
      %v876 = vpack.c.b16 %v853, %v852
      %v877 = vpack.c.b16 %v855, %v854
      %v878 = vpack.c.b16 %v857, %v856
      %v879 = vpack.c.b16 %v859, %v858
      %v880 = vpack.c.b16 %v861, %v860
      %v881 = vpack.c.b16 %v863, %v862
      %v901 = vsel %vm660, %v784, 0
      %v904 = vsel %vm660, %v787, 0
      %906 = vmatprep.subr.bf16.mxu0 0
      %907 = vmatpush1.bf16.msra.mxu0 %v864
      %908 = vmatprep.subr.bf16.mxu0 0
      %909 = vmatpush1.bf16.msra.mxu0 %v865
      %910 = vmatprep.subr.bf16.mxu0 0
      %911 = vmatpush1.bf16.msra.mxu0 %v866
      %912 = vmatprep.subr.bf16.mxu0 0
      %913 = vmatpush1.bf16.msra.mxu0 %v867
      %914 = vmatprep.subr.bf16.mxu0 0
      %915 = vmatpush1.bf16.msra.mxu0 %v868
      %916 = vmatprep.subr.bf16.mxu0 0
      %917 = vmatpush1.bf16.msra.mxu0 %v869
      %918 = vmatprep.subr.bf16.mxu0 0
      %919 = vmatpush1.bf16.msra.mxu0 %v870
      %920 = vmatprep.subr.bf16.mxu0 0
      %921 = vmatpush1.bf16.msra.mxu0 %v871
      %922 = vmatprep.subr.bf16.mxu0 0
      %923 = vmatpush1.bf16.msra.mxu0 %v872
      %924 = vmatprep.subr.bf16.mxu0 0
      %925 = vmatpush1.bf16.msra.mxu0 %v873
      %926 = vmatprep.subr.bf16.mxu0 0
      %927 = vmatpush1.bf16.msra.mxu0 %v874
      %928 = vmatprep.subr.bf16.mxu0 0
      %929 = vmatpush1.bf16.msra.mxu0 %v875
      %930 = vmatprep.subr.bf16.mxu0 0
      %931 = vmatpush1.bf16.msra.mxu0 %v876
      %932 = vmatprep.subr.bf16.mxu0 0
      %933 = vmatpush1.bf16.msra.mxu0 %v877
      %934 = vmatprep.subr.bf16.mxu0 0
      %935 = vmatpush1.bf16.msra.mxu0 %v878
      %936 = vmatprep.subr.bf16.mxu0 0
      %937 = vmatpush1.bf16.msra.mxu0 %v879
      %938 = vmatprep.mubr.bf16.mxu0 %v783
      %939 = vmatmul.mubr.bf16.gmra.mrb[0].mxu0 %v782
      %v940 = vpop.f32.mrb[0].mxu0
      %v941 = vadd.f32 %v780, %v940
      %v942 = vpop.f32.mrb[0].mxu0
      %v943 = vpop.f32.mrb[0].mxu0
      %v944 = vadd.f32 %v780, %v943
      %v945 = vpop.f32.mrb[0].mxu0
      %946 = vmatprep.mubr.bf16.mxu0 %v786
      %947 = vmatmul.mubr.bf16.gmra.mrb[0].mxu0 %v785
      %v948 = vpop.f32.mrb[0].mxu0
      %v949 = vadd.f32 %v780, %v948
      %v950 = vpop.f32.mrb[0].mxu0
      %v951 = vpop.f32.mrb[0].mxu0
      %v952 = vadd.f32 %v780, %v951
      %v953 = vpop.f32.mrb[0].mxu0
      %954 = vdwg.mxu0
      %955 = vmatprep.subr.bf16.mxu0 0
      %956 = vmatpush1.bf16.msra.mxu0 %v880
      %957 = vmatprep.subr.bf16.mxu0 0
      %958 = vmatpush1.bf16.msra.mxu0 %v881
      %959 = vmatprep.subr.bf16.mxu0 0
      %960 = vmatpush1.bf16.msra.mxu0 0
      %961 = vmatprep.subr.bf16.mxu0 0
      %962 = vmatpush1.bf16.msra.mxu0 0
      %963 = vmatprep.subr.bf16.mxu0 0
      %964 = vmatpush1.bf16.msra.mxu0 0
      %965 = vmatprep.subr.bf16.mxu0 0
      %966 = vmatpush1.bf16.msra.mxu0 0
      %967 = vmatprep.subr.bf16.mxu0 0
      %968 = vmatpush1.bf16.msra.mxu0 0
      %969 = vmatprep.subr.bf16.mxu0 0
      %970 = vmatpush1.bf16.msra.mxu0 0
      %971 = vmatprep.subr.bf16.mxu0 0
      %972 = vmatpush1.bf16.msra.mxu0 0
      %973 = vmatprep.subr.bf16.mxu0 0
      %974 = vmatpush1.bf16.msra.mxu0 0
      %975 = vmatprep.subr.bf16.mxu0 0
      %976 = vmatpush1.bf16.msra.mxu0 0
      %977 = vmatprep.subr.bf16.mxu0 0
      %978 = vmatpush1.bf16.msra.mxu0 0
      %979 = vmatprep.subr.bf16.mxu0 0
      %980 = vmatpush1.bf16.msra.mxu0 0
      %981 = vmatprep.subr.bf16.mxu0 0
      %982 = vmatpush1.bf16.msra.mxu0 0
      %983 = vmatprep.subr.bf16.mxu0 0
      %984 = vmatpush1.bf16.msra.mxu0 0
      %985 = vmatprep.subr.bf16.mxu0 0
      %986 = vmatpush1.bf16.msra.mxu0 0
      %987 = vmatprep.mubr.bf16.mxu0 0
      %988 = vmatmul.mubr.bf16.gmra.mrb[0].mxu0 %v901
      %v989 = vpop.f32.mrb[0].mxu0
      %v990 = vadd.f32 %v941, %v989
      %v991 = vpop.f32.mrb[0].mxu0
      %v992 = vpop.f32.mrb[0].mxu0
      %v993 = vadd.f32 %v944, %v992
      %v994 = vpop.f32.mrb[0].mxu0
      %995 = vmatprep.mubr.bf16.mxu0 0
      %996 = vmatmul.mubr.bf16.gmra.mrb[0].mxu0 %v904
      %v997 = vpop.f32.mrb[0].mxu0
      %v998 = vadd.f32 %v949, %v997
      %v999 = vpop.f32.mrb[0].mxu0
      %v1000 = vpop.f32.mrb[0].mxu0
      %v1001 = vadd.f32 %v952, %v1000
      %v1002 = vpop.f32.mrb[0].mxu0
      %1003 = vdwg.mxu0
      %v1004 = vmax.f32 %v990, 0.0
      %v1005 = vmax.f32 %v993, 0.0
      %v1006 = vmax.f32 %v998, 0.0
      %v1007 = vmax.f32 %v1001, 0.0
      %v1012 = vcombine.high %v1004, %v1004
      %v1014 = vunpack.c.l.s4 1983009808
      %v1015 = vunpack.c.0.s8 %v1014
      %v1016 = vlaneseq
      %v1017 = vshrl.u32 %v1016, 7
      %v1018 = vsub.s32 %v1015, %v1017
      %v1019 = vrot.slane %v1004, %v1018
      %v1021 = vunpack.c.l.s4 1983009808
      %v1022 = vunpack.c.0.s8 %v1021
      %v1023 = vlaneseq
      %v1024 = vshrl.u32 %v1023, 7
      %v1025 = vsub.s32 %v1022, %v1024
      %v1026 = vrot.slane %v1012, %v1025
      %v1027 = vcombine.high %v1019, %v1019
      %v1028 = vcombine.high %v1026, %v1026
      %v1029 = vcombine.high %v1005, %v1005
      %v1031 = vunpack.c.l.s4 1983009808
      %v1032 = vunpack.c.0.s8 %v1031
      %v1033 = vlaneseq
      %v1034 = vshrl.u32 %v1033, 7
      %v1035 = vsub.s32 %v1032, %v1034
      %v1036 = vrot.slane %v1005, %v1035
      %v1038 = vunpack.c.l.s4 1983009808
      %v1039 = vunpack.c.0.s8 %v1038
      %v1040 = vlaneseq
      %v1041 = vshrl.u32 %v1040, 7
      %v1042 = vsub.s32 %v1039, %v1041
      %v1043 = vrot.slane %v1029, %v1042
      %v1044 = vcombine.high %v1036, %v1036
      %v1045 = vcombine.high %v1043, %v1043
      %v1046 = vcombine.high %v1006, %v1006
      %v1048 = vunpack.c.l.s4 1983009808
      %v1049 = vunpack.c.0.s8 %v1048
      %v1050 = vlaneseq
      %v1051 = vshrl.u32 %v1050, 7
      %v1052 = vsub.s32 %v1049, %v1051
      %v1053 = vrot.slane %v1006, %v1052
      %v1055 = vunpack.c.l.s4 1983009808
      %v1056 = vunpack.c.0.s8 %v1055
      %v1057 = vlaneseq
      %v1058 = vshrl.u32 %v1057, 7
      %v1059 = vsub.s32 %v1056, %v1058
      %v1060 = vrot.slane %v1046, %v1059
      %v1061 = vcombine.high %v1053, %v1053
      %v1062 = vcombine.high %v1060, %v1060
      %v1063 = vcombine.high %v1007, %v1007
      %v1065 = vunpack.c.l.s4 1983009808
      %v1066 = vunpack.c.0.s8 %v1065
      %v1067 = vlaneseq
      %v1068 = vshrl.u32 %v1067, 7
      %v1069 = vsub.s32 %v1066, %v1068
      %v1070 = vrot.slane %v1007, %v1069
      %v1072 = vunpack.c.l.s4 1983009808
      %v1073 = vunpack.c.0.s8 %v1072
      %v1074 = vlaneseq
      %v1075 = vshrl.u32 %v1074, 7
      %v1076 = vsub.s32 %v1073, %v1075
      %v1077 = vrot.slane %v1063, %v1076
      %v1078 = vcombine.high %v1070, %v1070
      %v1079 = vcombine.high %v1077, %v1077
      %vm1096 = vcmask 517120
      %v1097 = vsel %vm1096, %v1019, -inf
      %v1098 = vrot.slane %v1097, 4
      %v1099 = vmax.f32 %v1097, %v1098
      %v1100 = vrot.slane %v1099, 2
      %v1101 = vmax.f32 %v1099, %v1100
      %v1102 = vrot.slane %v1101, 1
      %v1103 = vmax.f32 %v1101, %v1102
      %v1104 = vsel %vm1096, %v1027, -inf
      %v1105 = vrot.slane %v1104, 4
      %v1106 = vmax.f32 %v1104, %v1105
      %v1107 = vrot.slane %v1106, 2
      %v1108 = vmax.f32 %v1106, %v1107
      %v1109 = vrot.slane %v1108, 1
      %v1110 = vmax.f32 %v1108, %v1109
      %v1111 = vsel %vm1096, %v1026, -inf
      %v1112 = vrot.slane %v1111, 4
      %v1113 = vmax.f32 %v1111, %v1112
      %v1114 = vrot.slane %v1113, 2
      %v1115 = vmax.f32 %v1113, %v1114
      %v1116 = vrot.slane %v1115, 1
      %v1117 = vmax.f32 %v1115, %v1116
      %v1118 = vsel %vm1096, %v1028, -inf
      %v1119 = vrot.slane %v1118, 4
      %v1120 = vmax.f32 %v1118, %v1119
      %v1121 = vrot.slane %v1120, 2
      %v1122 = vmax.f32 %v1120, %v1121
      %v1123 = vrot.slane %v1122, 1
      %v1124 = vmax.f32 %v1122, %v1123
      %v1125 = vsel %vm1096, %v1036, -inf
      %v1126 = vrot.slane %v1125, 4
      %v1127 = vmax.f32 %v1125, %v1126
      %v1128 = vrot.slane %v1127, 2
      %v1129 = vmax.f32 %v1127, %v1128
      %v1130 = vrot.slane %v1129, 1
      %v1131 = vmax.f32 %v1129, %v1130
      %v1132 = vsel %vm1096, %v1044, -inf
      %v1133 = vrot.slane %v1132, 4
      %v1134 = vmax.f32 %v1132, %v1133
      %v1135 = vrot.slane %v1134, 2
      %v1136 = vmax.f32 %v1134, %v1135
      %v1137 = vrot.slane %v1136, 1
      %v1138 = vmax.f32 %v1136, %v1137
      %v1139 = vsel %vm1096, %v1043, -inf
      %v1140 = vrot.slane %v1139, 4
      %v1141 = vmax.f32 %v1139, %v1140
      %v1142 = vrot.slane %v1141, 2
      %v1143 = vmax.f32 %v1141, %v1142
      %v1144 = vrot.slane %v1143, 1
      %v1145 = vmax.f32 %v1143, %v1144
      %v1146 = vsel %vm1096, %v1045, -inf
      %v1147 = vrot.slane %v1146, 4
      %v1148 = vmax.f32 %v1146, %v1147
      %v1149 = vrot.slane %v1148, 2
      %v1150 = vmax.f32 %v1148, %v1149
      %v1151 = vrot.slane %v1150, 1
      %v1152 = vmax.f32 %v1150, %v1151
      %v1153 = vsel %vm1096, %v1053, -inf
      %v1154 = vrot.slane %v1153, 4
      %v1155 = vmax.f32 %v1153, %v1154
      %v1156 = vrot.slane %v1155, 2
      %v1157 = vmax.f32 %v1155, %v1156
      %v1158 = vrot.slane %v1157, 1
      %v1159 = vmax.f32 %v1157, %v1158
      %v1160 = vsel %vm1096, %v1061, -inf
      %v1161 = vrot.slane %v1160, 4
      %v1162 = vmax.f32 %v1160, %v1161
      %v1163 = vrot.slane %v1162, 2
      %v1164 = vmax.f32 %v1162, %v1163
      %v1165 = vrot.slane %v1164, 1
      %v1166 = vmax.f32 %v1164, %v1165
      %v1167 = vsel %vm1096, %v1060, -inf
      %v1168 = vrot.slane %v1167, 4
      %v1169 = vmax.f32 %v1167, %v1168
      %v1170 = vrot.slane %v1169, 2
      %v1171 = vmax.f32 %v1169, %v1170
      %v1172 = vrot.slane %v1171, 1
      %v1173 = vmax.f32 %v1171, %v1172
      %v1174 = vsel %vm1096, %v1062, -inf
      %v1175 = vrot.slane %v1174, 4
      %v1176 = vmax.f32 %v1174, %v1175
      %v1177 = vrot.slane %v1176, 2
      %v1178 = vmax.f32 %v1176, %v1177
      %v1179 = vrot.slane %v1178, 1
      %v1180 = vmax.f32 %v1178, %v1179
      %v1181 = vsel %vm1096, %v1070, -inf
      %v1182 = vrot.slane %v1181, 4
      %v1183 = vmax.f32 %v1181, %v1182
      %v1184 = vrot.slane %v1183, 2
      %v1185 = vmax.f32 %v1183, %v1184
      %v1186 = vrot.slane %v1185, 1
      %v1187 = vmax.f32 %v1185, %v1186
      %v1188 = vsel %vm1096, %v1078, -inf
      %v1189 = vrot.slane %v1188, 4
      %v1190 = vmax.f32 %v1188, %v1189
      %v1191 = vrot.slane %v1190, 2
      %v1192 = vmax.f32 %v1190, %v1191
      %v1193 = vrot.slane %v1192, 1
      %v1194 = vmax.f32 %v1192, %v1193
      %v1195 = vsel %vm1096, %v1077, -inf
      %v1196 = vrot.slane %v1195, 4
      %v1197 = vmax.f32 %v1195, %v1196
      %v1198 = vrot.slane %v1197, 2
      %v1199 = vmax.f32 %v1197, %v1198
      %v1200 = vrot.slane %v1199, 1
      %v1201 = vmax.f32 %v1199, %v1200
      %v1202 = vsel %vm1096, %v1079, -inf
      %v1203 = vrot.slane %v1202, 4
      %v1204 = vmax.f32 %v1202, %v1203
      %v1205 = vrot.slane %v1204, 2
      %v1206 = vmax.f32 %v1204, %v1205
      %v1207 = vrot.slane %v1206, 1
      %v1208 = vmax.f32 %v1206, %v1207
      %v1209 = vsel %vm673, %v1103, -inf
      %v1210 = vsel %vm673, %v1131, -inf
      %v1211 = vmax.f32 %v1209, %v1210
      %v1212 = vsel %vm673, %v1110, -inf
      %v1213 = vsel %vm673, %v1138, -inf
      %v1214 = vmax.f32 %v1212, %v1213
      %v1215 = vsel %vm673, %v1117, -inf
      %v1216 = vsel %vm673, %v1145, -inf
      %v1217 = vmax.f32 %v1215, %v1216
      %v1218 = vsel %vm673, %v1124, -inf
      %v1219 = vsel %vm673, %v1152, -inf
      %v1220 = vmax.f32 %v1218, %v1219
      %v1221 = vsel %vm673, %v1159, -inf
      %v1222 = vsel %vm673, %v1187, -inf
      %v1223 = vmax.f32 %v1221, %v1222
      %v1224 = vsel %vm673, %v1166, -inf
      %v1225 = vsel %vm673, %v1194, -inf
      %v1226 = vmax.f32 %v1224, %v1225
      %v1227 = vsel %vm673, %v1173, -inf
      %v1228 = vsel %vm673, %v1201, -inf
      %v1229 = vmax.f32 %v1227, %v1228
      %v1230 = vsel %vm673, %v1180, -inf
      %v1231 = vsel %vm673, %v1208, -inf
      %v1232 = vmax.f32 %v1230, %v1231
      %v1233 = vpack.c.bf16 %v1211, %v1211
      %v1234 = vpack.c.bf16 %v1214, %v1214
      %v1235 = vpack.c.bf16 %v1217, %v1217
      %v1236 = vpack.c.bf16 %v1220, %v1220
      %v1237 = vpack.c.bf16 %v1223, %v1223
      %v1238 = vpack.c.bf16 %v1226, %v1226
      %v1239 = vpack.c.bf16 %v1229, %v1229
      %v1240 = vpack.c.bf16 %v1232, %v1232
      %v1250 = vunpack.c.l.s4 1983009808
      %v1251 = vunpack.c.0.s8 %v1250
      %v1252 = vlaneseq
      %v1253 = vshrl.u32 %v1252, 7
      %v1254 = vsub.s32 %v1251, %v1253
      %v1255 = vrot.slane %v1233, %v1254
      %v1257 = vunpack.c.l.s4 1983009808
      %v1258 = vunpack.c.0.s8 %v1257
      %v1259 = vlaneseq
      %v1260 = vshrl.u32 %v1259, 7
      %v1261 = vsub.s32 %v1258, %v1260
      %v1262 = vrot.slane %v1234, %v1261
      %v1264 = vunpack.c.l.s4 1983009808
      %v1265 = vunpack.c.0.s8 %v1264
      %v1266 = vlaneseq
      %v1267 = vshrl.u32 %v1266, 7
      %v1268 = vsub.s32 %v1265, %v1267
      %v1269 = vrot.slane %v1235, %v1268
      %v1271 = vunpack.c.l.s4 1983009808
      %v1272 = vunpack.c.0.s8 %v1271
      %v1273 = vlaneseq
      %v1274 = vshrl.u32 %v1273, 7
      %v1275 = vsub.s32 %v1272, %v1274
      %v1276 = vrot.slane %v1236, %v1275
      %v1278 = vunpack.c.l.s4 1983009808
      %v1279 = vunpack.c.0.s8 %v1278
      %v1280 = vlaneseq
      %v1281 = vshrl.u32 %v1280, 7
      %v1282 = vsub.s32 %v1279, %v1281
      %v1283 = vrot.slane %v1237, %v1282
      %v1285 = vunpack.c.l.s4 1983009808
      %v1286 = vunpack.c.0.s8 %v1285
      %v1287 = vlaneseq
      %v1288 = vshrl.u32 %v1287, 7
      %v1289 = vsub.s32 %v1286, %v1288
      %v1290 = vrot.slane %v1238, %v1289
      %v1292 = vunpack.c.l.s4 1983009808
      %v1293 = vunpack.c.0.s8 %v1292
      %v1294 = vlaneseq
      %v1295 = vshrl.u32 %v1294, 7
      %v1296 = vsub.s32 %v1293, %v1295
      %v1297 = vrot.slane %v1239, %v1296
      %v1299 = vunpack.c.l.s4 1983009808
      %v1300 = vunpack.c.0.s8 %v1299
      %v1301 = vlaneseq
      %v1302 = vshrl.u32 %v1301, 7
      %v1303 = vsub.s32 %v1300, %v1302
      %v1304 = vrot.slane %v1240, %v1303
      %v1306 = vunpack.c.l.s4 1983009808
      %v1307 = vunpack.c.0.s8 %v1306
      %v1308 = vlaneseq
      %v1309 = vshrl.u32 %v1308, 7
      %v1310 = vsub.s32 %v1307, %v1309
      %v1311 = vrot.slane %v1255, %v1310
      %v1313 = vunpack.c.l.s4 1983009808
      %v1314 = vunpack.c.0.s8 %v1313
      %v1315 = vlaneseq
      %v1316 = vshrl.u32 %v1315, 7
      %v1317 = vsub.s32 %v1314, %v1316
      %v1318 = vrot.slane %v1262, %v1317
      %v1320 = vunpack.c.l.s4 1983009808
      %v1321 = vunpack.c.0.s8 %v1320
      %v1322 = vlaneseq
      %v1323 = vshrl.u32 %v1322, 7
      %v1324 = vsub.s32 %v1321, %v1323
      %v1325 = vrot.slane %v1269, %v1324
      %v1327 = vunpack.c.l.s4 1983009808
      %v1328 = vunpack.c.0.s8 %v1327
      %v1329 = vlaneseq
      %v1330 = vshrl.u32 %v1329, 7
      %v1331 = vsub.s32 %v1328, %v1330
      %v1332 = vrot.slane %v1276, %v1331
      %v1334 = vunpack.c.l.s4 1983009808
      %v1335 = vunpack.c.0.s8 %v1334
      %v1336 = vlaneseq
      %v1337 = vshrl.u32 %v1336, 7
      %v1338 = vsub.s32 %v1335, %v1337
      %v1339 = vrot.slane %v1283, %v1338
      %v1341 = vunpack.c.l.s4 1983009808
      %v1342 = vunpack.c.0.s8 %v1341
      %v1343 = vlaneseq
      %v1344 = vshrl.u32 %v1343, 7
      %v1345 = vsub.s32 %v1342, %v1344
      %v1346 = vrot.slane %v1290, %v1345
      %v1348 = vunpack.c.l.s4 1983009808
      %v1349 = vunpack.c.0.s8 %v1348
      %v1350 = vlaneseq
      %v1351 = vshrl.u32 %v1350, 7
      %v1352 = vsub.s32 %v1349, %v1351
      %v1353 = vrot.slane %v1297, %v1352
      %v1355 = vunpack.c.l.s4 1983009808
      %v1356 = vunpack.c.0.s8 %v1355
      %v1357 = vlaneseq
      %v1358 = vshrl.u32 %v1357, 7
      %v1359 = vsub.s32 %v1356, %v1358
      %v1360 = vrot.slane %v1304, %v1359
      %v1361 = vunpack.c.l.b16 %v1311
      %v1362 = vunpack.c.l.b16 %v1318
      %v1363 = vunpack.c.l.b16 %v1325
      %v1364 = vunpack.c.l.b16 %v1332
      %v1365 = vunpack.c.l.b16 %v1339
      %v1366 = vunpack.c.l.b16 %v1346
      %v1367 = vunpack.c.l.b16 %v1353
      %v1368 = vunpack.c.l.b16 %v1360
      %v1369 = vrot.slane %v1362, 7
      %vm1370 = vcmask 1041409
      %v1371 = vsel %vm1370, %v1369, %v1361
      %v1372 = vrot.slane %v1363, 6
      %vm1373 = vcmask 1042434
      %v1374 = vsel %vm1373, %v1372, %v1371
      %v1375 = vrot.slane %v1364, 5
      %vm1376 = vcmask 1043459
      %v1377 = vsel %vm1376, %v1375, %v1374
      %v1378 = vrot.slane %v1366, 7
      %v1379 = vsel %vm1370, %v1378, %v1365
      %v1380 = vrot.slane %v1367, 6
      %v1381 = vsel %vm1373, %v1380, %v1379
      %v1382 = vrot.slane %v1368, 5
      %v1383 = vsel %vm1376, %v1382, %v1381
      %v1384 = vpack.c.b16 %v1377, %v1377
      %v1385 = vpack.c.b16 %v1383, %v1383
      %v1387 = vunpack.c.l.s4 1983009808
      %v1388 = vunpack.c.0.s8 %v1387
      %v1389 = vlaneseq
      %v1390 = vshrl.u32 %v1389, 7
      %v1391 = vsub.s32 %v1388, %v1390
      %v1392 = vrot.slane %v1384, %v1391
      %v1394 = vunpack.c.l.s4 1983009808
      %v1395 = vunpack.c.0.s8 %v1394
      %v1396 = vlaneseq
      %v1397 = vshrl.u32 %v1396, 7
      %v1398 = vsub.s32 %v1395, %v1397
      %v1399 = vrot.slane %v1385, %v1398
      %1402 = vst.msk [vmem:[%s192] sm:$0x3] %vm1096, %v1392
      %1403 = vst.msk [vmem:[%s192 + $0x2] sm:$0x3] %vm1096, %v1399
      %s1404 = smul.u32 2, %s19
      %p1405 = scmp.lt.s32.totalorder %s18, 1
      %s1406 = scalar_select %p1405, %s18, 1
      %p1407 = scmp.lt.s32.totalorder %s1404, 3
      %s1408 = scalar_select %p1407, %s1404, 3
      %s1409 = smul.addr %s1406, 4
      %s1410 = sadd.s32 %s1408, %s1409
      %s1411 = smul.addr %s1410, 2
      %s1412 = scalar_lea.vmem %s3, %s1411
      // Predicated region
      $region37: #{unet_old_forward.5} parent=31 // pred_check
        %p1413 = pneg %p114
      $region38: #{unet_old_forward.5} parent=31 // pred_check_branch
        %1415 = sbr.rel (%p1413) target = $region40
      $region39: #{unet_old_forward.5} parent=31 // pred_region
        %s1416 = smul.u32 2, %s19
      $region40: #{unet_old_forward.5} parent=31 // pred_fallthru
        _
    $region32: #{unet_old_forward.5} parent=5 // pred_fallthru
      _
    %p1417 = scmp.le.s32.totalorder 2, %s9
    // Predicated region
    $region41: #{unet_old_forward.5} parent=5 // pred_check
      %p1418 = pneg %p1417
    $region42: #{unet_old_forward.5} parent=5 // pred_check_branch
      %1420 = sbr.rel (%p1418) target = $region44
    $region43: #{unet_old_forward.5} parent=5 // pred_region
      %s1421 = ssub.s32 %s9, 2
      // Predicated region
      $region45: #{unet_old_forward.5} parent=43 // pred_check
        %p1422 = pneg %p120
      $region46: #{unet_old_forward.5} parent=43 // pred_check_branch
        %1424 = sbr.rel (%p1422) target = $region48
      $region47: #{unet_old_forward.5} parent=43 // pred_region
        %s1425 = smul.u32 2, %s21
        %p1426 = scmp.lt.s32.totalorder %s20, 1
        %s1427 = scalar_select %p1426, %s20, 1
        %p1428 = scmp.lt.s32.totalorder %s1425, 3
        %s1429 = scalar_select %p1428, %s1425, 3
        %s1430 = smul.addr %s1427, 4
        %s1431 = sadd.s32 %s1429, %s1430
        %s1432 = smul.addr %s1431, 2
        %s1433 = scalar_lea.vmem %s3, %s1432
      $region48: #{unet_old_forward.5} parent=43 // pred_fallthru
        _
    $region44: #{unet_old_forward.5} parent=5 // pred_fallthru
      _
  $region6: #{unet_old_forward.5} parent=0 // loop_footer
    %s13 = sadd.s32 1, %s9
  $region7: #{unet_old_forward.5} parent=0 // loop_footer_branch
    %8 = sbr.rel target = $region3
  $region8: #{unet_old_forward.5} parent=0 // loop_exit
    _

// kernel: tile.23
$region0: #{tile.23}
  #allocation0 [shape = 's32[1]{0}', space=sflag, size = 0x4, scoped, tag = 'scoped memory for tile.23']
  %s0 = inlined_call_operand.vmem [shape: f32[32], index: 0, kind: input, shape index: {}]
  %s1 = inlined_call_operand.vmem [shape: f32[16,32], index: 1, kind: output, shape index: {}]
  // Predicated region
  $region2: #{tile.23} parent=0 // pred_check
    _
  $region3: #{tile.23} parent=0 // pred_check_branch
    %3 = sbr.rel (0) target = $region5
  $region4: #{tile.23} parent=0 // pred_region
    _
  $region5: #{tile.23} parent=0 // pred_fallthru
    _
  %v4 = vld [vmem:[%s0] ss:$0 sm:$0xff]
  %5 = vst [vmem:[%s1] sm:$0xff] %v4
  %s6 = scalar_lea.vmem %s1, 8
  %7 = vst [vmem:[%s6] sm:$0xff] %v4

// kernel: tile.24
$region0: #{tile.24}
  %s0 = inlined_call_operand.vmem [shape: f32[16,32], index: 0, kind: input, shape index: {}]
  %s1 = inlined_call_operand.vmem [shape: f32[1,512], index: 1, kind: output, shape index: {}]
  $region1: #{tile.24} parent=0
    #allocation0 [shape = 'u8[16384]{0}', space=vmem, size = 0x4000, scoped, tag = 'scoped mem for output reshape']
    %v2 = vld [vmem:[%s0] ss:$4 sm:$0xf]
    %vm3 = vcmask 261120
    %4 = vst.msk [vmem:[#allocation0] ss:$8 sm:$0xf] %vm3, %v2
    %s5 = scalar_lea.vmem %s0, 3
    %v6 = vld [vmem:[%s5] ss:$4 sm:$0xf]
    %7 = vrot.lane.b32.xlu0 %v6, 96
    %v8 = vpop.permute.xlu0 %7
    %vm9 = vcmask 1048320
    %10 = vst.msk [vmem:[#allocation0] ss:$8 sm:$0xf] %vm9, %v8
    %s11 = scalar_lea.vmem %s0, 2
    %v12 = vld [vmem:[%s11] ss:$4 sm:$0xf]
    %13 = vrot.lane.b32.xlu0 %v12, 64
    %v14 = vpop.permute.xlu0 %13
    %vm15 = vcmask 785920
    %16 = vst.msk [vmem:[#allocation0] ss:$8 sm:$0xf] %vm15, %v14
    %s17 = scalar_lea.vmem %s0, 1
    %v18 = vld [vmem:[%s17] ss:$4 sm:$0xf]
    %19 = vrot.lane.b32.xlu0 %v18, 32
    %v20 = vpop.permute.xlu0 %19
    %vm21 = vcmask 523520
    %22 = vst.msk [vmem:[#allocation0] ss:$8 sm:$0xf] %vm21, %v20
    %s24 = sshllo.u32 0, 1
    %v26 = vld [vmem:[#allocation0] sm:%s24]
    %s27 = sshllo.u32 0, 1
    %28 = vst [vmem:[%s1] sm:%s27] %v26
    %s29 = scalar_lea.vmem [#allocation0], 8
    %v30 = vld [vmem:[%s29] sm:%s24]
    %s31 = sshllo.u32 0, 1
    %s32 = scalar_lea.vmem %s1, 1
    %33 = vst [vmem:[%s32] sm:%s31] %v30
    %s34 = scalar_lea.vmem [#allocation0], 16
    %v35 = vld [vmem:[%s34] sm:%s24]
    %s36 = sshllo.u32 0, 1
    %s37 = smul.addr 1, 2
    %s38 = scalar_lea.vmem %s1, %s37
    %39 = vst [vmem:[%s38] sm:%s36] %v35
    %s40 = scalar_lea.vmem [#allocation0], 24
    %v41 = vld [vmem:[%s40] sm:%s24]
    %s42 = sshllo.u32 0, 1
    %s43 = smul.addr 1, 3
    %s44 = scalar_lea.vmem %s1, %s43
    %45 = vst [vmem:[%s44] sm:%s42] %v41

// kernel: tile.18
$region0: #{tile.18}
  #allocation0 [shape = 's32[1]{0}', space=sflag, size = 0x4, scoped, tag = 'scoped memory for tile.18']
  %s0 = inlined_call_operand.vmem [shape: f32[64], index: 0, kind: input, shape index: {}]
  %s1 = inlined_call_operand.vmem [shape: f32[4,64], index: 1, kind: output, shape index: {}]
  // Predicated region
  $region2: #{tile.18} parent=0 // pred_check
    _
  $region3: #{tile.18} parent=0 // pred_check_branch
    %3 = sbr.rel (0) target = $region5
  $region4: #{tile.18} parent=0 // pred_region
    _
  $region5: #{tile.18} parent=0 // pred_fallthru
    _
  %v4 = vld [vmem:[%s0] ss:$0 sm:$0xff]
  %5 = vst [vmem:[%s1] sm:$0xf] %v4

// kernel: tile.19
$region0: #{tile.19}
  %s0 = inlined_call_operand.vmem [shape: f32[4,64], index: 0, kind: input, shape index: {}]
  %s1 = inlined_call_operand.vmem [shape: f32[1,256], index: 1, kind: output, shape index: {}]
  $region1: #{tile.19} parent=0
    #allocation0 [shape = 'u8[8192]{0}', space=vmem, size = 0x2000, scoped, tag = 'scoped mem for output reshape']
    #allocation1 [shape = 'u8[4096]{0}', space=vmem, size = 0x1000, scoped, tag = 'scoped mem for input reshape']
    %s3 = sshllo.u32 0, 4
    %v4 = vld [vmem:[%s0] sm:%s3]
    %5 = vst [vmem:[#allocation1] sm:%s3] %v4
    %s6 = smov 3
    %v7 = vld [vmem:[#allocation1] ss:$2 sm:%s6]
    %vm8 = vcmask 523264
    %9 = vst.msk [vmem:[#allocation0] ss:$8 sm:$0x3] %vm8, %v7
    %s10 = scalar_lea.vmem [#allocation1], 1
    %s11 = smov 3
    %v12 = vld [vmem:[%s10] ss:$2 sm:%s11]
    %13 = vrot.lane.b32.xlu0 %v12, 64
    %v14 = vpop.permute.xlu0 %13
    %vm15 = vcmask 1048064
    %16 = vst.msk [vmem:[#allocation0] ss:$8 sm:$0x3] %vm15, %v14
    %s18 = sshllo.u32 0, 1
    %v20 = vld [vmem:[#allocation0] sm:%s18]
    %s21 = sshllo.u32 0, 1
    %22 = vst [vmem:[%s1] sm:%s21] %v20
    %s23 = scalar_lea.vmem [#allocation0], 8
    %v24 = vld [vmem:[%s23] sm:%s18]
    %s25 = sshllo.u32 0, 1
    %s26 = scalar_lea.vmem %s1, 1
    %27 = vst [vmem:[%s26] sm:%s25] %v24

// kernel: unet_old_forward.4
$region0: #{unet_old_forward.4}
  #allocation0 [shape = 'u32[]', space=smem, size = 0x4, offset = 0x4, fixed_abs, tag = 'smem constant byte address 0x4 - core index']
  #allocation1 [shape = 'u32[144,128]{1,0:T(1,128)}', space=vmem, size = 0x12000, scoped, tag = 'internal scratch']
  #allocation2 [shape = 'bf16[18,18,4]{2,1,0:T(8,128)(2,1)}', space=vmem, size = 0x1b000, scoped, tag = 'scratch operand']
  %s0 = inlined_call_operand.vmem [shape: bf16[2,16,16,4], index: 0, kind: input, shape index: {}]
  %s1 = inlined_call_operand.vmem [shape: bf16[36,32], index: 1, kind: input, shape index: {}]
  %s2 = inlined_call_operand.vmem [shape: f32[1,32], index: 2, kind: input, shape index: {}]
  %s3 = inlined_call_operand.vmem [shape: bf16[2,8,8,32], index: 3, kind: output, shape index: {}]
  %s4 = sld [smem:[#allocation0]]
  $region49: #{unet_old_forward.4} parent=0
    _
  %s6 = ssub.s32 1, %s4
  %s7 = scalar_select 0, %s6, %s4
  loop: start=0, step=1, limit=6
  $region2: #{unet_old_forward.4} parent=0 // loop_pre_header
    _
  $region3: #{unet_old_forward.4} parent=0 // loop_header
    %s9 = sphi 0, %s13
    %p10 = scmp.ge.s32.totalorder %s9, 6
    %s16 = sphi 0, %s28
    %s17 = sphi 0, %s24
    %s18 = sphi 0, %s16
    %s19 = sphi 0, %s17
    %s20 = sphi 0, %s18
    %s21 = sphi 0, %s19
    %s31 = sphi 0, %s33
    %s34 = sphi 0, %s31
    %s35 = sphi 0, %s34
    %s51 = sphi 0, %s35
    %s55 = sphi 0, %s55
    %s57 = sphi 0, %s55
    %s58 = sphi 0, %s57
    %s72 = sphi 0, %s58
    %s76 = sphi 0, %s76
    %s78 = sphi 0, %s76
    %s79 = sphi 0, %s78
    %s93 = sphi 0, %s79
    %s101 = sphi 0, %s103
    %s104 = sphi 0, %s101
    %s105 = sphi 0, %s104
    %s121 = sphi 0, %s105
  $region4: #{unet_old_forward.4} parent=0 // loop_header_branch
    %12 = sbr.rel (%p10) target = $region8
  $region5: #{unet_old_forward.4} parent=0 // loop_body
    %s14 = ssub.s32 %s9, 1
    %s15 = ssub.s32 %s9, 2
    %s22 = sadd.s32 1, %s17
    %p23 = scmp.ge.s32.totalorder %s22, 2
    %s24 = scalar_select %p23, 0, %s22
    %s25 = sadd.s32 1, %s16
    %s26 = scalar_select %p23, %s25, %s16
    %p27 = scmp.ge.s32.totalorder %s26, 2
    %s28 = scalar_select %p27, 0, %s26
    %s29 = ssub.s32 %s16, %s28
    %p30 = scmp.eq.s32.totalorder %s29, 0
    %s32 = sadd.s32 %s31, 1
    %s33 = scalar_select %p30, %s31, %s32
    %p36 = pneg %p30
    %p37 = scmp.eq.s32.totalorder %s9, 3
    %p38 = por %p36, %p37
    %p39 = scmp.ne.s32.totalorder %s31, %s34
    %p40 = scmp.eq.s32.totalorder %s9, 0
    %p41 = por %p39, %p40
    %p42 = scmp.ne.s32.totalorder %s31, %s34
    %p43 = scmp.eq.s32.totalorder %s14, 3
    %p44 = por %p42, %p43
    %p45 = scmp.ne.s32.totalorder %s34, %s35
    %p46 = scmp.eq.s32.totalorder %s14, 0
    %p47 = por %p45, %p46
    %p48 = scmp.ne.s32.totalorder %s34, %s35
    %p49 = scmp.eq.s32.totalorder %s15, 3
    %p50 = por %p48, %p49
    %p52 = scmp.ne.s32.totalorder %s35, %s51
    %p53 = scmp.eq.s32.totalorder %s15, 0
    %p54 = por %p52, %p53
    %s56 = sadd.s32 %s55, 1
    %p59 = scmp.eq.s32.totalorder %s9, 3
    %p60 = scmp.ne.s32.totalorder %s55, %s57
    %p61 = scmp.eq.s32.totalorder %s9, 0
    %p62 = por %p60, %p61
    %p63 = scmp.ne.s32.totalorder %s55, %s57
    %p64 = scmp.eq.s32.totalorder %s14, 3
    %p65 = por %p63, %p64
    %p66 = scmp.ne.s32.totalorder %s57, %s58
    %p67 = scmp.eq.s32.totalorder %s14, 0
    %p68 = por %p66, %p67
    %p69 = scmp.ne.s32.totalorder %s57, %s58
    %p70 = scmp.eq.s32.totalorder %s15, 3
    %p71 = por %p69, %p70
    %p73 = scmp.ne.s32.totalorder %s58, %s72
    %p74 = scmp.eq.s32.totalorder %s15, 0
    %p75 = por %p73, %p74
    %s77 = sadd.s32 %s76, 1
    %p80 = scmp.eq.s32.totalorder %s9, 3
    %p81 = scmp.ne.s32.totalorder %s76, %s78
    %p82 = scmp.eq.s32.totalorder %s9, 0
    %p83 = por %p81, %p82
    %p84 = scmp.ne.s32.totalorder %s76, %s78
    %p85 = scmp.eq.s32.totalorder %s14, 3
    %p86 = por %p84, %p85
    %p87 = scmp.ne.s32.totalorder %s78, %s79
    %p88 = scmp.eq.s32.totalorder %s14, 0
    %p89 = por %p87, %p88
    %p90 = scmp.ne.s32.totalorder %s78, %s79
    %p91 = scmp.eq.s32.totalorder %s15, 3
    %p92 = por %p90, %p91
    %p94 = scmp.ne.s32.totalorder %s79, %s93
    %p95 = scmp.eq.s32.totalorder %s15, 0
    %p96 = por %p94, %p95
    %s97 = ssub.s32 %s16, %s28
    %s98 = ssub.s32 %s17, %s24
    %s99 = sor.u32 %s97, %s98
    %p100 = scmp.eq.s32.totalorder %s99, 0
    %s102 = sadd.s32 %s101, 1
    %s103 = scalar_select %p100, %s101, %s102
    %p106 = pneg %p100
    %p107 = scmp.eq.s32.totalorder %s9, 3
    %p108 = por %p106, %p107
    %p109 = scmp.ne.s32.totalorder %s101, %s104
    %p110 = scmp.eq.s32.totalorder %s9, 0
    %p111 = por %p109, %p110
    %p112 = scmp.ne.s32.totalorder %s101, %s104
    %p113 = scmp.eq.s32.totalorder %s14, 3
    %p114 = por %p112, %p113
    %p115 = scmp.ne.s32.totalorder %s104, %s105
    %p116 = scmp.eq.s32.totalorder %s14, 0
    %p117 = por %p115, %p116
    %p118 = scmp.ne.s32.totalorder %s104, %s105
    %p119 = scmp.eq.s32.totalorder %s15, 3
    %p120 = por %p118, %p119
    %p122 = scmp.ne.s32.totalorder %s105, %s121
    %p123 = scmp.eq.s32.totalorder %s15, 0
    %p124 = por %p122, %p123
    %p125 = scmp.le.s32.totalorder 1, %s9
    %p126 = scmp.lt.s32.totalorder %s9, 5
    %p127 = pnand %p125, %p126
    %p128 = pneg %p127
    // Predicated region
    $region9: #{unet_old_forward.4} parent=5 // pred_check
      _
    $region10: #{unet_old_forward.4} parent=5 // pred_check_branch
      %130 = sbr.rel (%p127) target = $region12
    $region11: #{unet_old_forward.4} parent=5 // pred_region
      %s131 = ssub.s32 %s9, 1
      // Predicated region
      $region13: #{unet_old_forward.4} parent=11 // pred_check
        %p132 = pneg %p68
      $region14: #{unet_old_forward.4} parent=11 // pred_check_branch
        %134 = sbr.rel (%p132) target = $region16
      $region15: #{unet_old_forward.4} parent=11 // pred_region
        _
      $region16: #{unet_old_forward.4} parent=11 // pred_fallthru
        _
      // Predicated region
      $region17: #{unet_old_forward.4} parent=11 // pred_check
        %p135 = pneg %p89
      $region18: #{unet_old_forward.4} parent=11 // pred_check_branch
        %137 = sbr.rel (%p135) target = $region20
      $region19: #{unet_old_forward.4} parent=11 // pred_region
        _
      $region20: #{unet_old_forward.4} parent=11 // pred_fallthru
        _
    $region12: #{unet_old_forward.4} parent=5 // pred_fallthru
      _
    %p138 = scmp.lt.s32.totalorder %s9, 4
    // Predicated region
    $region21: #{unet_old_forward.4} parent=5 // pred_check
      %p139 = pneg %p138
    $region22: #{unet_old_forward.4} parent=5 // pred_check_branch
      %141 = sbr.rel (%p139) target = $region24
    $region23: #{unet_old_forward.4} parent=5 // pred_region
      // Predicated region
      $region25: #{unet_old_forward.4} parent=23 // pred_check
        %p142 = pneg %p41
      $region26: #{unet_old_forward.4} parent=23 // pred_check_branch
        %144 = sbr.rel (%p142) target = $region28
      $region27: #{unet_old_forward.4} parent=23 // pred_region
        %p145 = scmp.lt.s32.totalorder %s16, 1
        %s146 = scalar_select %p145, %s16, 1
        %s147 = smul.addr %s146, 32
        %s148 = smul.addr %s147, 4
        %s149 = scalar_lea.vmem %s0, %s148
      $region28: #{unet_old_forward.4} parent=23 // pred_fallthru
        _
    $region24: #{unet_old_forward.4} parent=5 // pred_fallthru
      _
    %p150 = scmp.le.s32.totalorder 1, %s9
    %p151 = scmp.lt.s32.totalorder %s9, 5
    %p152 = pnand %p150, %p151
    %p153 = pneg %p152
    // Predicated region
    $region29: #{unet_old_forward.4} parent=5 // pred_check
      _
    $region30: #{unet_old_forward.4} parent=5 // pred_check_branch
      %155 = sbr.rel (%p152) target = $region32
    $region31: #{unet_old_forward.4} parent=5 // pred_region
      %s156 = ssub.s32 %s9, 1
      %p157 = scmp.lt.s32.totalorder %s18, 1
      %s158 = scalar_select %p157, %s18, 1
      %s159 = smul.addr %s158, 32
      %s160 = smul.addr %s159, 4
      %s161 = scalar_lea.vmem %s0, %s160
      %p162 = pneg %p47
      %p163 = pneg %p44
      %p164 = pneg %p68
      %p165 = pneg %p65
      %p166 = pneg %p89
      %p167 = pneg %p86
      %p168 = pneg %p117
      %p169 = pneg %p114
      %s170 = smul.u32 4, %s19
      %p171 = scmp.lt.s32.totalorder %s18, 1
      %s172 = scalar_select %p171, %s18, 1
      %p173 = scmp.lt.s32.totalorder %s170, 7
      %s174 = scalar_select %p173, %s170, 7
      %s175 = smul.addr %s172, 8
      %s176 = sadd.s32 %s174, %s175
      %s177 = smul.addr %s176, 4
      %s178 = scalar_lea.vmem %s3, %s177
      %p179 = scmp.lt.s32.totalorder %s18, 1
      %s180 = scalar_select %p179, %s18, 1
      %s181 = smul.addr %s180, 32
      %s182 = smul.addr %s181, 4
      %s183 = scalar_lea.vmem %s0, %s182
      %s184 = smul.u32 4, %s19
      %p185 = scmp.lt.s32.totalorder %s18, 1
      %s186 = scalar_select %p185, %s18, 1
      %p187 = scmp.lt.s32.totalorder %s184, 7
      %s188 = scalar_select %p187, %s184, 7
      %s189 = smul.addr %s186, 8
      %s190 = sadd.s32 %s188, %s189
      %s191 = smul.addr %s190, 4
      %s192 = scalar_lea.vmem %s3, %s191
      %s193 = smul.u32 4, %s19
      %p195 = scmp.eq.s32.totalorder %s19, 0
      // Predicated region
      $region33: #{unet_old_forward.4} parent=31 // pred_check
        %p196 = pneg %p195
      $region34: #{unet_old_forward.4} parent=31 // pred_check_branch
        %198 = sbr.rel (%p196) target = $region36
      $region35: #{unet_old_forward.4} parent=31 // pred_region
        %vm199 = vcmask 27648
        %200 = vst.msk [vmem:[#allocation2] sm:$0xf] %vm199, 0
        %201 = vst.msk [vmem:[#allocation2 + $0x4] sm:$0xf] %vm199, 0
        %vm202 = vcmask 24576
        %203 = vst.msk [vmem:[#allocation2 + $0x8] sm:$0x1] %vm202, 0
        %204 = vst.msk [vmem:[#allocation2 + $0xc] sm:$0xf] %vm199, 0
        %205 = vst.msk [vmem:[#allocation2 + $0x10] sm:$0xf] %vm199, 0
        %206 = vst.msk [vmem:[#allocation2 + $0x14] sm:$0x1] %vm202, 0
        %207 = vst.msk [vmem:[#allocation2 + $0x18] sm:$0xf] %vm199, 0
        %208 = vst.msk [vmem:[#allocation2 + $0x1c] sm:$0xf] %vm199, 0
        %209 = vst.msk [vmem:[#allocation2 + $0x20] sm:$0x1] %vm202, 0
        %210 = vst.msk [vmem:[#allocation2 + $0x24] sm:$0xf] %vm199, 0
        %211 = vst.msk [vmem:[#allocation2 + $0x28] sm:$0xf] %vm199, 0
        %212 = vst.msk [vmem:[#allocation2 + $0x2c] sm:$0x1] %vm202, 0
        %213 = vst.msk [vmem:[#allocation2 + $0x30] sm:$0xf] %vm199, 0
        %214 = vst.msk [vmem:[#allocation2 + $0x34] sm:$0xf] %vm199, 0
        %215 = vst.msk [vmem:[#allocation2 + $0x38] sm:$0x1] %vm202, 0
        %216 = vst.msk [vmem:[#allocation2 + $0x3c] sm:$0xf] %vm199, 0
        %217 = vst.msk [vmem:[#allocation2 + $0x40] sm:$0xf] %vm199, 0
        %218 = vst.msk [vmem:[#allocation2 + $0x44] sm:$0x1] %vm202, 0
        %219 = vst.msk [vmem:[#allocation2 + $0x48] sm:$0xf] %vm199, 0
        %220 = vst.msk [vmem:[#allocation2 + $0x4c] sm:$0xf] %vm199, 0
        %221 = vst.msk [vmem:[#allocation2 + $0x50] sm:$0x1] %vm202, 0
        %222 = vst.msk [vmem:[#allocation2 + $0x54] sm:$0xf] %vm199, 0
        %223 = vst.msk [vmem:[#allocation2 + $0x58] sm:$0xf] %vm199, 0
        %224 = vst.msk [vmem:[#allocation2 + $0x5c] sm:$0x1] %vm202, 0
        %225 = vst.msk [vmem:[#allocation2 + $0x60] sm:$0xf] %vm199, 0
        %226 = vst.msk [vmem:[#allocation2 + $0x64] sm:$0xf] %vm199, 0
        %227 = vst.msk [vmem:[#allocation2 + $0x68] sm:$0x1] %vm202, 0
        %228 = vst.msk [vmem:[#allocation2 + $0x6c] sm:$0xf] %vm199, 0
        %229 = vst.msk [vmem:[#allocation2 + $0x70] sm:$0xf] %vm199, 0
        %230 = vst.msk [vmem:[#allocation2 + $0x74] sm:$0x1] %vm202, 0
        %231 = vst.msk [vmem:[#allocation2 + $0x78] sm:$0xf] %vm199, 0
        %232 = vst.msk [vmem:[#allocation2 + $0x7c] sm:$0xf] %vm199, 0
        %233 = vst.msk [vmem:[#allocation2 + $0x80] sm:$0x1] %vm202, 0
        %234 = vst.msk [vmem:[#allocation2 + $0x84] sm:$0xf] %vm199, 0
        %235 = vst.msk [vmem:[#allocation2 + $0x88] sm:$0xf] %vm199, 0
        %236 = vst.msk [vmem:[#allocation2 + $0x8c] sm:$0x1] %vm202, 0
        %237 = vst.msk [vmem:[#allocation2 + $0x90] sm:$0xf] %vm199, 0
        %238 = vst.msk [vmem:[#allocation2 + $0x94] sm:$0xf] %vm199, 0
        %239 = vst.msk [vmem:[#allocation2 + $0x98] sm:$0x1] %vm202, 0
        %240 = vst.msk [vmem:[#allocation2 + $0x9c] sm:$0xf] %vm199, 0
        %241 = vst.msk [vmem:[#allocation2 + $0xa0] sm:$0xf] %vm199, 0
        %242 = vst.msk [vmem:[#allocation2 + $0xa4] sm:$0x1] %vm202, 0
        %243 = vst.msk [vmem:[#allocation2 + $0xa8] sm:$0xf] %vm199, 0
        %244 = vst.msk [vmem:[#allocation2 + $0xac] sm:$0xf] %vm199, 0
        %245 = vst.msk [vmem:[#allocation2 + $0xb0] sm:$0x1] %vm202, 0
        %246 = vst.msk [vmem:[#allocation2 + $0xb4] sm:$0xf] %vm199, 0
        %247 = vst.msk [vmem:[#allocation2 + $0xb8] sm:$0xf] %vm199, 0
        %248 = vst.msk [vmem:[#allocation2 + $0xbc] sm:$0x1] %vm202, 0
        %249 = vst.msk [vmem:[#allocation2 + $0xc0] sm:$0xf] %vm199, 0
        %250 = vst.msk [vmem:[#allocation2 + $0xc4] sm:$0xf] %vm199, 0
        %251 = vst.msk [vmem:[#allocation2 + $0xc8] sm:$0x1] %vm202, 0
        %252 = vst.msk [vmem:[#allocation2 + $0xcc] sm:$0xf] %vm199, 0
        %253 = vst.msk [vmem:[#allocation2 + $0xd0] sm:$0xf] %vm199, 0
        %254 = vst.msk [vmem:[#allocation2 + $0xd4] sm:$0x1] %vm202, 0
        %v255 = vld [vmem:[%s183] sm:$0xf]
        %v256 = vld [vmem:[%s183 + $0x4] sm:$0xf]
        %v257 = vld [vmem:[%s183 + $0x8] sm:$0xf]
        %v258 = vld [vmem:[%s183 + $0xc] sm:$0xf]
        %v259 = vld [vmem:[%s183 + $0x10] sm:$0xf]
        %v260 = vld [vmem:[%s183 + $0x14] sm:$0xf]
        %v261 = vld [vmem:[%s183 + $0x18] sm:$0xf]
        %v262 = vld [vmem:[%s183 + $0x1c] sm:$0xf]
        %v263 = vld [vmem:[%s183 + $0x20] sm:$0xf]
        %v264 = vld [vmem:[%s183 + $0x24] sm:$0xf]
        %v265 = vld [vmem:[%s183 + $0x28] sm:$0xf]
        %v266 = vld [vmem:[%s183 + $0x2c] sm:$0xf]
        %v267 = vld [vmem:[%s183 + $0x30] sm:$0xf]
        %v268 = vld [vmem:[%s183 + $0x34] sm:$0xf]
        %v269 = vld [vmem:[%s183 + $0x38] sm:$0xf]
        %v270 = vld [vmem:[%s183 + $0x3c] sm:$0xf]
        %v271 = vld [vmem:[%s183 + $0x40] sm:$0xf]
        %v272 = vld [vmem:[%s183 + $0x44] sm:$0xf]
        %v273 = vld [vmem:[%s183 + $0x48] sm:$0xf]
        %v274 = vld [vmem:[%s183 + $0x4c] sm:$0xf]
        %v275 = vld [vmem:[%s183 + $0x50] sm:$0xf]
        %v276 = vld [vmem:[%s183 + $0x54] sm:$0xf]
        %v277 = vld [vmem:[%s183 + $0x58] sm:$0xf]
        %v278 = vld [vmem:[%s183 + $0x5c] sm:$0xf]
        %v279 = vld [vmem:[%s183 + $0x60] sm:$0xf]
        %v280 = vld [vmem:[%s183 + $0x64] sm:$0xf]
        %v281 = vld [vmem:[%s183 + $0x68] sm:$0xf]
        %v282 = vld [vmem:[%s183 + $0x6c] sm:$0xf]
        %v283 = vld [vmem:[%s183 + $0x70] sm:$0xf]
        %v284 = vld [vmem:[%s183 + $0x74] sm:$0xf]
        %v285 = vld [vmem:[%s183 + $0x78] sm:$0xf]
        %v286 = vld [vmem:[%s183 + $0x7c] sm:$0xf]
        %vm287 = vsmask.f32 256
        %vm288 = vsmask.f32 4368
        %vm289 = vmor %vm287, %vm288
        %v291 = vshrl.u32 %v255, 16
        %v293 = vrot.slane %v291, 7
        %v294 = vshll.u32 %v255, 16
        %v296 = vor.u32 %v293, %v294
        %v297 = vrot.slane %v293, 4
        %v299 = vshrl.u32 %v256, 16
        %v301 = vrot.slane %v299, 7
        %v302 = vshll.u32 %v256, 16
        %v304 = vor.u32 %v301, %v302
        %v305 = vsel %vm289, %v297, %v304
        %v306 = vrot.slane %v301, 4
        %v308 = vshrl.u32 %v257, 16
        %v310 = vrot.slane %v308, 7
        %v311 = vshll.u32 %v257, 16
        %v313 = vor.u32 %v310, %v311
        %v314 = vrot.slane %v310, 4
        %v316 = vshrl.u32 %v258, 16
        %v318 = vrot.slane %v316, 7
        %v319 = vshll.u32 %v258, 16
        %v321 = vor.u32 %v318, %v319
        %v322 = vsel %vm289, %v314, %v321
        %v323 = vrot.slane %v318, 4
        %v325 = vshrl.u32 %v259, 16
        %v327 = vrot.slane %v325, 7
        %v328 = vshll.u32 %v259, 16
        %v330 = vor.u32 %v327, %v328
        %v331 = vrot.slane %v327, 4
        %v333 = vshrl.u32 %v260, 16
        %v335 = vrot.slane %v333, 7
        %v336 = vshll.u32 %v260, 16
        %v338 = vor.u32 %v335, %v336
        %v339 = vsel %vm289, %v331, %v338
        %v340 = vrot.slane %v335, 4
        %v342 = vshrl.u32 %v261, 16
        %v344 = vrot.slane %v342, 7
        %v345 = vshll.u32 %v261, 16
        %v347 = vor.u32 %v344, %v345
        %v348 = vrot.slane %v344, 4
        %v350 = vshrl.u32 %v262, 16
        %v352 = vrot.slane %v350, 7
        %v353 = vshll.u32 %v262, 16
        %v355 = vor.u32 %v352, %v353
        %v356 = vsel %vm289, %v348, %v355
        %v357 = vrot.slane %v352, 4
        %v359 = vshrl.u32 %v263, 16
        %v361 = vrot.slane %v359, 7
        %v362 = vshll.u32 %v263, 16
        %v364 = vor.u32 %v361, %v362
        %v365 = vrot.slane %v361, 4
        %v367 = vshrl.u32 %v264, 16
        %v369 = vrot.slane %v367, 7
        %v370 = vshll.u32 %v264, 16
        %v372 = vor.u32 %v369, %v370
        %v373 = vsel %vm289, %v365, %v372
        %v374 = vrot.slane %v369, 4
        %v376 = vshrl.u32 %v265, 16
        %v378 = vrot.slane %v376, 7
        %v379 = vshll.u32 %v265, 16
        %v381 = vor.u32 %v378, %v379
        %v382 = vrot.slane %v378, 4
        %v384 = vshrl.u32 %v266, 16
        %v386 = vrot.slane %v384, 7
        %v387 = vshll.u32 %v266, 16
        %v389 = vor.u32 %v386, %v387
        %v390 = vsel %vm289, %v382, %v389
        %v391 = vrot.slane %v386, 4
        %v393 = vshrl.u32 %v267, 16
        %v395 = vrot.slane %v393, 7
        %v396 = vshll.u32 %v267, 16
        %v398 = vor.u32 %v395, %v396
        %v399 = vrot.slane %v395, 4
        %v401 = vshrl.u32 %v268, 16
        %v403 = vrot.slane %v401, 7
        %v404 = vshll.u32 %v268, 16
        %v406 = vor.u32 %v403, %v404
        %v407 = vsel %vm289, %v399, %v406
        %v408 = vrot.slane %v403, 4
        %v410 = vshrl.u32 %v269, 16
        %v412 = vrot.slane %v410, 7
        %v413 = vshll.u32 %v269, 16
        %v415 = vor.u32 %v412, %v413
        %v416 = vrot.slane %v412, 4
        %v418 = vshrl.u32 %v270, 16
        %v420 = vrot.slane %v418, 7
        %v421 = vshll.u32 %v270, 16
        %v423 = vor.u32 %v420, %v421
        %v424 = vsel %vm289, %v416, %v423
        %v425 = vrot.slane %v420, 4
        %v427 = vshrl.u32 %v271, 16
        %v429 = vrot.slane %v427, 7
        %v430 = vshll.u32 %v271, 16
        %v432 = vor.u32 %v429, %v430
        %v433 = vrot.slane %v429, 4
        %v435 = vshrl.u32 %v272, 16
        %v437 = vrot.slane %v435, 7
        %v438 = vshll.u32 %v272, 16
        %v440 = vor.u32 %v437, %v438
        %v441 = vsel %vm289, %v433, %v440
        %v442 = vrot.slane %v437, 4
        %v444 = vshrl.u32 %v273, 16
        %v446 = vrot.slane %v444, 7
        %v447 = vshll.u32 %v273, 16
        %v449 = vor.u32 %v446, %v447
        %v450 = vrot.slane %v446, 4
        %v452 = vshrl.u32 %v274, 16
        %v454 = vrot.slane %v452, 7
        %v455 = vshll.u32 %v274, 16
        %v457 = vor.u32 %v454, %v455
        %v458 = vsel %vm289, %v450, %v457
        %v459 = vrot.slane %v454, 4
        %v461 = vshrl.u32 %v275, 16
        %v463 = vrot.slane %v461, 7
        %v464 = vshll.u32 %v275, 16
        %v466 = vor.u32 %v463, %v464
        %v467 = vrot.slane %v463, 4
        %v469 = vshrl.u32 %v276, 16
        %v471 = vrot.slane %v469, 7
        %v472 = vshll.u32 %v276, 16
        %v474 = vor.u32 %v471, %v472
        %v475 = vsel %vm289, %v467, %v474
        %v476 = vrot.slane %v471, 4
        %v478 = vshrl.u32 %v277, 16
        %v480 = vrot.slane %v478, 7
        %v481 = vshll.u32 %v277, 16
        %v483 = vor.u32 %v480, %v481
        %v484 = vrot.slane %v480, 4
        %v486 = vshrl.u32 %v278, 16
        %v488 = vrot.slane %v486, 7
        %v489 = vshll.u32 %v278, 16
        %v491 = vor.u32 %v488, %v489
        %v492 = vsel %vm289, %v484, %v491
        %v493 = vrot.slane %v488, 4
        %v495 = vshrl.u32 %v279, 16
        %v497 = vrot.slane %v495, 7
        %v498 = vshll.u32 %v279, 16
        %v500 = vor.u32 %v497, %v498
        %v501 = vrot.slane %v497, 4
        %v503 = vshrl.u32 %v280, 16
        %v505 = vrot.slane %v503, 7
        %v506 = vshll.u32 %v280, 16
        %v508 = vor.u32 %v505, %v506
        %v509 = vsel %vm289, %v501, %v508
        %v510 = vrot.slane %v505, 4
        %v512 = vshrl.u32 %v281, 16
        %v514 = vrot.slane %v512, 7
        %v515 = vshll.u32 %v281, 16
        %v517 = vor.u32 %v514, %v515
        %v518 = vrot.slane %v514, 4
        %v520 = vshrl.u32 %v282, 16
        %v522 = vrot.slane %v520, 7
        %v523 = vshll.u32 %v282, 16
        %v525 = vor.u32 %v522, %v523
        %v526 = vsel %vm289, %v518, %v525
        %v527 = vrot.slane %v522, 4
        %v529 = vshrl.u32 %v283, 16
        %v531 = vrot.slane %v529, 7
        %v532 = vshll.u32 %v283, 16
        %v534 = vor.u32 %v531, %v532
        %v535 = vrot.slane %v531, 4
        %v537 = vshrl.u32 %v284, 16
        %v539 = vrot.slane %v537, 7
        %v540 = vshll.u32 %v284, 16
        %v542 = vor.u32 %v539, %v540
        %v543 = vsel %vm289, %v535, %v542
        %v544 = vrot.slane %v539, 4
        %v546 = vshrl.u32 %v285, 16
        %v548 = vrot.slane %v546, 7
        %v549 = vshll.u32 %v285, 16
        %v551 = vor.u32 %v548, %v549
        %v552 = vrot.slane %v548, 4
        %v554 = vshrl.u32 %v286, 16
        %v556 = vrot.slane %v554, 7
        %v557 = vshll.u32 %v286, 16
        %v559 = vor.u32 %v556, %v557
        %v560 = vsel %vm289, %v552, %v559
        %v561 = vrot.slane %v556, 4
        %s610 = scalar_lea.vmem [#allocation2], 12
        %vm611 = vcmask 27648
        %vm612 = vsmask.f32 7938
        %vm613 = vmand %vm611, %vm612
        %v614 = vld [vmem:[%s610] sm:$0xf]
        %v615 = vsel %vm613, %v296, %v614
        %616 = vst [vmem:[%s610] sm:$0xf] %v615
        %617 = vst.msk [vmem:[%s610 + $0x4] sm:$0xf] %vm199, %v305
        %vm618 = vcmask 24576
        %vm619 = vmand %vm618, %vm287
        %v620 = vld [vmem:[%s610 + $0x8] sm:$0x1]
        %v621 = vsel %vm619, %v306, %v620
        %622 = vst [vmem:[%s610 + $0x8] sm:$0x1] %v621
        %v623 = vld [vmem:[%s610 + $0xc] sm:$0xf]
        %v624 = vsel %vm613, %v313, %v623
        %625 = vst [vmem:[%s610 + $0xc] sm:$0xf] %v624
        %626 = vst.msk [vmem:[%s610 + $0x10] sm:$0xf] %vm199, %v322
        %v627 = vld [vmem:[%s610 + $0x14] sm:$0x1]
        %v628 = vsel %vm619, %v323, %v627
        %629 = vst [vmem:[%s610 + $0x14] sm:$0x1] %v628
        %v630 = vld [vmem:[%s610 + $0x18] sm:$0xf]
        %v631 = vsel %vm613, %v330, %v630
        %632 = vst [vmem:[%s610 + $0x18] sm:$0xf] %v631
        %633 = vst.msk [vmem:[%s610 + $0x1c] sm:$0xf] %vm199, %v339
        %v634 = vld [vmem:[%s610 + $0x20] sm:$0x1]
        %v635 = vsel %vm619, %v340, %v634
        %636 = vst [vmem:[%s610 + $0x20] sm:$0x1] %v635
        %v637 = vld [vmem:[%s610 + $0x24] sm:$0xf]
        %v638 = vsel %vm613, %v347, %v637
        %639 = vst [vmem:[%s610 + $0x24] sm:$0xf] %v638
        %640 = vst.msk [vmem:[%s610 + $0x28] sm:$0xf] %vm199, %v356
        %v641 = vld [vmem:[%s610 + $0x2c] sm:$0x1]
        %v642 = vsel %vm619, %v357, %v641
        %643 = vst [vmem:[%s610 + $0x2c] sm:$0x1] %v642
        %v644 = vld [vmem:[%s610 + $0x30] sm:$0xf]
        %v645 = vsel %vm613, %v364, %v644
        %646 = vst [vmem:[%s610 + $0x30] sm:$0xf] %v645
        %647 = vst.msk [vmem:[%s610 + $0x34] sm:$0xf] %vm199, %v373
        %v648 = vld [vmem:[%s610 + $0x38] sm:$0x1]
        %v649 = vsel %vm619, %v374, %v648
        %650 = vst [vmem:[%s610 + $0x38] sm:$0x1] %v649
        %v651 = vld [vmem:[%s610 + $0x3c] sm:$0xf]
        %v652 = vsel %vm613, %v381, %v651
        %653 = vst [vmem:[%s610 + $0x3c] sm:$0xf] %v652
        %654 = vst.msk [vmem:[%s610 + $0x40] sm:$0xf] %vm199, %v390
        %v655 = vld [vmem:[%s610 + $0x44] sm:$0x1]
        %v656 = vsel %vm619, %v391, %v655
        %657 = vst [vmem:[%s610 + $0x44] sm:$0x1] %v656
        %v658 = vld [vmem:[%s610 + $0x48] sm:$0xf]
        %v659 = vsel %vm613, %v398, %v658
        %660 = vst [vmem:[%s610 + $0x48] sm:$0xf] %v659
        %661 = vst.msk [vmem:[%s610 + $0x4c] sm:$0xf] %vm199, %v407
        %v662 = vld [vmem:[%s610 + $0x50] sm:$0x1]
        %v663 = vsel %vm619, %v408, %v662
        %664 = vst [vmem:[%s610 + $0x50] sm:$0x1] %v663
        %v665 = vld [vmem:[%s610 + $0x54] sm:$0xf]
        %v666 = vsel %vm613, %v415, %v665
        %667 = vst [vmem:[%s610 + $0x54] sm:$0xf] %v666
        %668 = vst.msk [vmem:[%s610 + $0x58] sm:$0xf] %vm199, %v424
        %v669 = vld [vmem:[%s610 + $0x5c] sm:$0x1]
        %v670 = vsel %vm619, %v425, %v669
        %671 = vst [vmem:[%s610 + $0x5c] sm:$0x1] %v670
        %v672 = vld [vmem:[%s610 + $0x60] sm:$0xf]
        %v673 = vsel %vm613, %v432, %v672
        %674 = vst [vmem:[%s610 + $0x60] sm:$0xf] %v673
        %675 = vst.msk [vmem:[%s610 + $0x64] sm:$0xf] %vm199, %v441
        %v676 = vld [vmem:[%s610 + $0x68] sm:$0x1]
        %v677 = vsel %vm619, %v442, %v676
        %678 = vst [vmem:[%s610 + $0x68] sm:$0x1] %v677
        %v679 = vld [vmem:[%s610 + $0x6c] sm:$0xf]
        %v680 = vsel %vm613, %v449, %v679
        %681 = vst [vmem:[%s610 + $0x6c] sm:$0xf] %v680
        %682 = vst.msk [vmem:[%s610 + $0x70] sm:$0xf] %vm199, %v458
        %v683 = vld [vmem:[%s610 + $0x74] sm:$0x1]
        %v684 = vsel %vm619, %v459, %v683
        %685 = vst [vmem:[%s610 + $0x74] sm:$0x1] %v684
        %v686 = vld [vmem:[%s610 + $0x78] sm:$0xf]
        %v687 = vsel %vm613, %v466, %v686
        %688 = vst [vmem:[%s610 + $0x78] sm:$0xf] %v687
        %689 = vst.msk [vmem:[%s610 + $0x7c] sm:$0xf] %vm199, %v475
        %v690 = vld [vmem:[%s610 + $0x80] sm:$0x1]
        %v691 = vsel %vm619, %v476, %v690
        %692 = vst [vmem:[%s610 + $0x80] sm:$0x1] %v691
        %v693 = vld [vmem:[%s610 + $0x84] sm:$0xf]
        %v694 = vsel %vm613, %v483, %v693
        %695 = vst [vmem:[%s610 + $0x84] sm:$0xf] %v694
        %696 = vst.msk [vmem:[%s610 + $0x88] sm:$0xf] %vm199, %v492
        %v697 = vld [vmem:[%s610 + $0x8c] sm:$0x1]
        %v698 = vsel %vm619, %v493, %v697
        %699 = vst [vmem:[%s610 + $0x8c] sm:$0x1] %v698
        %v700 = vld [vmem:[%s610 + $0x90] sm:$0xf]
        %v701 = vsel %vm613, %v500, %v700
        %702 = vst [vmem:[%s610 + $0x90] sm:$0xf] %v701
        %703 = vst.msk [vmem:[%s610 + $0x94] sm:$0xf] %vm199, %v509
        %v704 = vld [vmem:[%s610 + $0x98] sm:$0x1]
        %v705 = vsel %vm619, %v510, %v704
        %706 = vst [vmem:[%s610 + $0x98] sm:$0x1] %v705
        %v707 = vld [vmem:[%s610 + $0x9c] sm:$0xf]
        %v708 = vsel %vm613, %v517, %v707
        %709 = vst [vmem:[%s610 + $0x9c] sm:$0xf] %v708
        %710 = vst.msk [vmem:[%s610 + $0xa0] sm:$0xf] %vm199, %v526
        %v711 = vld [vmem:[%s610 + $0xa4] sm:$0x1]
        %v712 = vsel %vm619, %v527, %v711
        %713 = vst [vmem:[%s610 + $0xa4] sm:$0x1] %v712
        %v714 = vld [vmem:[%s610 + $0xa8] sm:$0xf]
        %v715 = vsel %vm613, %v534, %v714
        %716 = vst [vmem:[%s610 + $0xa8] sm:$0xf] %v715
        %717 = vst.msk [vmem:[%s610 + $0xac] sm:$0xf] %vm199, %v543
        %v718 = vld [vmem:[%s610 + $0xb0] sm:$0x1]
        %v719 = vsel %vm619, %v544, %v718
        %720 = vst [vmem:[%s610 + $0xb0] sm:$0x1] %v719
        %v721 = vld [vmem:[%s610 + $0xb4] sm:$0xf]
        %v722 = vsel %vm613, %v551, %v721
        %723 = vst [vmem:[%s610 + $0xb4] sm:$0xf] %v722
        %724 = vst.msk [vmem:[%s610 + $0xb8] sm:$0xf] %vm199, %v560
        %v725 = vld [vmem:[%s610 + $0xbc] sm:$0x1]
        %v726 = vsel %vm619, %v561, %v725
        %727 = vst [vmem:[%s610 + $0xbc] sm:$0x1] %v726
      $region36: #{unet_old_forward.4} parent=31 // pred_fallthru
        _
      %s728 = smul.u32 %s19, 8
      %s729 = smul.u32 %s728, 3
      %s730 = smul.addr %s729, 4
      %s731 = scalar_lea.vmem [#allocation2], %s730
      %v732 = vld [vmem:[%s731] sm:$0xf]
      %v733 = vld [vmem:[%s731 + $0x4] sm:$0xf]
      %v734 = vld [vmem:[%s731 + $0xc] sm:$0xf]
      %v735 = vld [vmem:[%s731 + $0x10] sm:$0xf]
      %v736 = vld [vmem:[%s731 + $0x18] sm:$0xf]
      %v737 = vld [vmem:[%s731 + $0x1c] sm:$0xf]
      %v738 = vld [vmem:[%s731 + $0x24] sm:$0xf]
      %v739 = vld [vmem:[%s731 + $0x28] sm:$0xf]
      %v740 = vld [vmem:[%s731 + $0x30] sm:$0xf]
      %v741 = vld [vmem:[%s731 + $0x34] sm:$0xf]
      %v742 = vld [vmem:[%s731 + $0x3c] sm:$0xf]
      %v743 = vld [vmem:[%s731 + $0x40] sm:$0xf]
      %v744 = vld [vmem:[%s731 + $0x48] sm:$0xf]
      %v745 = vld [vmem:[%s731 + $0x4c] sm:$0xf]
      %v746 = vld [vmem:[%s731 + $0x54] sm:$0xf]
      %v747 = vld [vmem:[%s731 + $0x58] sm:$0xf]
      %v748 = vld [vmem:[%s731 + $0x8] sm:$0x1]
      %v749 = vld [vmem:[%s731 + $0x14] sm:$0x1]
      %v750 = vld [vmem:[%s731 + $0x20] sm:$0x1]
      %v751 = vld [vmem:[%s731 + $0x2c] sm:$0x1]
      %v752 = vld [vmem:[%s731 + $0x38] sm:$0x1]
      %v753 = vld [vmem:[%s731 + $0x44] sm:$0x1]
      %v754 = vld [vmem:[%s731 + $0x50] sm:$0x1]
      %v755 = vld [vmem:[%s731 + $0x5c] sm:$0x1]
      %v756 = vld [vmem:[%s731] sm:$0xe]
      %v757 = vld [vmem:[%s731 + $0xc] sm:$0xe]
      %v758 = vld [vmem:[%s731 + $0x18] sm:$0xe]
      %v759 = vld [vmem:[%s731 + $0x24] sm:$0xe]
      %v760 = vld [vmem:[%s731 + $0x30] sm:$0xe]
      %v761 = vld [vmem:[%s731 + $0x3c] sm:$0xe]
      %v762 = vld [vmem:[%s731 + $0x48] sm:$0xe]
      %v763 = vld [vmem:[%s731 + $0x54] sm:$0xe]
      %s764 = sadd.s32 %s728, 1
      %s765 = smul.u32 %s764, 3
      %s766 = smul.addr %s765, 4
      %s767 = scalar_lea.vmem [#allocation2], %s766
      %v768 = vld [vmem:[%s767] sm:$0xf]
      %v769 = vld [vmem:[%s767 + $0x4] sm:$0xf]
      %v770 = vld [vmem:[%s767 + $0xc] sm:$0xf]
      %v771 = vld [vmem:[%s767 + $0x10] sm:$0xf]
      %v772 = vld [vmem:[%s767 + $0x18] sm:$0xf]
      %v773 = vld [vmem:[%s767 + $0x1c] sm:$0xf]
      %v774 = vld [vmem:[%s767 + $0x24] sm:$0xf]
      %v775 = vld [vmem:[%s767 + $0x28] sm:$0xf]
      %v776 = vld [vmem:[%s767 + $0x30] sm:$0xf]
      %v777 = vld [vmem:[%s767 + $0x34] sm:$0xf]
      %v778 = vld [vmem:[%s767 + $0x3c] sm:$0xf]
      %v779 = vld [vmem:[%s767 + $0x40] sm:$0xf]
      %v780 = vld [vmem:[%s767 + $0x48] sm:$0xf]
      %v781 = vld [vmem:[%s767 + $0x4c] sm:$0xf]
      %v782 = vld [vmem:[%s767 + $0x54] sm:$0xf]
      %v783 = vld [vmem:[%s767 + $0x58] sm:$0xf]
      %v784 = vld [vmem:[%s767 + $0x8] sm:$0x1]
      %v785 = vld [vmem:[%s767 + $0x14] sm:$0x1]
      %v786 = vld [vmem:[%s767 + $0x20] sm:$0x1]
      %v787 = vld [vmem:[%s767 + $0x2c] sm:$0x1]
      %v788 = vld [vmem:[%s767 + $0x38] sm:$0x1]
      %v789 = vld [vmem:[%s767 + $0x44] sm:$0x1]
      %v790 = vld [vmem:[%s767 + $0x50] sm:$0x1]
      %v791 = vld [vmem:[%s767 + $0x5c] sm:$0x1]
      %v792 = vld [vmem:[%s767] sm:$0xe]
      %v793 = vld [vmem:[%s767 + $0xc] sm:$0xe]
      %v794 = vld [vmem:[%s767 + $0x18] sm:$0xe]
      %v795 = vld [vmem:[%s767 + $0x24] sm:$0xe]
      %v796 = vld [vmem:[%s767 + $0x30] sm:$0xe]
      %v797 = vld [vmem:[%s767 + $0x3c] sm:$0xe]
      %v798 = vld [vmem:[%s767 + $0x48] sm:$0xe]
      %v799 = vld [vmem:[%s767 + $0x54] sm:$0xe]
      %s800 = sadd.s32 %s728, 2
      %s801 = smul.u32 %s800, 3
      %s802 = smul.addr %s801, 4
      %s803 = scalar_lea.vmem [#allocation2], %s802
      %v804 = vld [vmem:[%s803] sm:$0xf]
      %v805 = vld [vmem:[%s803 + $0x4] sm:$0xf]
      %v806 = vld [vmem:[%s803 + $0xc] sm:$0xf]
      %v807 = vld [vmem:[%s803 + $0x10] sm:$0xf]
      %v808 = vld [vmem:[%s803 + $0x18] sm:$0xf]
      %v809 = vld [vmem:[%s803 + $0x1c] sm:$0xf]
      %v810 = vld [vmem:[%s803 + $0x24] sm:$0xf]
      %v811 = vld [vmem:[%s803 + $0x28] sm:$0xf]
      %v812 = vld [vmem:[%s803 + $0x30] sm:$0xf]
      %v813 = vld [vmem:[%s803 + $0x34] sm:$0xf]
      %v814 = vld [vmem:[%s803 + $0x3c] sm:$0xf]
      %v815 = vld [vmem:[%s803 + $0x40] sm:$0xf]
      %v816 = vld [vmem:[%s803 + $0x48] sm:$0xf]
      %v817 = vld [vmem:[%s803 + $0x4c] sm:$0xf]
      %v818 = vld [vmem:[%s803 + $0x54] sm:$0xf]
      %v819 = vld [vmem:[%s803 + $0x58] sm:$0xf]
      %v820 = vld [vmem:[%s803 + $0x8] sm:$0x1]
      %v821 = vld [vmem:[%s803 + $0x14] sm:$0x1]
      %v822 = vld [vmem:[%s803 + $0x20] sm:$0x1]
      %v823 = vld [vmem:[%s803 + $0x2c] sm:$0x1]
      %v824 = vld [vmem:[%s803 + $0x38] sm:$0x1]
      %v825 = vld [vmem:[%s803 + $0x44] sm:$0x1]
      %v826 = vld [vmem:[%s803 + $0x50] sm:$0x1]
      %v827 = vld [vmem:[%s803 + $0x5c] sm:$0x1]
      %v828 = vld [vmem:[%s803] sm:$0xe]
      %v829 = vld [vmem:[%s803 + $0xc] sm:$0xe]
      %v830 = vld [vmem:[%s803 + $0x18] sm:$0xe]
      %v831 = vld [vmem:[%s803 + $0x24] sm:$0xe]
      %v832 = vld [vmem:[%s803 + $0x30] sm:$0xe]
      %v833 = vld [vmem:[%s803 + $0x3c] sm:$0xe]
      %v834 = vld [vmem:[%s803 + $0x48] sm:$0xe]
      %v835 = vld [vmem:[%s803 + $0x54] sm:$0xe]
      %v852 = vunpack.c.l.b16 %v732
      %v853 = vunpack.c.l.b16 %v733
      %v854 = vunpack.c.l.b16 %v734
      %v855 = vunpack.c.l.b16 %v735
      %v856 = vunpack.c.l.b16 %v736
      %v857 = vunpack.c.l.b16 %v737
      %v858 = vunpack.c.l.b16 %v738
      %v859 = vunpack.c.l.b16 %v739
      %v860 = vunpack.c.l.b16 %v740
      %v861 = vunpack.c.l.b16 %v741
      %v862 = vunpack.c.l.b16 %v742
      %v863 = vunpack.c.l.b16 %v743
      %v864 = vunpack.c.l.b16 %v744
      %v865 = vunpack.c.l.b16 %v745
      %v866 = vunpack.c.l.b16 %v746
      %v867 = vunpack.c.l.b16 %v747
      %v868 = vpack.c.b16 %v853, %v852
      %v869 = vpack.c.b16 %v855, %v854
      %v870 = vpack.c.b16 %v857, %v856
      %v871 = vpack.c.b16 %v859, %v858
      %v872 = vpack.c.b16 %v861, %v860
      %v873 = vpack.c.b16 %v863, %v862
      %v874 = vpack.c.b16 %v865, %v864
      %v875 = vpack.c.b16 %v867, %v866
      %v884 = vunpack.c.l.b16 %v748
      %v885 = vunpack.c.l.b16 %v749
      %v886 = vunpack.c.l.b16 %v750
      %v887 = vunpack.c.l.b16 %v751
      %v888 = vunpack.c.l.b16 %v752
      %v889 = vunpack.c.l.b16 %v753
      %v890 = vunpack.c.l.b16 %v754
      %v891 = vunpack.c.l.b16 %v755
      %v892 = vpack.c.b16 %v884, %v884
      %v893 = vpack.c.b16 %v885, %v885
      %v894 = vpack.c.b16 %v886, %v886
      %v895 = vpack.c.b16 %v887, %v887
      %v896 = vpack.c.b16 %v888, %v888
      %v897 = vpack.c.b16 %v889, %v889
      %v898 = vpack.c.b16 %v890, %v890
      %v899 = vpack.c.b16 %v891, %v891
      %vm900 = vsmask.f32 7424
      %v902 = vshrl.u32 %v868, 16
      %v904 = vshll.u32 %v868, 16
      %v906 = vrot.slane %v904, 1
      %v907 = vor.u32 %v902, %v906
      %v909 = vshll.u32 %v892, 16
      %v911 = vrot.slane %v909, 1
      %v912 = vsel %vm900, %v907, %v911
      %v914 = vshrl.u32 %v869, 16
      %v916 = vshll.u32 %v869, 16
      %v918 = vrot.slane %v916, 1
      %v919 = vor.u32 %v914, %v918
      %v921 = vshll.u32 %v893, 16
      %v923 = vrot.slane %v921, 1
      %v924 = vsel %vm900, %v919, %v923
      %v926 = vshrl.u32 %v870, 16
      %v928 = vshll.u32 %v870, 16
      %v930 = vrot.slane %v928, 1
      %v931 = vor.u32 %v926, %v930
      %v933 = vshll.u32 %v894, 16
      %v935 = vrot.slane %v933, 1
      %v936 = vsel %vm900, %v931, %v935
      %v938 = vshrl.u32 %v871, 16
      %v940 = vshll.u32 %v871, 16
      %v942 = vrot.slane %v940, 1
      %v943 = vor.u32 %v938, %v942
      %v945 = vshll.u32 %v895, 16
      %v947 = vrot.slane %v945, 1
      %v948 = vsel %vm900, %v943, %v947
      %v950 = vshrl.u32 %v872, 16
      %v952 = vshll.u32 %v872, 16
      %v954 = vrot.slane %v952, 1
      %v955 = vor.u32 %v950, %v954
      %v957 = vshll.u32 %v896, 16
      %v959 = vrot.slane %v957, 1
      %v960 = vsel %vm900, %v955, %v959
      %v962 = vshrl.u32 %v873, 16
      %v964 = vshll.u32 %v873, 16
      %v966 = vrot.slane %v964, 1
      %v967 = vor.u32 %v962, %v966
      %v969 = vshll.u32 %v897, 16
      %v971 = vrot.slane %v969, 1
      %v972 = vsel %vm900, %v967, %v971
      %v974 = vshrl.u32 %v874, 16
      %v976 = vshll.u32 %v874, 16
      %v978 = vrot.slane %v976, 1
      %v979 = vor.u32 %v974, %v978
      %v981 = vshll.u32 %v898, 16
      %v983 = vrot.slane %v981, 1
      %v984 = vsel %vm900, %v979, %v983
      %v986 = vshrl.u32 %v875, 16
      %v988 = vshll.u32 %v875, 16
      %v990 = vrot.slane %v988, 1
      %v991 = vor.u32 %v986, %v990
      %v993 = vshll.u32 %v899, 16
      %v995 = vrot.slane %v993, 1
      %v996 = vsel %vm900, %v991, %v995
      %997 = vrot.lane.b32.xlu0 %v912, 4
      %v998 = vpop.permute.xlu0 %997
      %999 = vrot.lane.b32.xlu0 %v924, 4
      %v1000 = vpop.permute.xlu0 %999
      %1001 = vrot.lane.b32.xlu0 %v936, 4
      %v1002 = vpop.permute.xlu0 %1001
      %1003 = vrot.lane.b32.xlu0 %v948, 4
      %v1004 = vpop.permute.xlu0 %1003
      %1005 = vrot.lane.b32.xlu0 %v960, 4
      %v1006 = vpop.permute.xlu0 %1005
      %1007 = vrot.lane.b32.xlu0 %v972, 4
      %v1008 = vpop.permute.xlu0 %1007
      %1009 = vrot.lane.b32.xlu0 %v984, 4
      %v1010 = vpop.permute.xlu0 %1009
      %1011 = vrot.lane.b32.xlu0 %v996, 4
      %v1012 = vpop.permute.xlu0 %1011
      %v1021 = vunpack.c.l.b16 %v756
      %v1022 = vunpack.c.l.b16 %v757
      %v1023 = vunpack.c.l.b16 %v758
      %v1024 = vunpack.c.l.b16 %v759
      %v1025 = vunpack.c.l.b16 %v760
      %v1026 = vunpack.c.l.b16 %v761
      %v1027 = vunpack.c.l.b16 %v762
      %v1028 = vunpack.c.l.b16 %v763
      %v1029 = vpack.c.b16 %v853, %v1021
      %v1030 = vpack.c.b16 %v855, %v1022
      %v1031 = vpack.c.b16 %v857, %v1023
      %v1032 = vpack.c.b16 %v859, %v1024
      %v1033 = vpack.c.b16 %v861, %v1025
      %v1034 = vpack.c.b16 %v863, %v1026
      %v1035 = vpack.c.b16 %v865, %v1027
      %v1036 = vpack.c.b16 %v867, %v1028
      %vm1037 = vcmask 1046528
      %v1038 = vrot.slane %v1029, 1
      %v1039 = vrot.slane %v892, 1
      %v1040 = vsel %vm1037, %v1038, %v1039
      %v1041 = vrot.slane %v1030, 1
      %v1042 = vrot.slane %v893, 1
      %v1043 = vsel %vm1037, %v1041, %v1042
      %v1044 = vrot.slane %v1031, 1
      %v1045 = vrot.slane %v894, 1
      %v1046 = vsel %vm1037, %v1044, %v1045
      %v1047 = vrot.slane %v1032, 1
      %v1048 = vrot.slane %v895, 1
      %v1049 = vsel %vm1037, %v1047, %v1048
      %v1050 = vrot.slane %v1033, 1
      %v1051 = vrot.slane %v896, 1
      %v1052 = vsel %vm1037, %v1050, %v1051
      %v1053 = vrot.slane %v1034, 1
      %v1054 = vrot.slane %v897, 1
      %v1055 = vsel %vm1037, %v1053, %v1054
      %v1056 = vrot.slane %v1035, 1
      %v1057 = vrot.slane %v898, 1
      %v1058 = vsel %vm1037, %v1056, %v1057
      %v1059 = vrot.slane %v1036, 1
      %v1060 = vrot.slane %v899, 1
      %v1061 = vsel %vm1037, %v1059, %v1060
      %1062 = vrot.lane.b32.xlu0 %v1040, 8
      %v1063 = vpop.permute.xlu0 %1062
      %1064 = vrot.lane.b32.xlu0 %v1043, 8
      %v1065 = vpop.permute.xlu0 %1064
      %1066 = vrot.lane.b32.xlu0 %v1046, 8
      %v1067 = vpop.permute.xlu0 %1066
      %1068 = vrot.lane.b32.xlu0 %v1049, 8
      %v1069 = vpop.permute.xlu0 %1068
      %1070 = vrot.lane.b32.xlu0 %v1052, 8
      %v1071 = vpop.permute.xlu0 %1070
      %1072 = vrot.lane.b32.xlu0 %v1055, 8
      %v1073 = vpop.permute.xlu0 %1072
      %1074 = vrot.lane.b32.xlu0 %v1058, 8
      %v1075 = vpop.permute.xlu0 %1074
      %1076 = vrot.lane.b32.xlu0 %v1061, 8
      %v1077 = vpop.permute.xlu0 %1076
      %v1094 = vunpack.c.l.b16 %v768
      %v1095 = vunpack.c.l.b16 %v769
      %v1096 = vunpack.c.l.b16 %v770
      %v1097 = vunpack.c.l.b16 %v771
      %v1098 = vunpack.c.l.b16 %v772
      %v1099 = vunpack.c.l.b16 %v773
      %v1100 = vunpack.c.l.b16 %v774
      %v1101 = vunpack.c.l.b16 %v775
      %v1102 = vunpack.c.l.b16 %v776
      %v1103 = vunpack.c.l.b16 %v777
      %v1104 = vunpack.c.l.b16 %v778
      %v1105 = vunpack.c.l.b16 %v779
      %v1106 = vunpack.c.l.b16 %v780
      %v1107 = vunpack.c.l.b16 %v781
      %v1108 = vunpack.c.l.b16 %v782
      %v1109 = vunpack.c.l.b16 %v783
      %v1110 = vpack.c.b16 %v1095, %v1094
      %v1111 = vpack.c.b16 %v1097, %v1096
      %v1112 = vpack.c.b16 %v1099, %v1098
      %v1113 = vpack.c.b16 %v1101, %v1100
      %v1114 = vpack.c.b16 %v1103, %v1102
      %v1115 = vpack.c.b16 %v1105, %v1104
      %v1116 = vpack.c.b16 %v1107, %v1106
      %v1117 = vpack.c.b16 %v1109, %v1108
      %1118 = vrot.lane.b32.xlu0 %v1110, 12
      %v1119 = vpop.permute.xlu0 %1118
      %1120 = vrot.lane.b32.xlu0 %v1111, 12
      %v1121 = vpop.permute.xlu0 %1120
      %1122 = vrot.lane.b32.xlu0 %v1112, 12
      %v1123 = vpop.permute.xlu0 %1122
      %1124 = vrot.lane.b32.xlu0 %v1113, 12
      %v1125 = vpop.permute.xlu0 %1124
      %1126 = vrot.lane.b32.xlu0 %v1114, 12
      %v1127 = vpop.permute.xlu0 %1126
      %1128 = vrot.lane.b32.xlu0 %v1115, 12
      %v1129 = vpop.permute.xlu0 %1128
      %1130 = vrot.lane.b32.xlu0 %v1116, 12
      %v1131 = vpop.permute.xlu0 %1130
      %1132 = vrot.lane.b32.xlu0 %v1117, 12
      %v1133 = vpop.permute.xlu0 %1132
      %v1142 = vunpack.c.l.b16 %v784
      %v1143 = vunpack.c.l.b16 %v785
      %v1144 = vunpack.c.l.b16 %v786
      %v1145 = vunpack.c.l.b16 %v787
      %v1146 = vunpack.c.l.b16 %v788
      %v1147 = vunpack.c.l.b16 %v789
      %v1148 = vunpack.c.l.b16 %v790
      %v1149 = vunpack.c.l.b16 %v791
      %v1150 = vpack.c.b16 %v1142, %v1142
      %v1151 = vpack.c.b16 %v1143, %v1143
      %v1152 = vpack.c.b16 %v1144, %v1144
      %v1153 = vpack.c.b16 %v1145, %v1145
      %v1154 = vpack.c.b16 %v1146, %v1146
      %v1155 = vpack.c.b16 %v1147, %v1147
      %v1156 = vpack.c.b16 %v1148, %v1148
      %v1157 = vpack.c.b16 %v1149, %v1149
      %v1159 = vshrl.u32 %v1110, 16
      %v1161 = vshll.u32 %v1110, 16
      %v1163 = vrot.slane %v1161, 1
      %v1164 = vor.u32 %v1159, %v1163
      %v1166 = vshll.u32 %v1150, 16
      %v1168 = vrot.slane %v1166, 1
      %v1169 = vsel %vm900, %v1164, %v1168
      %v1171 = vshrl.u32 %v1111, 16
      %v1173 = vshll.u32 %v1111, 16
      %v1175 = vrot.slane %v1173, 1
      %v1176 = vor.u32 %v1171, %v1175
      %v1178 = vshll.u32 %v1151, 16
      %v1180 = vrot.slane %v1178, 1
      %v1181 = vsel %vm900, %v1176, %v1180
      %v1183 = vshrl.u32 %v1112, 16
      %v1185 = vshll.u32 %v1112, 16
      %v1187 = vrot.slane %v1185, 1
      %v1188 = vor.u32 %v1183, %v1187
      %v1190 = vshll.u32 %v1152, 16
      %v1192 = vrot.slane %v1190, 1
      %v1193 = vsel %vm900, %v1188, %v1192
      %v1195 = vshrl.u32 %v1113, 16
      %v1197 = vshll.u32 %v1113, 16
      %v1199 = vrot.slane %v1197, 1
      %v1200 = vor.u32 %v1195, %v1199
      %v1202 = vshll.u32 %v1153, 16
      %v1204 = vrot.slane %v1202, 1
      %v1205 = vsel %vm900, %v1200, %v1204
      %v1207 = vshrl.u32 %v1114, 16
      %v1209 = vshll.u32 %v1114, 16
      %v1211 = vrot.slane %v1209, 1
      %v1212 = vor.u32 %v1207, %v1211
      %v1214 = vshll.u32 %v1154, 16
      %v1216 = vrot.slane %v1214, 1
      %v1217 = vsel %vm900, %v1212, %v1216
      %v1219 = vshrl.u32 %v1115, 16
      %v1221 = vshll.u32 %v1115, 16
      %v1223 = vrot.slane %v1221, 1
      %v1224 = vor.u32 %v1219, %v1223
      %v1226 = vshll.u32 %v1155, 16
      %v1228 = vrot.slane %v1226, 1
      %v1229 = vsel %vm900, %v1224, %v1228
      %v1231 = vshrl.u32 %v1116, 16
      %v1233 = vshll.u32 %v1116, 16
      %v1235 = vrot.slane %v1233, 1
      %v1236 = vor.u32 %v1231, %v1235
      %v1238 = vshll.u32 %v1156, 16
      %v1240 = vrot.slane %v1238, 1
      %v1241 = vsel %vm900, %v1236, %v1240
      %v1243 = vshrl.u32 %v1117, 16
      %v1245 = vshll.u32 %v1117, 16
      %v1247 = vrot.slane %v1245, 1
      %v1248 = vor.u32 %v1243, %v1247
      %v1250 = vshll.u32 %v1157, 16
      %v1252 = vrot.slane %v1250, 1
      %v1253 = vsel %vm900, %v1248, %v1252
      %1254 = vrot.lane.b32.xlu0 %v1169, 16
      %v1255 = vpop.permute.xlu0 %1254
      %1256 = vrot.lane.b32.xlu0 %v1181, 16
      %v1257 = vpop.permute.xlu0 %1256
      %1258 = vrot.lane.b32.xlu0 %v1193, 16
      %v1259 = vpop.permute.xlu0 %1258
      %1260 = vrot.lane.b32.xlu0 %v1205, 16
      %v1261 = vpop.permute.xlu0 %1260
      %1262 = vrot.lane.b32.xlu0 %v1217, 16
      %v1263 = vpop.permute.xlu0 %1262
      %1264 = vrot.lane.b32.xlu0 %v1229, 16
      %v1265 = vpop.permute.xlu0 %1264
      %1266 = vrot.lane.b32.xlu0 %v1241, 16
      %v1267 = vpop.permute.xlu0 %1266
      %1268 = vrot.lane.b32.xlu0 %v1253, 16
      %v1269 = vpop.permute.xlu0 %1268
      %v1278 = vunpack.c.l.b16 %v792
      %v1279 = vunpack.c.l.b16 %v793
      %v1280 = vunpack.c.l.b16 %v794
      %v1281 = vunpack.c.l.b16 %v795
      %v1282 = vunpack.c.l.b16 %v796
      %v1283 = vunpack.c.l.b16 %v797
      %v1284 = vunpack.c.l.b16 %v798
      %v1285 = vunpack.c.l.b16 %v799
      %v1286 = vpack.c.b16 %v1095, %v1278
      %v1287 = vpack.c.b16 %v1097, %v1279
      %v1288 = vpack.c.b16 %v1099, %v1280
      %v1289 = vpack.c.b16 %v1101, %v1281
      %v1290 = vpack.c.b16 %v1103, %v1282
      %v1291 = vpack.c.b16 %v1105, %v1283
      %v1292 = vpack.c.b16 %v1107, %v1284
      %v1293 = vpack.c.b16 %v1109, %v1285
      %v1294 = vrot.slane %v1286, 1
      %v1295 = vrot.slane %v1150, 1
      %v1296 = vsel %vm1037, %v1294, %v1295
      %v1297 = vrot.slane %v1287, 1
      %v1298 = vrot.slane %v1151, 1
      %v1299 = vsel %vm1037, %v1297, %v1298
      %v1300 = vrot.slane %v1288, 1
      %v1301 = vrot.slane %v1152, 1
      %v1302 = vsel %vm1037, %v1300, %v1301
      %v1303 = vrot.slane %v1289, 1
      %v1304 = vrot.slane %v1153, 1
      %v1305 = vsel %vm1037, %v1303, %v1304
      %v1306 = vrot.slane %v1290, 1
      %v1307 = vrot.slane %v1154, 1
      %v1308 = vsel %vm1037, %v1306, %v1307
      %v1309 = vrot.slane %v1291, 1
      %v1310 = vrot.slane %v1155, 1
      %v1311 = vsel %vm1037, %v1309, %v1310
      %v1312 = vrot.slane %v1292, 1
      %v1313 = vrot.slane %v1156, 1
      %v1314 = vsel %vm1037, %v1312, %v1313
      %v1315 = vrot.slane %v1293, 1
      %v1316 = vrot.slane %v1157, 1
      %v1317 = vsel %vm1037, %v1315, %v1316
      %1318 = vrot.lane.b32.xlu0 %v1296, 20
      %v1319 = vpop.permute.xlu0 %1318
      %1320 = vrot.lane.b32.xlu0 %v1299, 20
      %v1321 = vpop.permute.xlu0 %1320
      %1322 = vrot.lane.b32.xlu0 %v1302, 20
      %v1323 = vpop.permute.xlu0 %1322
      %1324 = vrot.lane.b32.xlu0 %v1305, 20
      %v1325 = vpop.permute.xlu0 %1324
      %1326 = vrot.lane.b32.xlu0 %v1308, 20
      %v1327 = vpop.permute.xlu0 %1326
      %1328 = vrot.lane.b32.xlu0 %v1311, 20
      %v1329 = vpop.permute.xlu0 %1328
      %1330 = vrot.lane.b32.xlu0 %v1314, 20
      %v1331 = vpop.permute.xlu0 %1330
      %1332 = vrot.lane.b32.xlu0 %v1317, 20
      %v1333 = vpop.permute.xlu0 %1332
      %v1350 = vunpack.c.l.b16 %v804
      %v1351 = vunpack.c.l.b16 %v805
      %v1352 = vunpack.c.l.b16 %v806
      %v1353 = vunpack.c.l.b16 %v807
      %v1354 = vunpack.c.l.b16 %v808
      %v1355 = vunpack.c.l.b16 %v809
      %v1356 = vunpack.c.l.b16 %v810
      %v1357 = vunpack.c.l.b16 %v811
      %v1358 = vunpack.c.l.b16 %v812
      %v1359 = vunpack.c.l.b16 %v813
      %v1360 = vunpack.c.l.b16 %v814
      %v1361 = vunpack.c.l.b16 %v815
      %v1362 = vunpack.c.l.b16 %v816
      %v1363 = vunpack.c.l.b16 %v817
      %v1364 = vunpack.c.l.b16 %v818
      %v1365 = vunpack.c.l.b16 %v819
      %v1366 = vpack.c.b16 %v1351, %v1350
      %v1367 = vpack.c.b16 %v1353, %v1352
      %v1368 = vpack.c.b16 %v1355, %v1354
      %v1369 = vpack.c.b16 %v1357, %v1356
      %v1370 = vpack.c.b16 %v1359, %v1358
      %v1371 = vpack.c.b16 %v1361, %v1360
      %v1372 = vpack.c.b16 %v1363, %v1362
      %v1373 = vpack.c.b16 %v1365, %v1364
      %1374 = vrot.lane.b32.xlu0 %v1366, 24
      %v1375 = vpop.permute.xlu0 %1374
      %1376 = vrot.lane.b32.xlu0 %v1367, 24
      %v1377 = vpop.permute.xlu0 %1376
      %1378 = vrot.lane.b32.xlu0 %v1368, 24
      %v1379 = vpop.permute.xlu0 %1378
      %1380 = vrot.lane.b32.xlu0 %v1369, 24
      %v1381 = vpop.permute.xlu0 %1380
      %1382 = vrot.lane.b32.xlu0 %v1370, 24
      %v1383 = vpop.permute.xlu0 %1382
      %1384 = vrot.lane.b32.xlu0 %v1371, 24
      %v1385 = vpop.permute.xlu0 %1384
      %1386 = vrot.lane.b32.xlu0 %v1372, 24
      %v1387 = vpop.permute.xlu0 %1386
      %1388 = vrot.lane.b32.xlu0 %v1373, 24
      %v1389 = vpop.permute.xlu0 %1388
      %v1398 = vunpack.c.l.b16 %v820
      %v1399 = vunpack.c.l.b16 %v821
      %v1400 = vunpack.c.l.b16 %v822
      %v1401 = vunpack.c.l.b16 %v823
      %v1402 = vunpack.c.l.b16 %v824
      %v1403 = vunpack.c.l.b16 %v825
      %v1404 = vunpack.c.l.b16 %v826
      %v1405 = vunpack.c.l.b16 %v827
      %v1406 = vpack.c.b16 %v1398, %v1398
      %v1407 = vpack.c.b16 %v1399, %v1399
      %v1408 = vpack.c.b16 %v1400, %v1400
      %v1409 = vpack.c.b16 %v1401, %v1401
      %v1410 = vpack.c.b16 %v1402, %v1402
      %v1411 = vpack.c.b16 %v1403, %v1403
      %v1412 = vpack.c.b16 %v1404, %v1404
      %v1413 = vpack.c.b16 %v1405, %v1405
      %v1415 = vshrl.u32 %v1366, 16
      %v1417 = vshll.u32 %v1366, 16
      %v1419 = vrot.slane %v1417, 1
      %v1420 = vor.u32 %v1415, %v1419
      %v1422 = vshll.u32 %v1406, 16
      %v1424 = vrot.slane %v1422, 1
      %v1425 = vsel %vm900, %v1420, %v1424
      %v1427 = vshrl.u32 %v1367, 16
      %v1429 = vshll.u32 %v1367, 16
      %v1431 = vrot.slane %v1429, 1
      %v1432 = vor.u32 %v1427, %v1431
      %v1434 = vshll.u32 %v1407, 16
      %v1436 = vrot.slane %v1434, 1
      %v1437 = vsel %vm900, %v1432, %v1436
      %v1439 = vshrl.u32 %v1368, 16
      %v1441 = vshll.u32 %v1368, 16
      %v1443 = vrot.slane %v1441, 1
      %v1444 = vor.u32 %v1439, %v1443
      %v1446 = vshll.u32 %v1408, 16
      %v1448 = vrot.slane %v1446, 1
      %v1449 = vsel %vm900, %v1444, %v1448
      %v1451 = vshrl.u32 %v1369, 16
      %v1453 = vshll.u32 %v1369, 16
      %v1455 = vrot.slane %v1453, 1
      %v1456 = vor.u32 %v1451, %v1455
      %v1458 = vshll.u32 %v1409, 16
      %v1460 = vrot.slane %v1458, 1
      %v1461 = vsel %vm900, %v1456, %v1460
      %v1463 = vshrl.u32 %v1370, 16
      %v1465 = vshll.u32 %v1370, 16
      %v1467 = vrot.slane %v1465, 1
      %v1468 = vor.u32 %v1463, %v1467
      %v1470 = vshll.u32 %v1410, 16
      %v1472 = vrot.slane %v1470, 1
      %v1473 = vsel %vm900, %v1468, %v1472
      %v1475 = vshrl.u32 %v1371, 16
      %v1477 = vshll.u32 %v1371, 16
      %v1479 = vrot.slane %v1477, 1
      %v1480 = vor.u32 %v1475, %v1479
      %v1482 = vshll.u32 %v1411, 16
      %v1484 = vrot.slane %v1482, 1
      %v1485 = vsel %vm900, %v1480, %v1484
      %v1487 = vshrl.u32 %v1372, 16
      %v1489 = vshll.u32 %v1372, 16
      %v1491 = vrot.slane %v1489, 1
      %v1492 = vor.u32 %v1487, %v1491
      %v1494 = vshll.u32 %v1412, 16
      %v1496 = vrot.slane %v1494, 1
      %v1497 = vsel %vm900, %v1492, %v1496
      %v1499 = vshrl.u32 %v1373, 16
      %v1501 = vshll.u32 %v1373, 16
      %v1503 = vrot.slane %v1501, 1
      %v1504 = vor.u32 %v1499, %v1503
      %v1506 = vshll.u32 %v1413, 16
      %v1508 = vrot.slane %v1506, 1
      %v1509 = vsel %vm900, %v1504, %v1508
      %1510 = vrot.lane.b32.xlu0 %v1425, 28
      %v1511 = vpop.permute.xlu0 %1510
      %1512 = vrot.lane.b32.xlu0 %v1437, 28
      %v1513 = vpop.permute.xlu0 %1512
      %1514 = vrot.lane.b32.xlu0 %v1449, 28
      %v1515 = vpop.permute.xlu0 %1514
      %1516 = vrot.lane.b32.xlu0 %v1461, 28
      %v1517 = vpop.permute.xlu0 %1516
      %1518 = vrot.lane.b32.xlu0 %v1473, 28
      %v1519 = vpop.permute.xlu0 %1518
      %1520 = vrot.lane.b32.xlu0 %v1485, 28
      %v1521 = vpop.permute.xlu0 %1520
      %1522 = vrot.lane.b32.xlu0 %v1497, 28
      %v1523 = vpop.permute.xlu0 %1522
      %1524 = vrot.lane.b32.xlu0 %v1509, 28
      %v1525 = vpop.permute.xlu0 %1524
      %v1534 = vunpack.c.l.b16 %v828
      %v1535 = vunpack.c.l.b16 %v829
      %v1536 = vunpack.c.l.b16 %v830
      %v1537 = vunpack.c.l.b16 %v831
      %v1538 = vunpack.c.l.b16 %v832
      %v1539 = vunpack.c.l.b16 %v833
      %v1540 = vunpack.c.l.b16 %v834
      %v1541 = vunpack.c.l.b16 %v835
      %v1542 = vpack.c.b16 %v1351, %v1534
      %v1543 = vpack.c.b16 %v1353, %v1535
      %v1544 = vpack.c.b16 %v1355, %v1536
      %v1545 = vpack.c.b16 %v1357, %v1537
      %v1546 = vpack.c.b16 %v1359, %v1538
      %v1547 = vpack.c.b16 %v1361, %v1539
      %v1548 = vpack.c.b16 %v1363, %v1540
      %v1549 = vpack.c.b16 %v1365, %v1541
      %v1550 = vrot.slane %v1542, 1
      %v1551 = vrot.slane %v1406, 1
      %v1552 = vsel %vm1037, %v1550, %v1551
      %v1553 = vrot.slane %v1543, 1
      %v1554 = vrot.slane %v1407, 1
      %v1555 = vsel %vm1037, %v1553, %v1554
      %v1556 = vrot.slane %v1544, 1
      %v1557 = vrot.slane %v1408, 1
      %v1558 = vsel %vm1037, %v1556, %v1557
      %v1559 = vrot.slane %v1545, 1
      %v1560 = vrot.slane %v1409, 1
      %v1561 = vsel %vm1037, %v1559, %v1560
      %v1562 = vrot.slane %v1546, 1
      %v1563 = vrot.slane %v1410, 1
      %v1564 = vsel %vm1037, %v1562, %v1563
      %v1565 = vrot.slane %v1547, 1
      %v1566 = vrot.slane %v1411, 1
      %v1567 = vsel %vm1037, %v1565, %v1566
      %v1568 = vrot.slane %v1548, 1
      %v1569 = vrot.slane %v1412, 1
      %v1570 = vsel %vm1037, %v1568, %v1569
      %v1571 = vrot.slane %v1549, 1
      %v1572 = vrot.slane %v1413, 1
      %v1573 = vsel %vm1037, %v1571, %v1572
      %1574 = vrot.lane.b32.xlu0 %v1552, 32
      %v1575 = vpop.permute.xlu0 %1574
      %1576 = vrot.lane.b32.xlu0 %v1555, 32
      %v1577 = vpop.permute.xlu0 %1576
      %1578 = vrot.lane.b32.xlu0 %v1558, 32
      %v1579 = vpop.permute.xlu0 %1578
      %1580 = vrot.lane.b32.xlu0 %v1561, 32
      %v1581 = vpop.permute.xlu0 %1580
      %1582 = vrot.lane.b32.xlu0 %v1564, 32
      %v1583 = vpop.permute.xlu0 %1582
      %1584 = vrot.lane.b32.xlu0 %v1567, 32
      %v1585 = vpop.permute.xlu0 %1584
      %1586 = vrot.lane.b32.xlu0 %v1570, 32
      %v1587 = vpop.permute.xlu0 %1586
      %1588 = vrot.lane.b32.xlu0 %v1573, 32
      %v1589 = vpop.permute.xlu0 %1588
      %vm1590 = vcmask 31744
      %v1592 = vsel %vm1590, %v868, %v998
      %v1594 = vsel %vm1590, %v869, %v1000
      %v1596 = vsel %vm1590, %v870, %v1002
      %v1598 = vsel %vm1590, %v871, %v1004
      %v1600 = vsel %vm1590, %v872, %v1006
      %v1602 = vsel %vm1590, %v873, %v1008
      %v1604 = vsel %vm1590, %v874, %v1010
      %v1606 = vsel %vm1590, %v875, %v1012
      %vm1607 = vcmask 64512
      %v1609 = vsel %vm1607, %v1592, %v1063
      %v1611 = vsel %vm1607, %v1594, %v1065
      %v1613 = vsel %vm1607, %v1596, %v1067
      %v1615 = vsel %vm1607, %v1598, %v1069
      %v1617 = vsel %vm1607, %v1600, %v1071
      %v1619 = vsel %vm1607, %v1602, %v1073
      %v1621 = vsel %vm1607, %v1604, %v1075
      %v1623 = vsel %vm1607, %v1606, %v1077
      %vm1624 = vcmask 97280
      %v1626 = vsel %vm1624, %v1609, %v1119
      %v1628 = vsel %vm1624, %v1611, %v1121
      %v1630 = vsel %vm1624, %v1613, %v1123
      %v1632 = vsel %vm1624, %v1615, %v1125
      %v1634 = vsel %vm1624, %v1617, %v1127
      %v1636 = vsel %vm1624, %v1619, %v1129
      %v1638 = vsel %vm1624, %v1621, %v1131
      %v1640 = vsel %vm1624, %v1623, %v1133
      %vm1641 = vcmask 130048
      %v1643 = vsel %vm1641, %v1626, %v1255
      %v1645 = vsel %vm1641, %v1628, %v1257
      %v1647 = vsel %vm1641, %v1630, %v1259
      %v1649 = vsel %vm1641, %v1632, %v1261
      %v1651 = vsel %vm1641, %v1634, %v1263
      %v1653 = vsel %vm1641, %v1636, %v1265
      %v1655 = vsel %vm1641, %v1638, %v1267
      %v1657 = vsel %vm1641, %v1640, %v1269
      %vm1658 = vcmask 162816
      %v1660 = vsel %vm1658, %v1643, %v1319
      %v1662 = vsel %vm1658, %v1645, %v1321
      %v1664 = vsel %vm1658, %v1647, %v1323
      %v1666 = vsel %vm1658, %v1649, %v1325
      %v1668 = vsel %vm1658, %v1651, %v1327
      %v1670 = vsel %vm1658, %v1653, %v1329
      %v1672 = vsel %vm1658, %v1655, %v1331
      %v1674 = vsel %vm1658, %v1657, %v1333
      %vm1675 = vcmask 195584
      %v1677 = vsel %vm1675, %v1660, %v1375
      %v1679 = vsel %vm1675, %v1662, %v1377
      %v1681 = vsel %vm1675, %v1664, %v1379
      %v1683 = vsel %vm1675, %v1666, %v1381
      %v1685 = vsel %vm1675, %v1668, %v1383
      %v1687 = vsel %vm1675, %v1670, %v1385
      %v1689 = vsel %vm1675, %v1672, %v1387
      %v1691 = vsel %vm1675, %v1674, %v1389
      %vm1692 = vcmask 228352
      %v1694 = vsel %vm1692, %v1677, %v1511
      %v1696 = vsel %vm1692, %v1679, %v1513
      %v1698 = vsel %vm1692, %v1681, %v1515
      %v1700 = vsel %vm1692, %v1683, %v1517
      %v1702 = vsel %vm1692, %v1685, %v1519
      %v1704 = vsel %vm1692, %v1687, %v1521
      %v1706 = vsel %vm1692, %v1689, %v1523
      %v1708 = vsel %vm1692, %v1691, %v1525
      %vm1709 = vcmask 261120
      %v1711 = vsel %vm1709, %v1694, %v1575
      %v1713 = vsel %vm1709, %v1696, %v1577
      %v1715 = vsel %vm1709, %v1698, %v1579
      %v1717 = vsel %vm1709, %v1700, %v1581
      %v1719 = vsel %vm1709, %v1702, %v1583
      %v1721 = vsel %vm1709, %v1704, %v1585
      %v1723 = vsel %vm1709, %v1706, %v1587
      %v1725 = vsel %vm1709, %v1708, %v1589
      %v1726 = vld [vmem:[%s1] sm:$0xf]
      %v1727 = vld [vmem:[%s1 + $0x4] sm:$0xf]
      %v1728 = vld [vmem:[%s1 + $0x8] sm:$0xf]
      %v1729 = vld [vmem:[%s1 + $0xc] sm:$0xf]
      %v1730 = vld [vmem:[%s1 + $0x10] sm:$0x3]
      %v1731 = vld [vmem:[%s2] sm:$0x1]
      %v1733 = vlaneseq
      %v1734 = vshrl.u32 %v1733, 7
      %v1735 = vsub.s32 0, %v1734
      %v1736 = vrot.slane %v1731, %v1735
      %v1743 = vunpack.c.l.b16 %v1726
      %v1744 = vunpack.c.l.b16 %v1727
      %v1745 = vunpack.c.l.b16 %v1728
      %v1746 = vunpack.c.l.b16 %v1729
      %v1747 = vunpack.c.l.b16 %v1730
      %v1748 = vpack.c.b16 %v1744, %v1743
      %v1749 = vpack.c.b16 %v1746, %v1745
      %v1750 = vpack.c.b16 %v1747, %v1747
      %vm1753 = vcmask 293888
      %v1754 = vsel %vm1753, %v1711, 0
      %v1756 = vsel %vm1753, %v1713, 0
      %v1758 = vsel %vm1753, %v1715, 0
      %v1760 = vsel %vm1753, %v1717, 0
      %v1762 = vsel %vm1753, %v1719, 0
      %v1764 = vsel %vm1753, %v1721, 0
      %v1766 = vsel %vm1753, %v1723, 0
      %v1768 = vsel %vm1753, %v1725, 0
      %vm1770 = vcmask 1041408
      %v1772 = vsel %vm1770, %v1750, 0
      %1774 = vmatprep.subr.bf16.mxu0 0
      %1775 = vmatpush1.bf16.msra.mxu0 %v1748
      %1776 = vmatprep.subr.bf16.mxu0 0
      %1777 = vmatpush1.bf16.msra.mxu0 %v1749
      %1778 = vmatprep.subr.bf16.mxu0 0
      %1779 = vmatpush1.bf16.msra.mxu0 %v1772
      %1780 = vmatprep.subr.bf16.mxu0 0
      %1781 = vmatpush1.bf16.msra.mxu0 0
      %1782 = vmatprep.subr.bf16.mxu0 0
      %1783 = vmatpush1.bf16.msra.mxu0 0
      %1784 = vmatprep.subr.bf16.mxu0 0
      %1785 = vmatpush1.bf16.msra.mxu0 0
      %1786 = vmatprep.subr.bf16.mxu0 0
      %1787 = vmatpush1.bf16.msra.mxu0 0
      %1788 = vmatprep.subr.bf16.mxu0 0
      %1789 = vmatpush1.bf16.msra.mxu0 0
      %1790 = vmatprep.subr.bf16.mxu0 0
      %1791 = vmatpush1.bf16.msra.mxu0 0
      %1792 = vmatprep.subr.bf16.mxu0 0
      %1793 = vmatpush1.bf16.msra.mxu0 0
      %1794 = vmatprep.subr.bf16.mxu0 0
      %1795 = vmatpush1.bf16.msra.mxu0 0
      %1796 = vmatprep.subr.bf16.mxu0 0
      %1797 = vmatpush1.bf16.msra.mxu0 0
      %1798 = vmatprep.subr.bf16.mxu0 0
      %1799 = vmatpush1.bf16.msra.mxu0 0
      %1800 = vmatprep.subr.bf16.mxu0 0
      %1801 = vmatpush1.bf16.msra.mxu0 0
      %1802 = vmatprep.subr.bf16.mxu0 0
      %1803 = vmatpush1.bf16.msra.mxu0 0
      %1804 = vmatprep.subr.bf16.mxu0 0
      %1805 = vmatpush1.bf16.msra.mxu0 0
      %1806 = vmatprep.mubr.bf16.mxu0 0
      %1807 = vmatmul.mubr.bf16.gmra.mrb[0].mxu0 %v1754
      %v1808 = vpop.f32.mrb[0].mxu0
      %v1809 = vadd.f32 %v1736, %v1808
      %v1810 = vpop.f32.mrb[0].mxu0
      %v1811 = vpop.f32.mrb[0].mxu0
      %v1812 = vadd.f32 %v1736, %v1811
      %v1813 = vpop.f32.mrb[0].mxu0
      %1814 = vmatprep.mubr.bf16.mxu0 0
      %1815 = vmatmul.mubr.bf16.gmra.mrb[0].mxu0 %v1756
      %v1816 = vpop.f32.mrb[0].mxu0
      %v1817 = vadd.f32 %v1736, %v1816
      %v1818 = vpop.f32.mrb[0].mxu0
      %v1819 = vpop.f32.mrb[0].mxu0
      %v1820 = vadd.f32 %v1736, %v1819
      %v1821 = vpop.f32.mrb[0].mxu0
      %1822 = vmatprep.mubr.bf16.mxu0 0
      %1823 = vmatmul.mubr.bf16.gmra.mrb[0].mxu0 %v1758
      %v1824 = vpop.f32.mrb[0].mxu0
      %v1825 = vadd.f32 %v1736, %v1824
      %v1826 = vpop.f32.mrb[0].mxu0
      %v1827 = vpop.f32.mrb[0].mxu0
      %v1828 = vadd.f32 %v1736, %v1827
      %v1829 = vpop.f32.mrb[0].mxu0
      %1830 = vmatprep.mubr.bf16.mxu0 0
      %1831 = vmatmul.mubr.bf16.gmra.mrb[0].mxu0 %v1760
      %v1832 = vpop.f32.mrb[0].mxu0
      %v1833 = vadd.f32 %v1736, %v1832
      %v1834 = vpop.f32.mrb[0].mxu0
      %v1835 = vpop.f32.mrb[0].mxu0
      %v1836 = vadd.f32 %v1736, %v1835
      %v1837 = vpop.f32.mrb[0].mxu0
      %1838 = vmatprep.mubr.bf16.mxu0 0
      %1839 = vmatmul.mubr.bf16.gmra.mrb[0].mxu0 %v1762
      %v1840 = vpop.f32.mrb[0].mxu0
      %v1841 = vadd.f32 %v1736, %v1840
      %v1842 = vpop.f32.mrb[0].mxu0
      %v1843 = vpop.f32.mrb[0].mxu0
      %v1844 = vadd.f32 %v1736, %v1843
      %v1845 = vpop.f32.mrb[0].mxu0
      %1846 = vmatprep.mubr.bf16.mxu0 0
      %1847 = vmatmul.mubr.bf16.gmra.mrb[0].mxu0 %v1764
      %v1848 = vpop.f32.mrb[0].mxu0
      %v1849 = vadd.f32 %v1736, %v1848
      %v1850 = vpop.f32.mrb[0].mxu0
      %v1851 = vpop.f32.mrb[0].mxu0
      %v1852 = vadd.f32 %v1736, %v1851
      %v1853 = vpop.f32.mrb[0].mxu0
      %1854 = vmatprep.mubr.bf16.mxu0 0
      %1855 = vmatmul.mubr.bf16.gmra.mrb[0].mxu0 %v1766
      %v1856 = vpop.f32.mrb[0].mxu0
      %v1857 = vadd.f32 %v1736, %v1856
      %v1858 = vpop.f32.mrb[0].mxu0
      %v1859 = vpop.f32.mrb[0].mxu0
      %v1860 = vadd.f32 %v1736, %v1859
      %v1861 = vpop.f32.mrb[0].mxu0
      %1862 = vmatprep.mubr.bf16.mxu0 0
      %1863 = vmatmul.mubr.bf16.gmra.mrb[0].mxu0 %v1768
      %v1864 = vpop.f32.mrb[0].mxu0
      %v1865 = vadd.f32 %v1736, %v1864
      %v1866 = vpop.f32.mrb[0].mxu0
      %v1867 = vpop.f32.mrb[0].mxu0
      %v1868 = vadd.f32 %v1736, %v1867
      %v1869 = vpop.f32.mrb[0].mxu0
      %1870 = vdwg.mxu0
      %v1871 = vmax.f32 %v1809, 0.0
      %v1872 = vmax.f32 %v1812, 0.0
      %v1873 = vmax.f32 %v1817, 0.0
      %v1874 = vmax.f32 %v1820, 0.0
      %v1875 = vmax.f32 %v1825, 0.0
      %v1876 = vmax.f32 %v1828, 0.0
      %v1877 = vmax.f32 %v1833, 0.0
      %v1878 = vmax.f32 %v1836, 0.0
      %v1879 = vmax.f32 %v1841, 0.0
      %v1880 = vmax.f32 %v1844, 0.0
      %v1881 = vmax.f32 %v1849, 0.0
      %v1882 = vmax.f32 %v1852, 0.0
      %v1883 = vmax.f32 %v1857, 0.0
      %v1884 = vmax.f32 %v1860, 0.0
      %v1885 = vmax.f32 %v1865, 0.0
      %v1886 = vmax.f32 %v1868, 0.0
      %v1903 = vcombine.high %v1871, %v1871
      %v1905 = vunpack.c.l.s4 1983009808
      %v1906 = vunpack.c.0.s8 %v1905
      %v1907 = vlaneseq
      %v1908 = vshrl.u32 %v1907, 7
      %v1909 = vsub.s32 %v1906, %v1908
      %v1910 = vrot.slane %v1871, %v1909
      %v1912 = vunpack.c.l.s4 1983009808
      %v1913 = vunpack.c.0.s8 %v1912
      %v1914 = vlaneseq
      %v1915 = vshrl.u32 %v1914, 7
      %v1916 = vsub.s32 %v1913, %v1915
      %v1917 = vrot.slane %v1903, %v1916
      %v1918 = vcombine.high %v1910, %v1910
      %v1919 = vcombine.high %v1917, %v1917
      %v1920 = vcombine.high %v1872, %v1872
      %v1922 = vunpack.c.l.s4 1983009808
      %v1923 = vunpack.c.0.s8 %v1922
      %v1924 = vlaneseq
      %v1925 = vshrl.u32 %v1924, 7
      %v1926 = vsub.s32 %v1923, %v1925
      %v1927 = vrot.slane %v1872, %v1926
      %v1929 = vunpack.c.l.s4 1983009808
      %v1930 = vunpack.c.0.s8 %v1929
      %v1931 = vlaneseq
      %v1932 = vshrl.u32 %v1931, 7
      %v1933 = vsub.s32 %v1930, %v1932
      %v1934 = vrot.slane %v1920, %v1933
      %v1935 = vcombine.high %v1927, %v1927
      %v1936 = vcombine.high %v1934, %v1934
      %v1937 = vcombine.high %v1873, %v1873
      %v1939 = vunpack.c.l.s4 1983009808
      %v1940 = vunpack.c.0.s8 %v1939
      %v1941 = vlaneseq
      %v1942 = vshrl.u32 %v1941, 7
      %v1943 = vsub.s32 %v1940, %v1942
      %v1944 = vrot.slane %v1873, %v1943
      %v1946 = vunpack.c.l.s4 1983009808
      %v1947 = vunpack.c.0.s8 %v1946
      %v1948 = vlaneseq
      %v1949 = vshrl.u32 %v1948, 7
      %v1950 = vsub.s32 %v1947, %v1949
      %v1951 = vrot.slane %v1937, %v1950
      %v1952 = vcombine.high %v1944, %v1944
      %v1953 = vcombine.high %v1951, %v1951
      %v1954 = vcombine.high %v1874, %v1874
      %v1956 = vunpack.c.l.s4 1983009808
      %v1957 = vunpack.c.0.s8 %v1956
      %v1958 = vlaneseq
      %v1959 = vshrl.u32 %v1958, 7
      %v1960 = vsub.s32 %v1957, %v1959
      %v1961 = vrot.slane %v1874, %v1960
      %v1963 = vunpack.c.l.s4 1983009808
      %v1964 = vunpack.c.0.s8 %v1963
      %v1965 = vlaneseq
      %v1966 = vshrl.u32 %v1965, 7
      %v1967 = vsub.s32 %v1964, %v1966
      %v1968 = vrot.slane %v1954, %v1967
      %v1969 = vcombine.high %v1961, %v1961
      %v1970 = vcombine.high %v1968, %v1968
      %v1971 = vcombine.high %v1875, %v1875
      %v1973 = vunpack.c.l.s4 1983009808
      %v1974 = vunpack.c.0.s8 %v1973
      %v1975 = vlaneseq
      %v1976 = vshrl.u32 %v1975, 7
      %v1977 = vsub.s32 %v1974, %v1976
      %v1978 = vrot.slane %v1875, %v1977
      %v1980 = vunpack.c.l.s4 1983009808
      %v1981 = vunpack.c.0.s8 %v1980
      %v1982 = vlaneseq
      %v1983 = vshrl.u32 %v1982, 7
      %v1984 = vsub.s32 %v1981, %v1983
      %v1985 = vrot.slane %v1971, %v1984
      %v1986 = vcombine.high %v1978, %v1978
      %v1987 = vcombine.high %v1985, %v1985
      %v1988 = vcombine.high %v1876, %v1876
      %v1990 = vunpack.c.l.s4 1983009808
      %v1991 = vunpack.c.0.s8 %v1990
      %v1992 = vlaneseq
      %v1993 = vshrl.u32 %v1992, 7
      %v1994 = vsub.s32 %v1991, %v1993
      %v1995 = vrot.slane %v1876, %v1994
      %v1997 = vunpack.c.l.s4 1983009808
      %v1998 = vunpack.c.0.s8 %v1997
      %v1999 = vlaneseq
      %v2000 = vshrl.u32 %v1999, 7
      %v2001 = vsub.s32 %v1998, %v2000
      %v2002 = vrot.slane %v1988, %v2001
      %v2003 = vcombine.high %v1995, %v1995
      %v2004 = vcombine.high %v2002, %v2002
      %v2005 = vcombine.high %v1877, %v1877
      %v2007 = vunpack.c.l.s4 1983009808
      %v2008 = vunpack.c.0.s8 %v2007
      %v2009 = vlaneseq
      %v2010 = vshrl.u32 %v2009, 7
      %v2011 = vsub.s32 %v2008, %v2010
      %v2012 = vrot.slane %v1877, %v2011
      %v2014 = vunpack.c.l.s4 1983009808
      %v2015 = vunpack.c.0.s8 %v2014
      %v2016 = vlaneseq
      %v2017 = vshrl.u32 %v2016, 7
      %v2018 = vsub.s32 %v2015, %v2017
      %v2019 = vrot.slane %v2005, %v2018
      %v2020 = vcombine.high %v2012, %v2012
      %v2021 = vcombine.high %v2019, %v2019
      %v2022 = vcombine.high %v1878, %v1878
      %v2024 = vunpack.c.l.s4 1983009808
      %v2025 = vunpack.c.0.s8 %v2024
      %v2026 = vlaneseq
      %v2027 = vshrl.u32 %v2026, 7
      %v2028 = vsub.s32 %v2025, %v2027
      %v2029 = vrot.slane %v1878, %v2028
      %v2031 = vunpack.c.l.s4 1983009808
      %v2032 = vunpack.c.0.s8 %v2031
      %v2033 = vlaneseq
      %v2034 = vshrl.u32 %v2033, 7
      %v2035 = vsub.s32 %v2032, %v2034
      %v2036 = vrot.slane %v2022, %v2035
      %v2037 = vcombine.high %v2029, %v2029
      %v2038 = vcombine.high %v2036, %v2036
      %v2039 = vcombine.high %v1879, %v1879
      %v2041 = vunpack.c.l.s4 1983009808
      %v2042 = vunpack.c.0.s8 %v2041
      %v2043 = vlaneseq
      %v2044 = vshrl.u32 %v2043, 7
      %v2045 = vsub.s32 %v2042, %v2044
      %v2046 = vrot.slane %v1879, %v2045
      %v2048 = vunpack.c.l.s4 1983009808
      %v2049 = vunpack.c.0.s8 %v2048
      %v2050 = vlaneseq
      %v2051 = vshrl.u32 %v2050, 7
      %v2052 = vsub.s32 %v2049, %v2051
      %v2053 = vrot.slane %v2039, %v2052
      %v2054 = vcombine.high %v2046, %v2046
      %v2055 = vcombine.high %v2053, %v2053
      %v2056 = vcombine.high %v1880, %v1880
      %v2058 = vunpack.c.l.s4 1983009808
      %v2059 = vunpack.c.0.s8 %v2058
      %v2060 = vlaneseq
      %v2061 = vshrl.u32 %v2060, 7
      %v2062 = vsub.s32 %v2059, %v2061
      %v2063 = vrot.slane %v1880, %v2062
      %v2065 = vunpack.c.l.s4 1983009808
      %v2066 = vunpack.c.0.s8 %v2065
      %v2067 = vlaneseq
      %v2068 = vshrl.u32 %v2067, 7
      %v2069 = vsub.s32 %v2066, %v2068
      %v2070 = vrot.slane %v2056, %v2069
      %v2071 = vcombine.high %v2063, %v2063
      %v2072 = vcombine.high %v2070, %v2070
      %v2073 = vcombine.high %v1881, %v1881
      %v2075 = vunpack.c.l.s4 1983009808
      %v2076 = vunpack.c.0.s8 %v2075
      %v2077 = vlaneseq
      %v2078 = vshrl.u32 %v2077, 7
      %v2079 = vsub.s32 %v2076, %v2078
      %v2080 = vrot.slane %v1881, %v2079
      %v2082 = vunpack.c.l.s4 1983009808
      %v2083 = vunpack.c.0.s8 %v2082
      %v2084 = vlaneseq
      %v2085 = vshrl.u32 %v2084, 7
      %v2086 = vsub.s32 %v2083, %v2085
      %v2087 = vrot.slane %v2073, %v2086
      %v2088 = vcombine.high %v2080, %v2080
      %v2089 = vcombine.high %v2087, %v2087
      %v2090 = vcombine.high %v1882, %v1882
      %v2092 = vunpack.c.l.s4 1983009808
      %v2093 = vunpack.c.0.s8 %v2092
      %v2094 = vlaneseq
      %v2095 = vshrl.u32 %v2094, 7
      %v2096 = vsub.s32 %v2093, %v2095
      %v2097 = vrot.slane %v1882, %v2096
      %v2099 = vunpack.c.l.s4 1983009808
      %v2100 = vunpack.c.0.s8 %v2099
      %v2101 = vlaneseq
      %v2102 = vshrl.u32 %v2101, 7
      %v2103 = vsub.s32 %v2100, %v2102
      %v2104 = vrot.slane %v2090, %v2103
      %v2105 = vcombine.high %v2097, %v2097
      %v2106 = vcombine.high %v2104, %v2104
      %v2107 = vcombine.high %v1883, %v1883
      %v2109 = vunpack.c.l.s4 1983009808
      %v2110 = vunpack.c.0.s8 %v2109
      %v2111 = vlaneseq
      %v2112 = vshrl.u32 %v2111, 7
      %v2113 = vsub.s32 %v2110, %v2112
      %v2114 = vrot.slane %v1883, %v2113
      %v2116 = vunpack.c.l.s4 1983009808
      %v2117 = vunpack.c.0.s8 %v2116
      %v2118 = vlaneseq
      %v2119 = vshrl.u32 %v2118, 7
      %v2120 = vsub.s32 %v2117, %v2119
      %v2121 = vrot.slane %v2107, %v2120
      %v2122 = vcombine.high %v2114, %v2114
      %v2123 = vcombine.high %v2121, %v2121
      %v2124 = vcombine.high %v1884, %v1884
      %v2126 = vunpack.c.l.s4 1983009808
      %v2127 = vunpack.c.0.s8 %v2126
      %v2128 = vlaneseq
      %v2129 = vshrl.u32 %v2128, 7
      %v2130 = vsub.s32 %v2127, %v2129
      %v2131 = vrot.slane %v1884, %v2130
      %v2133 = vunpack.c.l.s4 1983009808
      %v2134 = vunpack.c.0.s8 %v2133
      %v2135 = vlaneseq
      %v2136 = vshrl.u32 %v2135, 7
      %v2137 = vsub.s32 %v2134, %v2136
      %v2138 = vrot.slane %v2124, %v2137
      %v2139 = vcombine.high %v2131, %v2131
      %v2140 = vcombine.high %v2138, %v2138
      %v2141 = vcombine.high %v1885, %v1885
      %v2143 = vunpack.c.l.s4 1983009808
      %v2144 = vunpack.c.0.s8 %v2143
      %v2145 = vlaneseq
      %v2146 = vshrl.u32 %v2145, 7
      %v2147 = vsub.s32 %v2144, %v2146
      %v2148 = vrot.slane %v1885, %v2147
      %v2150 = vunpack.c.l.s4 1983009808
      %v2151 = vunpack.c.0.s8 %v2150
      %v2152 = vlaneseq
      %v2153 = vshrl.u32 %v2152, 7
      %v2154 = vsub.s32 %v2151, %v2153
      %v2155 = vrot.slane %v2141, %v2154
      %v2156 = vcombine.high %v2148, %v2148
      %v2157 = vcombine.high %v2155, %v2155
      %v2158 = vcombine.high %v1886, %v1886
      %v2160 = vunpack.c.l.s4 1983009808
      %v2161 = vunpack.c.0.s8 %v2160
      %v2162 = vlaneseq
      %v2163 = vshrl.u32 %v2162, 7
      %v2164 = vsub.s32 %v2161, %v2163
      %v2165 = vrot.slane %v1886, %v2164
      %v2167 = vunpack.c.l.s4 1983009808
      %v2168 = vunpack.c.0.s8 %v2167
      %v2169 = vlaneseq
      %v2170 = vshrl.u32 %v2169, 7
      %v2171 = vsub.s32 %v2168, %v2170
      %v2172 = vrot.slane %v2158, %v2171
      %v2173 = vcombine.high %v2165, %v2165
      %v2174 = vcombine.high %v2172, %v2172
      %vm2239 = vcmask 254976
      %v2240 = vsel %vm2239, %v1910, -inf
      %v2241 = vrot.slane %v2240, 4
      %v2242 = vmax.f32 %v2240, %v2241
      %v2243 = vrot.slane %v2242, 2
      %v2244 = vmax.f32 %v2242, %v2243
      %v2245 = vrot.slane %v2244, 1
      %v2246 = vmax.f32 %v2244, %v2245
      %v2247 = vsel %vm2239, %v1918, -inf
      %v2248 = vrot.slane %v2247, 4
      %v2249 = vmax.f32 %v2247, %v2248
      %v2250 = vrot.slane %v2249, 2
      %v2251 = vmax.f32 %v2249, %v2250
      %v2252 = vrot.slane %v2251, 1
      %v2253 = vmax.f32 %v2251, %v2252
      %v2254 = vsel %vm2239, %v1917, -inf
      %v2255 = vrot.slane %v2254, 4
      %v2256 = vmax.f32 %v2254, %v2255
      %v2257 = vrot.slane %v2256, 2
      %v2258 = vmax.f32 %v2256, %v2257
      %v2259 = vrot.slane %v2258, 1
      %v2260 = vmax.f32 %v2258, %v2259
      %v2261 = vsel %vm2239, %v1919, -inf
      %v2262 = vrot.slane %v2261, 4
      %v2263 = vmax.f32 %v2261, %v2262
      %v2264 = vrot.slane %v2263, 2
      %v2265 = vmax.f32 %v2263, %v2264
      %v2266 = vrot.slane %v2265, 1
      %v2267 = vmax.f32 %v2265, %v2266
      %v2268 = vsel %vm2239, %v1927, -inf
      %v2269 = vrot.slane %v2268, 4
      %v2270 = vmax.f32 %v2268, %v2269
      %v2271 = vrot.slane %v2270, 2
      %v2272 = vmax.f32 %v2270, %v2271
      %v2273 = vrot.slane %v2272, 1
      %v2274 = vmax.f32 %v2272, %v2273
      %v2275 = vsel %vm2239, %v1935, -inf
      %v2276 = vrot.slane %v2275, 4
      %v2277 = vmax.f32 %v2275, %v2276
      %v2278 = vrot.slane %v2277, 2
      %v2279 = vmax.f32 %v2277, %v2278
      %v2280 = vrot.slane %v2279, 1
      %v2281 = vmax.f32 %v2279, %v2280
      %v2282 = vsel %vm2239, %v1934, -inf
      %v2283 = vrot.slane %v2282, 4
      %v2284 = vmax.f32 %v2282, %v2283
      %v2285 = vrot.slane %v2284, 2
      %v2286 = vmax.f32 %v2284, %v2285
      %v2287 = vrot.slane %v2286, 1
      %v2288 = vmax.f32 %v2286, %v2287
      %v2289 = vsel %vm2239, %v1936, -inf
      %v2290 = vrot.slane %v2289, 4
      %v2291 = vmax.f32 %v2289, %v2290
      %v2292 = vrot.slane %v2291, 2
      %v2293 = vmax.f32 %v2291, %v2292
      %v2294 = vrot.slane %v2293, 1
      %v2295 = vmax.f32 %v2293, %v2294
      %v2296 = vsel %vm2239, %v1944, -inf
      %v2297 = vrot.slane %v2296, 4
      %v2298 = vmax.f32 %v2296, %v2297
      %v2299 = vrot.slane %v2298, 2
      %v2300 = vmax.f32 %v2298, %v2299
      %v2301 = vrot.slane %v2300, 1
      %v2302 = vmax.f32 %v2300, %v2301
      %v2303 = vsel %vm2239, %v1952, -inf
      %v2304 = vrot.slane %v2303, 4
      %v2305 = vmax.f32 %v2303, %v2304
      %v2306 = vrot.slane %v2305, 2
      %v2307 = vmax.f32 %v2305, %v2306
      %v2308 = vrot.slane %v2307, 1
      %v2309 = vmax.f32 %v2307, %v2308
      %v2310 = vsel %vm2239, %v1951, -inf
      %v2311 = vrot.slane %v2310, 4
      %v2312 = vmax.f32 %v2310, %v2311
      %v2313 = vrot.slane %v2312, 2
      %v2314 = vmax.f32 %v2312, %v2313
      %v2315 = vrot.slane %v2314, 1
      %v2316 = vmax.f32 %v2314, %v2315
      %v2317 = vsel %vm2239, %v1953, -inf
      %v2318 = vrot.slane %v2317, 4
      %v2319 = vmax.f32 %v2317, %v2318
      %v2320 = vrot.slane %v2319, 2
      %v2321 = vmax.f32 %v2319, %v2320
      %v2322 = vrot.slane %v2321, 1
      %v2323 = vmax.f32 %v2321, %v2322
      %v2324 = vsel %vm2239, %v1961, -inf
      %v2325 = vrot.slane %v2324, 4
      %v2326 = vmax.f32 %v2324, %v2325
      %v2327 = vrot.slane %v2326, 2
      %v2328 = vmax.f32 %v2326, %v2327
      %v2329 = vrot.slane %v2328, 1
      %v2330 = vmax.f32 %v2328, %v2329
      %v2331 = vsel %vm2239, %v1969, -inf
      %v2332 = vrot.slane %v2331, 4
      %v2333 = vmax.f32 %v2331, %v2332
      %v2334 = vrot.slane %v2333, 2
      %v2335 = vmax.f32 %v2333, %v2334
      %v2336 = vrot.slane %v2335, 1
      %v2337 = vmax.f32 %v2335, %v2336
      %v2338 = vsel %vm2239, %v1968, -inf
      %v2339 = vrot.slane %v2338, 4
      %v2340 = vmax.f32 %v2338, %v2339
      %v2341 = vrot.slane %v2340, 2
      %v2342 = vmax.f32 %v2340, %v2341
      %v2343 = vrot.slane %v2342, 1
      %v2344 = vmax.f32 %v2342, %v2343
      %v2345 = vsel %vm2239, %v1970, -inf
      %v2346 = vrot.slane %v2345, 4
      %v2347 = vmax.f32 %v2345, %v2346
      %v2348 = vrot.slane %v2347, 2
      %v2349 = vmax.f32 %v2347, %v2348
      %v2350 = vrot.slane %v2349, 1
      %v2351 = vmax.f32 %v2349, %v2350
      %v2352 = vsel %vm2239, %v1978, -inf
      %v2353 = vrot.slane %v2352, 4
      %v2354 = vmax.f32 %v2352, %v2353
      %v2355 = vrot.slane %v2354, 2
      %v2356 = vmax.f32 %v2354, %v2355
      %v2357 = vrot.slane %v2356, 1
      %v2358 = vmax.f32 %v2356, %v2357
      %v2359 = vsel %vm2239, %v1986, -inf
      %v2360 = vrot.slane %v2359, 4
      %v2361 = vmax.f32 %v2359, %v2360
      %v2362 = vrot.slane %v2361, 2
      %v2363 = vmax.f32 %v2361, %v2362
      %v2364 = vrot.slane %v2363, 1
      %v2365 = vmax.f32 %v2363, %v2364
      %v2366 = vsel %vm2239, %v1985, -inf
      %v2367 = vrot.slane %v2366, 4
      %v2368 = vmax.f32 %v2366, %v2367
      %v2369 = vrot.slane %v2368, 2
      %v2370 = vmax.f32 %v2368, %v2369
      %v2371 = vrot.slane %v2370, 1
      %v2372 = vmax.f32 %v2370, %v2371
      %v2373 = vsel %vm2239, %v1987, -inf
      %v2374 = vrot.slane %v2373, 4
      %v2375 = vmax.f32 %v2373, %v2374
      %v2376 = vrot.slane %v2375, 2
      %v2377 = vmax.f32 %v2375, %v2376
      %v2378 = vrot.slane %v2377, 1
      %v2379 = vmax.f32 %v2377, %v2378
      %v2380 = vsel %vm2239, %v1995, -inf
      %v2381 = vrot.slane %v2380, 4
      %v2382 = vmax.f32 %v2380, %v2381
      %v2383 = vrot.slane %v2382, 2
      %v2384 = vmax.f32 %v2382, %v2383
      %v2385 = vrot.slane %v2384, 1
      %v2386 = vmax.f32 %v2384, %v2385
      %v2387 = vsel %vm2239, %v2003, -inf
      %v2388 = vrot.slane %v2387, 4
      %v2389 = vmax.f32 %v2387, %v2388
      %v2390 = vrot.slane %v2389, 2
      %v2391 = vmax.f32 %v2389, %v2390
      %v2392 = vrot.slane %v2391, 1
      %v2393 = vmax.f32 %v2391, %v2392
      %v2394 = vsel %vm2239, %v2002, -inf
      %v2395 = vrot.slane %v2394, 4
      %v2396 = vmax.f32 %v2394, %v2395
      %v2397 = vrot.slane %v2396, 2
      %v2398 = vmax.f32 %v2396, %v2397
      %v2399 = vrot.slane %v2398, 1
      %v2400 = vmax.f32 %v2398, %v2399
      %v2401 = vsel %vm2239, %v2004, -inf
      %v2402 = vrot.slane %v2401, 4
      %v2403 = vmax.f32 %v2401, %v2402
      %v2404 = vrot.slane %v2403, 2
      %v2405 = vmax.f32 %v2403, %v2404
      %v2406 = vrot.slane %v2405, 1
      %v2407 = vmax.f32 %v2405, %v2406
      %v2408 = vsel %vm2239, %v2012, -inf
      %v2409 = vrot.slane %v2408, 4
      %v2410 = vmax.f32 %v2408, %v2409
      %v2411 = vrot.slane %v2410, 2
      %v2412 = vmax.f32 %v2410, %v2411
      %v2413 = vrot.slane %v2412, 1
      %v2414 = vmax.f32 %v2412, %v2413
      %v2415 = vsel %vm2239, %v2020, -inf
      %v2416 = vrot.slane %v2415, 4
      %v2417 = vmax.f32 %v2415, %v2416
      %v2418 = vrot.slane %v2417, 2
      %v2419 = vmax.f32 %v2417, %v2418
      %v2420 = vrot.slane %v2419, 1
      %v2421 = vmax.f32 %v2419, %v2420
      %v2422 = vsel %vm2239, %v2019, -inf
      %v2423 = vrot.slane %v2422, 4
      %v2424 = vmax.f32 %v2422, %v2423
      %v2425 = vrot.slane %v2424, 2
      %v2426 = vmax.f32 %v2424, %v2425
      %v2427 = vrot.slane %v2426, 1
      %v2428 = vmax.f32 %v2426, %v2427
      %v2429 = vsel %vm2239, %v2021, -inf
      %v2430 = vrot.slane %v2429, 4
      %v2431 = vmax.f32 %v2429, %v2430
      %v2432 = vrot.slane %v2431, 2
      %v2433 = vmax.f32 %v2431, %v2432
      %v2434 = vrot.slane %v2433, 1
      %v2435 = vmax.f32 %v2433, %v2434
      %v2436 = vsel %vm2239, %v2029, -inf
      %v2437 = vrot.slane %v2436, 4
      %v2438 = vmax.f32 %v2436, %v2437
      %v2439 = vrot.slane %v2438, 2
      %v2440 = vmax.f32 %v2438, %v2439
      %v2441 = vrot.slane %v2440, 1
      %v2442 = vmax.f32 %v2440, %v2441
      %v2443 = vsel %vm2239, %v2037, -inf
      %v2444 = vrot.slane %v2443, 4
      %v2445 = vmax.f32 %v2443, %v2444
      %v2446 = vrot.slane %v2445, 2
      %v2447 = vmax.f32 %v2445, %v2446
      %v2448 = vrot.slane %v2447, 1
      %v2449 = vmax.f32 %v2447, %v2448
      %v2450 = vsel %vm2239, %v2036, -inf
      %v2451 = vrot.slane %v2450, 4
      %v2452 = vmax.f32 %v2450, %v2451
      %v2453 = vrot.slane %v2452, 2
      %v2454 = vmax.f32 %v2452, %v2453
      %v2455 = vrot.slane %v2454, 1
      %v2456 = vmax.f32 %v2454, %v2455
      %v2457 = vsel %vm2239, %v2038, -inf
      %v2458 = vrot.slane %v2457, 4
      %v2459 = vmax.f32 %v2457, %v2458
      %v2460 = vrot.slane %v2459, 2
      %v2461 = vmax.f32 %v2459, %v2460
      %v2462 = vrot.slane %v2461, 1
      %v2463 = vmax.f32 %v2461, %v2462
      %v2464 = vsel %vm2239, %v2046, -inf
      %v2465 = vrot.slane %v2464, 4
      %v2466 = vmax.f32 %v2464, %v2465
      %v2467 = vrot.slane %v2466, 2
      %v2468 = vmax.f32 %v2466, %v2467
      %v2469 = vrot.slane %v2468, 1
      %v2470 = vmax.f32 %v2468, %v2469
      %v2471 = vsel %vm2239, %v2054, -inf
      %v2472 = vrot.slane %v2471, 4
      %v2473 = vmax.f32 %v2471, %v2472
      %v2474 = vrot.slane %v2473, 2
      %v2475 = vmax.f32 %v2473, %v2474
      %v2476 = vrot.slane %v2475, 1
      %v2477 = vmax.f32 %v2475, %v2476
      %v2478 = vsel %vm2239, %v2053, -inf
      %v2479 = vrot.slane %v2478, 4
      %v2480 = vmax.f32 %v2478, %v2479
      %v2481 = vrot.slane %v2480, 2
      %v2482 = vmax.f32 %v2480, %v2481
      %v2483 = vrot.slane %v2482, 1
      %v2484 = vmax.f32 %v2482, %v2483
      %v2485 = vsel %vm2239, %v2055, -inf
      %v2486 = vrot.slane %v2485, 4
      %v2487 = vmax.f32 %v2485, %v2486
      %v2488 = vrot.slane %v2487, 2
      %v2489 = vmax.f32 %v2487, %v2488
      %v2490 = vrot.slane %v2489, 1
      %v2491 = vmax.f32 %v2489, %v2490
      %v2492 = vsel %vm2239, %v2063, -inf
      %v2493 = vrot.slane %v2492, 4
      %v2494 = vmax.f32 %v2492, %v2493
      %v2495 = vrot.slane %v2494, 2
      %v2496 = vmax.f32 %v2494, %v2495
      %v2497 = vrot.slane %v2496, 1
      %v2498 = vmax.f32 %v2496, %v2497
      %v2499 = vsel %vm2239, %v2071, -inf
      %v2500 = vrot.slane %v2499, 4
      %v2501 = vmax.f32 %v2499, %v2500
      %v2502 = vrot.slane %v2501, 2
      %v2503 = vmax.f32 %v2501, %v2502
      %v2504 = vrot.slane %v2503, 1
      %v2505 = vmax.f32 %v2503, %v2504
      %v2506 = vsel %vm2239, %v2070, -inf
      %v2507 = vrot.slane %v2506, 4
      %v2508 = vmax.f32 %v2506, %v2507
      %v2509 = vrot.slane %v2508, 2
      %v2510 = vmax.f32 %v2508, %v2509
      %v2511 = vrot.slane %v2510, 1
      %v2512 = vmax.f32 %v2510, %v2511
      %v2513 = vsel %vm2239, %v2072, -inf
      %v2514 = vrot.slane %v2513, 4
      %v2515 = vmax.f32 %v2513, %v2514
      %v2516 = vrot.slane %v2515, 2
      %v2517 = vmax.f32 %v2515, %v2516
      %v2518 = vrot.slane %v2517, 1
      %v2519 = vmax.f32 %v2517, %v2518
      %v2520 = vsel %vm2239, %v2080, -inf
      %v2521 = vrot.slane %v2520, 4
      %v2522 = vmax.f32 %v2520, %v2521
      %v2523 = vrot.slane %v2522, 2
      %v2524 = vmax.f32 %v2522, %v2523
      %v2525 = vrot.slane %v2524, 1
      %v2526 = vmax.f32 %v2524, %v2525
      %v2527 = vsel %vm2239, %v2088, -inf
      %v2528 = vrot.slane %v2527, 4
      %v2529 = vmax.f32 %v2527, %v2528
      %v2530 = vrot.slane %v2529, 2
      %v2531 = vmax.f32 %v2529, %v2530
      %v2532 = vrot.slane %v2531, 1
      %v2533 = vmax.f32 %v2531, %v2532
      %v2534 = vsel %vm2239, %v2087, -inf
      %v2535 = vrot.slane %v2534, 4
      %v2536 = vmax.f32 %v2534, %v2535
      %v2537 = vrot.slane %v2536, 2
      %v2538 = vmax.f32 %v2536, %v2537
      %v2539 = vrot.slane %v2538, 1
      %v2540 = vmax.f32 %v2538, %v2539
      %v2541 = vsel %vm2239, %v2089, -inf
      %v2542 = vrot.slane %v2541, 4
      %v2543 = vmax.f32 %v2541, %v2542
      %v2544 = vrot.slane %v2543, 2
      %v2545 = vmax.f32 %v2543, %v2544
      %v2546 = vrot.slane %v2545, 1
      %v2547 = vmax.f32 %v2545, %v2546
      %v2548 = vsel %vm2239, %v2097, -inf
      %v2549 = vrot.slane %v2548, 4
      %v2550 = vmax.f32 %v2548, %v2549
      %v2551 = vrot.slane %v2550, 2
      %v2552 = vmax.f32 %v2550, %v2551
      %v2553 = vrot.slane %v2552, 1
      %v2554 = vmax.f32 %v2552, %v2553
      %v2555 = vsel %vm2239, %v2105, -inf
      %v2556 = vrot.slane %v2555, 4
      %v2557 = vmax.f32 %v2555, %v2556
      %v2558 = vrot.slane %v2557, 2
      %v2559 = vmax.f32 %v2557, %v2558
      %v2560 = vrot.slane %v2559, 1
      %v2561 = vmax.f32 %v2559, %v2560
      %v2562 = vsel %vm2239, %v2104, -inf
      %v2563 = vrot.slane %v2562, 4
      %v2564 = vmax.f32 %v2562, %v2563
      %v2565 = vrot.slane %v2564, 2
      %v2566 = vmax.f32 %v2564, %v2565
      %v2567 = vrot.slane %v2566, 1
      %v2568 = vmax.f32 %v2566, %v2567
      %v2569 = vsel %vm2239, %v2106, -inf
      %v2570 = vrot.slane %v2569, 4
      %v2571 = vmax.f32 %v2569, %v2570
      %v2572 = vrot.slane %v2571, 2
      %v2573 = vmax.f32 %v2571, %v2572
      %v2574 = vrot.slane %v2573, 1
      %v2575 = vmax.f32 %v2573, %v2574
      %v2576 = vsel %vm2239, %v2114, -inf
      %v2577 = vrot.slane %v2576, 4
      %v2578 = vmax.f32 %v2576, %v2577
      %v2579 = vrot.slane %v2578, 2
      %v2580 = vmax.f32 %v2578, %v2579
      %v2581 = vrot.slane %v2580, 1
      %v2582 = vmax.f32 %v2580, %v2581
      %v2583 = vsel %vm2239, %v2122, -inf
      %v2584 = vrot.slane %v2583, 4
      %v2585 = vmax.f32 %v2583, %v2584
      %v2586 = vrot.slane %v2585, 2
      %v2587 = vmax.f32 %v2585, %v2586
      %v2588 = vrot.slane %v2587, 1
      %v2589 = vmax.f32 %v2587, %v2588
      %v2590 = vsel %vm2239, %v2121, -inf
      %v2591 = vrot.slane %v2590, 4
      %v2592 = vmax.f32 %v2590, %v2591
      %v2593 = vrot.slane %v2592, 2
      %v2594 = vmax.f32 %v2592, %v2593
      %v2595 = vrot.slane %v2594, 1
      %v2596 = vmax.f32 %v2594, %v2595
      %v2597 = vsel %vm2239, %v2123, -inf
      %v2598 = vrot.slane %v2597, 4
      %v2599 = vmax.f32 %v2597, %v2598
      %v2600 = vrot.slane %v2599, 2
      %v2601 = vmax.f32 %v2599, %v2600
      %v2602 = vrot.slane %v2601, 1
      %v2603 = vmax.f32 %v2601, %v2602
      %v2604 = vsel %vm2239, %v2131, -inf
      %v2605 = vrot.slane %v2604, 4
      %v2606 = vmax.f32 %v2604, %v2605
      %v2607 = vrot.slane %v2606, 2
      %v2608 = vmax.f32 %v2606, %v2607
      %v2609 = vrot.slane %v2608, 1
      %v2610 = vmax.f32 %v2608, %v2609
      %v2611 = vsel %vm2239, %v2139, -inf
      %v2612 = vrot.slane %v2611, 4
      %v2613 = vmax.f32 %v2611, %v2612
      %v2614 = vrot.slane %v2613, 2
      %v2615 = vmax.f32 %v2613, %v2614
      %v2616 = vrot.slane %v2615, 1
      %v2617 = vmax.f32 %v2615, %v2616
      %v2618 = vsel %vm2239, %v2138, -inf
      %v2619 = vrot.slane %v2618, 4
      %v2620 = vmax.f32 %v2618, %v2619
      %v2621 = vrot.slane %v2620, 2
      %v2622 = vmax.f32 %v2620, %v2621
      %v2623 = vrot.slane %v2622, 1
      %v2624 = vmax.f32 %v2622, %v2623
      %v2625 = vsel %vm2239, %v2140, -inf
      %v2626 = vrot.slane %v2625, 4
      %v2627 = vmax.f32 %v2625, %v2626
      %v2628 = vrot.slane %v2627, 2
      %v2629 = vmax.f32 %v2627, %v2628
      %v2630 = vrot.slane %v2629, 1
      %v2631 = vmax.f32 %v2629, %v2630
      %v2632 = vsel %vm2239, %v2148, -inf
      %v2633 = vrot.slane %v2632, 4
      %v2634 = vmax.f32 %v2632, %v2633
      %v2635 = vrot.slane %v2634, 2
      %v2636 = vmax.f32 %v2634, %v2635
      %v2637 = vrot.slane %v2636, 1
      %v2638 = vmax.f32 %v2636, %v2637
      %v2639 = vsel %vm2239, %v2156, -inf
      %v2640 = vrot.slane %v2639, 4
      %v2641 = vmax.f32 %v2639, %v2640
      %v2642 = vrot.slane %v2641, 2
      %v2643 = vmax.f32 %v2641, %v2642
      %v2644 = vrot.slane %v2643, 1
      %v2645 = vmax.f32 %v2643, %v2644
      %v2646 = vsel %vm2239, %v2155, -inf
      %v2647 = vrot.slane %v2646, 4
      %v2648 = vmax.f32 %v2646, %v2647
      %v2649 = vrot.slane %v2648, 2
      %v2650 = vmax.f32 %v2648, %v2649
      %v2651 = vrot.slane %v2650, 1
      %v2652 = vmax.f32 %v2650, %v2651
      %v2653 = vsel %vm2239, %v2157, -inf
      %v2654 = vrot.slane %v2653, 4
      %v2655 = vmax.f32 %v2653, %v2654
      %v2656 = vrot.slane %v2655, 2
      %v2657 = vmax.f32 %v2655, %v2656
      %v2658 = vrot.slane %v2657, 1
      %v2659 = vmax.f32 %v2657, %v2658
      %v2660 = vsel %vm2239, %v2165, -inf
      %v2661 = vrot.slane %v2660, 4
      %v2662 = vmax.f32 %v2660, %v2661
      %v2663 = vrot.slane %v2662, 2
      %v2664 = vmax.f32 %v2662, %v2663
      %v2665 = vrot.slane %v2664, 1
      %v2666 = vmax.f32 %v2664, %v2665
      %v2667 = vsel %vm2239, %v2173, -inf
      %v2668 = vrot.slane %v2667, 4
      %v2669 = vmax.f32 %v2667, %v2668
      %v2670 = vrot.slane %v2669, 2
      %v2671 = vmax.f32 %v2669, %v2670
      %v2672 = vrot.slane %v2671, 1
      %v2673 = vmax.f32 %v2671, %v2672
      %v2674 = vsel %vm2239, %v2172, -inf
      %v2675 = vrot.slane %v2674, 4
      %v2676 = vmax.f32 %v2674, %v2675
      %v2677 = vrot.slane %v2676, 2
      %v2678 = vmax.f32 %v2676, %v2677
      %v2679 = vrot.slane %v2678, 1
      %v2680 = vmax.f32 %v2678, %v2679
      %v2681 = vsel %vm2239, %v2174, -inf
      %v2682 = vrot.slane %v2681, 4
      %v2683 = vmax.f32 %v2681, %v2682
      %v2684 = vrot.slane %v2683, 2
      %v2685 = vmax.f32 %v2683, %v2684
      %v2686 = vrot.slane %v2685, 1
      %v2687 = vmax.f32 %v2685, %v2686
      %v2688 = vsel %vm1709, %v2246, -inf
      %v2689 = vsel %vm1709, %v2302, -inf
      %v2690 = vmax.f32 %v2688, %v2689
      %v2691 = vsel %vm1709, %v2253, -inf
      %v2692 = vsel %vm1709, %v2309, -inf
      %v2693 = vmax.f32 %v2691, %v2692
      %v2694 = vsel %vm1709, %v2260, -inf
      %v2695 = vsel %vm1709, %v2316, -inf
      %v2696 = vmax.f32 %v2694, %v2695
      %v2697 = vsel %vm1709, %v2267, -inf
      %v2698 = vsel %vm1709, %v2323, -inf
      %v2699 = vmax.f32 %v2697, %v2698
      %v2700 = vsel %vm1709, %v2274, -inf
      %v2701 = vsel %vm1709, %v2330, -inf
      %v2702 = vmax.f32 %v2700, %v2701
      %v2703 = vsel %vm1709, %v2281, -inf
      %v2704 = vsel %vm1709, %v2337, -inf
      %v2705 = vmax.f32 %v2703, %v2704
      %v2706 = vsel %vm1709, %v2288, -inf
      %v2707 = vsel %vm1709, %v2344, -inf
      %v2708 = vmax.f32 %v2706, %v2707
      %v2709 = vsel %vm1709, %v2295, -inf
      %v2710 = vsel %vm1709, %v2351, -inf
      %v2711 = vmax.f32 %v2709, %v2710
      %v2712 = vsel %vm1709, %v2358, -inf
      %v2713 = vsel %vm1709, %v2414, -inf
      %v2714 = vmax.f32 %v2712, %v2713
      %v2715 = vsel %vm1709, %v2365, -inf
      %v2716 = vsel %vm1709, %v2421, -inf
      %v2717 = vmax.f32 %v2715, %v2716
      %v2718 = vsel %vm1709, %v2372, -inf
      %v2719 = vsel %vm1709, %v2428, -inf
      %v2720 = vmax.f32 %v2718, %v2719
      %v2721 = vsel %vm1709, %v2379, -inf
      %v2722 = vsel %vm1709, %v2435, -inf
      %v2723 = vmax.f32 %v2721, %v2722
      %v2724 = vsel %vm1709, %v2386, -inf
      %v2725 = vsel %vm1709, %v2442, -inf
      %v2726 = vmax.f32 %v2724, %v2725
      %v2727 = vsel %vm1709, %v2393, -inf
      %v2728 = vsel %vm1709, %v2449, -inf
      %v2729 = vmax.f32 %v2727, %v2728
      %v2730 = vsel %vm1709, %v2400, -inf
      %v2731 = vsel %vm1709, %v2456, -inf
      %v2732 = vmax.f32 %v2730, %v2731
      %v2733 = vsel %vm1709, %v2407, -inf
      %v2734 = vsel %vm1709, %v2463, -inf
      %v2735 = vmax.f32 %v2733, %v2734
      %v2736 = vsel %vm1709, %v2470, -inf
      %v2737 = vsel %vm1709, %v2526, -inf
      %v2738 = vmax.f32 %v2736, %v2737
      %v2739 = vsel %vm1709, %v2477, -inf
      %v2740 = vsel %vm1709, %v2533, -inf
      %v2741 = vmax.f32 %v2739, %v2740
      %v2742 = vsel %vm1709, %v2484, -inf
      %v2743 = vsel %vm1709, %v2540, -inf
      %v2744 = vmax.f32 %v2742, %v2743
      %v2745 = vsel %vm1709, %v2491, -inf
      %v2746 = vsel %vm1709, %v2547, -inf
      %v2747 = vmax.f32 %v2745, %v2746
      %v2748 = vsel %vm1709, %v2498, -inf
      %v2749 = vsel %vm1709, %v2554, -inf
      %v2750 = vmax.f32 %v2748, %v2749
      %v2751 = vsel %vm1709, %v2505, -inf
      %v2752 = vsel %vm1709, %v2561, -inf
      %v2753 = vmax.f32 %v2751, %v2752
      %v2754 = vsel %vm1709, %v2512, -inf
      %v2755 = vsel %vm1709, %v2568, -inf
      %v2756 = vmax.f32 %v2754, %v2755
      %v2757 = vsel %vm1709, %v2519, -inf
      %v2758 = vsel %vm1709, %v2575, -inf
      %v2759 = vmax.f32 %v2757, %v2758
      %v2760 = vsel %vm1709, %v2582, -inf
      %v2761 = vsel %vm1709, %v2638, -inf
      %v2762 = vmax.f32 %v2760, %v2761
      %v2763 = vsel %vm1709, %v2589, -inf
      %v2764 = vsel %vm1709, %v2645, -inf
      %v2765 = vmax.f32 %v2763, %v2764
      %v2766 = vsel %vm1709, %v2596, -inf
      %v2767 = vsel %vm1709, %v2652, -inf
      %v2768 = vmax.f32 %v2766, %v2767
      %v2769 = vsel %vm1709, %v2603, -inf
      %v2770 = vsel %vm1709, %v2659, -inf
      %v2771 = vmax.f32 %v2769, %v2770
      %v2772 = vsel %vm1709, %v2610, -inf
      %v2773 = vsel %vm1709, %v2666, -inf
      %v2774 = vmax.f32 %v2772, %v2773
      %v2775 = vsel %vm1709, %v2617, -inf
      %v2776 = vsel %vm1709, %v2673, -inf
      %v2777 = vmax.f32 %v2775, %v2776
      %v2778 = vsel %vm1709, %v2624, -inf
      %v2779 = vsel %vm1709, %v2680, -inf
      %v2780 = vmax.f32 %v2778, %v2779
      %v2781 = vsel %vm1709, %v2631, -inf
      %v2782 = vsel %vm1709, %v2687, -inf
      %v2783 = vmax.f32 %v2781, %v2782
      %v2784 = vpack.c.bf16 %v2690, %v2690
      %v2785 = vpack.c.bf16 %v2693, %v2693
      %v2786 = vpack.c.bf16 %v2696, %v2696
      %v2787 = vpack.c.bf16 %v2699, %v2699
      %v2788 = vpack.c.bf16 %v2702, %v2702
      %v2789 = vpack.c.bf16 %v2705, %v2705
      %v2790 = vpack.c.bf16 %v2708, %v2708
      %v2791 = vpack.c.bf16 %v2711, %v2711
      %v2792 = vpack.c.bf16 %v2714, %v2714
      %v2793 = vpack.c.bf16 %v2717, %v2717
      %v2794 = vpack.c.bf16 %v2720, %v2720
      %v2795 = vpack.c.bf16 %v2723, %v2723
      %v2796 = vpack.c.bf16 %v2726, %v2726
      %v2797 = vpack.c.bf16 %v2729, %v2729
      %v2798 = vpack.c.bf16 %v2732, %v2732
      %v2799 = vpack.c.bf16 %v2735, %v2735
      %v2800 = vpack.c.bf16 %v2738, %v2738
      %v2801 = vpack.c.bf16 %v2741, %v2741
      %v2802 = vpack.c.bf16 %v2744, %v2744
      %v2803 = vpack.c.bf16 %v2747, %v2747
      %v2804 = vpack.c.bf16 %v2750, %v2750
      %v2805 = vpack.c.bf16 %v2753, %v2753
      %v2806 = vpack.c.bf16 %v2756, %v2756
      %v2807 = vpack.c.bf16 %v2759, %v2759
      %v2808 = vpack.c.bf16 %v2762, %v2762
      %v2809 = vpack.c.bf16 %v2765, %v2765
      %v2810 = vpack.c.bf16 %v2768, %v2768
      %v2811 = vpack.c.bf16 %v2771, %v2771
      %v2812 = vpack.c.bf16 %v2774, %v2774
      %v2813 = vpack.c.bf16 %v2777, %v2777
      %v2814 = vpack.c.bf16 %v2780, %v2780
      %v2815 = vpack.c.bf16 %v2783, %v2783
      %v2848 = vunpack.c.l.b16 %v2784
      %v2849 = vunpack.c.l.b16 %v2785
      %v2850 = vunpack.c.l.b16 %v2786
      %v2851 = vunpack.c.l.b16 %v2787
      %v2852 = vunpack.c.l.b16 %v2788
      %v2853 = vunpack.c.l.b16 %v2789
      %v2854 = vunpack.c.l.b16 %v2790
      %v2855 = vunpack.c.l.b16 %v2791
      %v2856 = vunpack.c.l.b16 %v2792
      %v2857 = vunpack.c.l.b16 %v2793
      %v2858 = vunpack.c.l.b16 %v2794
      %v2859 = vunpack.c.l.b16 %v2795
      %v2860 = vunpack.c.l.b16 %v2796
      %v2861 = vunpack.c.l.b16 %v2797
      %v2862 = vunpack.c.l.b16 %v2798
      %v2863 = vunpack.c.l.b16 %v2799
      %v2864 = vunpack.c.l.b16 %v2800
      %v2865 = vunpack.c.l.b16 %v2801
      %v2866 = vunpack.c.l.b16 %v2802
      %v2867 = vunpack.c.l.b16 %v2803
      %v2868 = vunpack.c.l.b16 %v2804
      %v2869 = vunpack.c.l.b16 %v2805
      %v2870 = vunpack.c.l.b16 %v2806
      %v2871 = vunpack.c.l.b16 %v2807
      %v2872 = vunpack.c.l.b16 %v2808
      %v2873 = vunpack.c.l.b16 %v2809
      %v2874 = vunpack.c.l.b16 %v2810
      %v2875 = vunpack.c.l.b16 %v2811
      %v2876 = vunpack.c.l.b16 %v2812
      %v2877 = vunpack.c.l.b16 %v2813
      %v2878 = vunpack.c.l.b16 %v2814
      %v2879 = vunpack.c.l.b16 %v2815
      %v2880 = vpack.c.b16 %v2848, %v2848
      %v2881 = vpack.c.b16 %v2849, %v2849
      %v2882 = vpack.c.b16 %v2850, %v2850
      %v2883 = vpack.c.b16 %v2851, %v2851
      %v2884 = vpack.c.b16 %v2852, %v2852
      %v2885 = vpack.c.b16 %v2853, %v2853
      %v2886 = vpack.c.b16 %v2854, %v2854
      %v2887 = vpack.c.b16 %v2855, %v2855
      %v2888 = vpack.c.b16 %v2856, %v2856
      %v2889 = vpack.c.b16 %v2857, %v2857
      %v2890 = vpack.c.b16 %v2858, %v2858
      %v2891 = vpack.c.b16 %v2859, %v2859
      %v2892 = vpack.c.b16 %v2860, %v2860
      %v2893 = vpack.c.b16 %v2861, %v2861
      %v2894 = vpack.c.b16 %v2862, %v2862
      %v2895 = vpack.c.b16 %v2863, %v2863
      %v2896 = vpack.c.b16 %v2864, %v2864
      %v2897 = vpack.c.b16 %v2865, %v2865
      %v2898 = vpack.c.b16 %v2866, %v2866
      %v2899 = vpack.c.b16 %v2867, %v2867
      %v2900 = vpack.c.b16 %v2868, %v2868
      %v2901 = vpack.c.b16 %v2869, %v2869
      %v2902 = vpack.c.b16 %v2870, %v2870
      %v2903 = vpack.c.b16 %v2871, %v2871
      %v2904 = vpack.c.b16 %v2872, %v2872
      %v2905 = vpack.c.b16 %v2873, %v2873
      %v2906 = vpack.c.b16 %v2874, %v2874
      %v2907 = vpack.c.b16 %v2875, %v2875
      %v2908 = vpack.c.b16 %v2876, %v2876
      %v2909 = vpack.c.b16 %v2877, %v2877
      %v2910 = vpack.c.b16 %v2878, %v2878
      %v2911 = vpack.c.b16 %v2879, %v2879
      %v2912 = vunpack.c.l.b16 %v2880
      %v2913 = vunpack.c.l.b16 %v2881
      %v2914 = vunpack.c.l.b16 %v2882
      %v2915 = vunpack.c.l.b16 %v2883
      %v2916 = vunpack.c.l.b16 %v2884
      %v2917 = vunpack.c.l.b16 %v2885
      %v2918 = vunpack.c.l.b16 %v2886
      %v2919 = vunpack.c.l.b16 %v2887
      %v2920 = vunpack.c.l.b16 %v2888
      %v2921 = vunpack.c.l.b16 %v2889
      %v2922 = vunpack.c.l.b16 %v2890
      %v2923 = vunpack.c.l.b16 %v2891
      %v2924 = vunpack.c.l.b16 %v2892
      %v2925 = vunpack.c.l.b16 %v2893
      %v2926 = vunpack.c.l.b16 %v2894
      %v2927 = vunpack.c.l.b16 %v2895
      %v2928 = vunpack.c.l.b16 %v2896
      %v2929 = vunpack.c.l.b16 %v2897
      %v2930 = vunpack.c.l.b16 %v2898
      %v2931 = vunpack.c.l.b16 %v2899
      %v2932 = vunpack.c.l.b16 %v2900
      %v2933 = vunpack.c.l.b16 %v2901
      %v2934 = vunpack.c.l.b16 %v2902
      %v2935 = vunpack.c.l.b16 %v2903
      %v2936 = vunpack.c.l.b16 %v2904
      %v2937 = vunpack.c.l.b16 %v2905
      %v2938 = vunpack.c.l.b16 %v2906
      %v2939 = vunpack.c.l.b16 %v2907
      %v2940 = vunpack.c.l.b16 %v2908
      %v2941 = vunpack.c.l.b16 %v2909
      %v2942 = vunpack.c.l.b16 %v2910
      %v2943 = vunpack.c.l.b16 %v2911
      %vm2944 = vcmask 1041409
      %v2945 = vsel %vm2944, %v2913, %v2912
      %vm2946 = vcmask 1042434
      %v2947 = vsel %vm2946, %v2914, %v2945
      %vm2948 = vcmask 1043459
      %v2949 = vsel %vm2948, %v2915, %v2947
      %vm2950 = vcmask 1044484
      %v2951 = vsel %vm2950, %v2916, %v2949
      %vm2952 = vcmask 1045509
      %v2953 = vsel %vm2952, %v2917, %v2951
      %vm2954 = vcmask 1046534
      %v2955 = vsel %vm2954, %v2918, %v2953
      %vm2956 = vcmask 1047559
      %v2957 = vsel %vm2956, %v2919, %v2955
      %v2958 = vsel %vm2944, %v2921, %v2920
      %v2959 = vsel %vm2946, %v2922, %v2958
      %v2960 = vsel %vm2948, %v2923, %v2959
      %v2961 = vsel %vm2950, %v2924, %v2960
      %v2962 = vsel %vm2952, %v2925, %v2961
      %v2963 = vsel %vm2954, %v2926, %v2962
      %v2964 = vsel %vm2956, %v2927, %v2963
      %v2965 = vsel %vm2944, %v2929, %v2928
      %v2966 = vsel %vm2946, %v2930, %v2965
      %v2967 = vsel %vm2948, %v2931, %v2966
      %v2968 = vsel %vm2950, %v2932, %v2967
      %v2969 = vsel %vm2952, %v2933, %v2968
      %v2970 = vsel %vm2954, %v2934, %v2969
      %v2971 = vsel %vm2956, %v2935, %v2970
      %v2972 = vsel %vm2944, %v2937, %v2936
      %v2973 = vsel %vm2946, %v2938, %v2972
      %v2974 = vsel %vm2948, %v2939, %v2973
      %v2975 = vsel %vm2950, %v2940, %v2974
      %v2976 = vsel %vm2952, %v2941, %v2975
      %v2977 = vsel %vm2954, %v2942, %v2976
      %v2978 = vsel %vm2956, %v2943, %v2977
      %v2979 = vpack.c.b16 %v2957, %v2957
      %v2980 = vpack.c.b16 %v2964, %v2964
      %v2981 = vpack.c.b16 %v2971, %v2971
      %v2982 = vpack.c.b16 %v2978, %v2978
      %vm2987 = vcmask 257024
      %2988 = vst.msk [vmem:[%s192] sm:$0xf] %vm2987, %v2979
      %2989 = vst.msk [vmem:[%s192 + $0x4] sm:$0xf] %vm2987, %v2980
      %2990 = vst.msk [vmem:[%s192 + $0x8] sm:$0xf] %vm2987, %v2981
      %2991 = vst.msk [vmem:[%s192 + $0xc] sm:$0xf] %vm2987, %v2982
      %s2992 = smul.u32 4, %s19
      %p2993 = scmp.lt.s32.totalorder %s18, 1
      %s2994 = scalar_select %p2993, %s18, 1
      %p2995 = scmp.lt.s32.totalorder %s2992, 7
      %s2996 = scalar_select %p2995, %s2992, 7
      %s2997 = smul.addr %s2994, 8
      %s2998 = sadd.s32 %s2996, %s2997
      %s2999 = smul.addr %s2998, 4
      %s3000 = scalar_lea.vmem %s3, %s2999
      // Predicated region
      $region37: #{unet_old_forward.4} parent=31 // pred_check
        %p3001 = pneg %p114
      $region38: #{unet_old_forward.4} parent=31 // pred_check_branch
        %3003 = sbr.rel (%p3001) target = $region40
      $region39: #{unet_old_forward.4} parent=31 // pred_region
        %s3004 = smul.u32 4, %s19
      $region40: #{unet_old_forward.4} parent=31 // pred_fallthru
        _
    $region32: #{unet_old_forward.4} parent=5 // pred_fallthru
      _
    %p3005 = scmp.le.s32.totalorder 2, %s9
    // Predicated region
    $region41: #{unet_old_forward.4} parent=5 // pred_check
      %p3006 = pneg %p3005
    $region42: #{unet_old_forward.4} parent=5 // pred_check_branch
      %3008 = sbr.rel (%p3006) target = $region44
    $region43: #{unet_old_forward.4} parent=5 // pred_region
      %s3009 = ssub.s32 %s9, 2
      // Predicated region
      $region45: #{unet_old_forward.4} parent=43 // pred_check
        %p3010 = pneg %p120
      $region46: #{unet_old_forward.4} parent=43 // pred_check_branch
        %3012 = sbr.rel (%p3010) target = $region48
      $region47: #{unet_old_forward.4} parent=43 // pred_region
        %s3013 = smul.u32 4, %s21
        %p3014 = scmp.lt.s32.totalorder %s20, 1
        %s3015 = scalar_select %p3014, %s20, 1
        %p3016 = scmp.lt.s32.totalorder %s3013, 7
        %s3017 = scalar_select %p3016, %s3013, 7
        %s3018 = smul.addr %s3015, 8
        %s3019 = sadd.s32 %s3017, %s3018
        %s3020 = smul.addr %s3019, 4
        %s3021 = scalar_lea.vmem %s3, %s3020
      $region48: #{unet_old_forward.4} parent=43 // pred_fallthru
        _
    $region44: #{unet_old_forward.4} parent=5 // pred_fallthru
      _
  $region6: #{unet_old_forward.4} parent=0 // loop_footer
    %s13 = sadd.s32 1, %s9
  $region7: #{unet_old_forward.4} parent=0 // loop_footer_branch
    %8 = sbr.rel target = $region3
  $region8: #{unet_old_forward.4} parent=0 // loop_exit
    _

// kernel: unet_old_forward.7
$region0: #{unet_old_forward.7}
  #allocation0 [shape = 'u32[]', space=smem, size = 0x4, offset = 0x4, fixed_abs, tag = 'smem constant byte address 0x4 - core index']
  #allocation1 [shape = 'u32[144,128]{1,0:T(1,128)}', space=vmem, size = 0x12000, scoped, tag = 'internal scratch']
  %s0 = inlined_call_operand.vmem [shape: bf16[8,128], index: 0, kind: input, shape index: {}]
  %s1 = inlined_call_operand.vmem [shape: bf16[128,256], index: 1, kind: input, shape index: {}]
  %s2 = inlined_call_operand.vmem [shape: f32[1,256], index: 2, kind: input, shape index: {}]
  %s3 = inlined_call_operand.vmem [shape: bf16[256,512], index: 3, kind: input, shape index: {}]
  %s4 = inlined_call_operand.vmem [shape: f32[1,512], index: 4, kind: input, shape index: {}]
  %s5 = inlined_call_operand.vmem [shape: bf16[512,64], index: 5, kind: input, shape index: {}]
  %s6 = inlined_call_operand.vmem [shape: f32[1,64], index: 6, kind: input, shape index: {}]
  %s7 = inlined_call_operand.vmem [shape: f32[8,64], index: 7, kind: output, shape index: {}]
  %s8 = sld [smem:[#allocation0]]
  $region38: #{unet_old_forward.7} parent=0
    _
  %s10 = ssub.s32 1, %s8
  %s11 = scalar_select 0, %s10, %s8
  // Predicated region
  $region2: #{unet_old_forward.7} parent=0 // pred_check
    _
  $region3: #{unet_old_forward.7} parent=0 // pred_check_branch
    %13 = sbr.rel (0) target = $region5
  $region4: #{unet_old_forward.7} parent=0 // pred_region
    _
  $region5: #{unet_old_forward.7} parent=0 // pred_fallthru
    _
  // Predicated region
  $region6: #{unet_old_forward.7} parent=0 // pred_check
    _
  $region7: #{unet_old_forward.7} parent=0 // pred_check_branch
    %15 = sbr.rel (0) target = $region9
  $region8: #{unet_old_forward.7} parent=0 // pred_region
    _
  $region9: #{unet_old_forward.7} parent=0 // pred_fallthru
    _
  // Predicated region
  $region10: #{unet_old_forward.7} parent=0 // pred_check
    _
  $region11: #{unet_old_forward.7} parent=0 // pred_check_branch
    %17 = sbr.rel (0) target = $region13
  $region12: #{unet_old_forward.7} parent=0 // pred_region
    _
  $region13: #{unet_old_forward.7} parent=0 // pred_fallthru
    _
  // Predicated region
  $region14: #{unet_old_forward.7} parent=0 // pred_check
    _
  $region15: #{unet_old_forward.7} parent=0 // pred_check_branch
    %19 = sbr.rel (0) target = $region17
  $region16: #{unet_old_forward.7} parent=0 // pred_region
    _
  $region17: #{unet_old_forward.7} parent=0 // pred_fallthru
    _
  // Predicated region
  $region18: #{unet_old_forward.7} parent=0 // pred_check
    _
  $region19: #{unet_old_forward.7} parent=0 // pred_check_branch
    %21 = sbr.rel (0) target = $region21
  $region20: #{unet_old_forward.7} parent=0 // pred_region
    _
  $region21: #{unet_old_forward.7} parent=0 // pred_fallthru
    _
  // Predicated region
  $region22: #{unet_old_forward.7} parent=0 // pred_check
    _
  $region23: #{unet_old_forward.7} parent=0 // pred_check_branch
    %23 = sbr.rel (0) target = $region25
  $region24: #{unet_old_forward.7} parent=0 // pred_region
    _
  $region25: #{unet_old_forward.7} parent=0 // pred_fallthru
    _
  // Predicated region
  $region26: #{unet_old_forward.7} parent=0 // pred_check
    _
  $region27: #{unet_old_forward.7} parent=0 // pred_check_branch
    %25 = sbr.rel (0) target = $region29
  $region28: #{unet_old_forward.7} parent=0 // pred_region
    _
  $region29: #{unet_old_forward.7} parent=0 // pred_fallthru
    _
  %v27 = vld [vmem:[%s0] sm:$0xf]
  %v28 = vld [vmem:[%s1] sm:$0xff]
  %v29 = vld [vmem:[%s1 + $0x8] sm:$0xff]
  %v30 = vld [vmem:[%s1 + $0x10] sm:$0xff]
  %v31 = vld [vmem:[%s1 + $0x18] sm:$0xff]
  %v32 = vld [vmem:[%s1 + $0x20] sm:$0xff]
  %v33 = vld [vmem:[%s1 + $0x28] sm:$0xff]
  %v34 = vld [vmem:[%s1 + $0x30] sm:$0xff]
  %v35 = vld [vmem:[%s1 + $0x38] sm:$0xff]
  %v36 = vld [vmem:[%s1 + $0x40] sm:$0xff]
  %v37 = vld [vmem:[%s1 + $0x48] sm:$0xff]
  %v38 = vld [vmem:[%s1 + $0x50] sm:$0xff]
  %v39 = vld [vmem:[%s1 + $0x58] sm:$0xff]
  %v40 = vld [vmem:[%s1 + $0x60] sm:$0xff]
  %v41 = vld [vmem:[%s1 + $0x68] sm:$0xff]
  %v42 = vld [vmem:[%s1 + $0x70] sm:$0xff]
  %v43 = vld [vmem:[%s1 + $0x78] sm:$0xff]
  %v44 = vld [vmem:[%s2] sm:$0x3]
  %v46 = vlaneseq
  %v47 = vshrl.u32 %v46, 7
  %v48 = vsub.s32 0, %v47
  %v49 = vrot.slane %v44, %v48
  %v50 = vlaneseq
  %v51 = vshrl.u32 %v50, 7
  %v52 = vsub.s32 1, %v51
  %v53 = vrot.slane %v44, %v52
  %v72 = vunpack.c.l.b16 %v28
  %v73 = vunpack.c.h.b16 %v28
  %v74 = vunpack.c.l.b16 %v29
  %v75 = vunpack.c.h.b16 %v29
  %v76 = vunpack.c.l.b16 %v30
  %v77 = vunpack.c.h.b16 %v30
  %v78 = vunpack.c.l.b16 %v31
  %v79 = vunpack.c.h.b16 %v31
  %v80 = vunpack.c.l.b16 %v32
  %v81 = vunpack.c.h.b16 %v32
  %v82 = vunpack.c.l.b16 %v33
  %v83 = vunpack.c.h.b16 %v33
  %v84 = vunpack.c.l.b16 %v34
  %v85 = vunpack.c.h.b16 %v34
  %v86 = vunpack.c.l.b16 %v35
  %v87 = vunpack.c.h.b16 %v35
  %v88 = vunpack.c.l.b16 %v36
  %v89 = vunpack.c.h.b16 %v36
  %v90 = vunpack.c.l.b16 %v37
  %v91 = vunpack.c.h.b16 %v37
  %v92 = vunpack.c.l.b16 %v38
  %v93 = vunpack.c.h.b16 %v38
  %v94 = vunpack.c.l.b16 %v39
  %v95 = vunpack.c.h.b16 %v39
  %v96 = vunpack.c.l.b16 %v40
  %v97 = vunpack.c.h.b16 %v40
  %v98 = vunpack.c.l.b16 %v41
  %v99 = vunpack.c.h.b16 %v41
  %v100 = vunpack.c.l.b16 %v42
  %v101 = vunpack.c.h.b16 %v42
  %v102 = vunpack.c.l.b16 %v43
  %v103 = vunpack.c.h.b16 %v43
  %v104 = vpack.c.b16 %v74, %v72
  %v105 = vpack.c.b16 %v75, %v73
  %v106 = vpack.c.b16 %v78, %v76
  %v107 = vpack.c.b16 %v79, %v77
  %v108 = vpack.c.b16 %v82, %v80
  %v109 = vpack.c.b16 %v83, %v81
  %v110 = vpack.c.b16 %v86, %v84
  %v111 = vpack.c.b16 %v87, %v85
  %v112 = vpack.c.b16 %v90, %v88
  %v113 = vpack.c.b16 %v91, %v89
  %v114 = vpack.c.b16 %v94, %v92
  %v115 = vpack.c.b16 %v95, %v93
  %v116 = vpack.c.b16 %v98, %v96
  %v117 = vpack.c.b16 %v99, %v97
  %v118 = vpack.c.b16 %v102, %v100
  %v119 = vpack.c.b16 %v103, %v101
  %136 = vmatprep.subr.bf16.mxu0 %v105
  %137 = vmatpush1.bf16.msra.mxu0 %v104
  %138 = vmatprep.subr.bf16.mxu0 %v107
  %139 = vmatpush1.bf16.msra.mxu0 %v106
  %140 = vmatprep.subr.bf16.mxu0 %v109
  %141 = vmatpush1.bf16.msra.mxu0 %v108
  %142 = vmatprep.subr.bf16.mxu0 %v111
  %143 = vmatpush1.bf16.msra.mxu0 %v110
  %144 = vmatprep.subr.bf16.mxu0 %v113
  %145 = vmatpush1.bf16.msra.mxu0 %v112
  %146 = vmatprep.subr.bf16.mxu0 %v115
  %147 = vmatpush1.bf16.msra.mxu0 %v114
  %148 = vmatprep.subr.bf16.mxu0 %v117
  %149 = vmatpush1.bf16.msra.mxu0 %v116
  %150 = vmatprep.subr.bf16.mxu0 %v119
  %151 = vmatpush1.bf16.msra.mxu0 %v118
  %152 = vmatprep.subr.bf16.mxu0 0
  %153 = vmatpush1.bf16.msra.mxu0 0
  %154 = vmatprep.subr.bf16.mxu0 0
  %155 = vmatpush1.bf16.msra.mxu0 0
  %156 = vmatprep.subr.bf16.mxu0 0
  %157 = vmatpush1.bf16.msra.mxu0 0
  %158 = vmatprep.subr.bf16.mxu0 0
  %159 = vmatpush1.bf16.msra.mxu0 0
  %160 = vmatprep.subr.bf16.mxu0 0
  %161 = vmatpush1.bf16.msra.mxu0 0
  %162 = vmatprep.subr.bf16.mxu0 0
  %163 = vmatpush1.bf16.msra.mxu0 0
  %164 = vmatprep.subr.bf16.mxu0 0
  %165 = vmatpush1.bf16.msra.mxu0 0
  %166 = vmatprep.subr.bf16.mxu0 0
  %167 = vmatpush1.bf16.msra.mxu0 0
  %168 = vmatprep.mubr.bf16.mxu0 0
  %169 = vmatmul.mubr.bf16.gmra.mrb[0].mxu0 %v27
  %v170 = vpop.f32.mrb[0].mxu0
  %v171 = vadd.f32 %v49, %v170
  %v172 = vpop.f32.mrb[0].mxu0
  %v173 = vadd.f32 %v53, %v172
  %v174 = vpop.f32.mrb[0].mxu0
  %v175 = vpop.f32.mrb[0].mxu0
  %176 = vdwg.mxu0
  %v177 = vmax.f32 %v171, 0.0
  %v178 = vmax.f32 %v173, 0.0
  %v179 = vpack.c.bf16 %v177, %v177
  %v180 = vpack.c.bf16 %v178, %v178
  %v181 = vld [vmem:[%s3] sm:$0xff]
  %v182 = vld [vmem:[%s3 + $0x8] sm:$0xff]
  %v183 = vld [vmem:[%s3 + $0x10] sm:$0xff]
  %v184 = vld [vmem:[%s3 + $0x18] sm:$0xff]
  %v185 = vld [vmem:[%s3 + $0x20] sm:$0xff]
  %v186 = vld [vmem:[%s3 + $0x28] sm:$0xff]
  %v187 = vld [vmem:[%s3 + $0x30] sm:$0xff]
  %v188 = vld [vmem:[%s3 + $0x38] sm:$0xff]
  %v189 = vld [vmem:[%s3 + $0x40] sm:$0xff]
  %v190 = vld [vmem:[%s3 + $0x48] sm:$0xff]
  %v191 = vld [vmem:[%s3 + $0x50] sm:$0xff]
  %v192 = vld [vmem:[%s3 + $0x58] sm:$0xff]
  %v193 = vld [vmem:[%s3 + $0x60] sm:$0xff]
  %v194 = vld [vmem:[%s3 + $0x68] sm:$0xff]
  %v195 = vld [vmem:[%s3 + $0x70] sm:$0xff]
  %v196 = vld [vmem:[%s3 + $0x78] sm:$0xff]
  %v197 = vld [vmem:[%s3 + $0x80] sm:$0xff]
  %v198 = vld [vmem:[%s3 + $0x88] sm:$0xff]
  %v199 = vld [vmem:[%s3 + $0x90] sm:$0xff]
  %v200 = vld [vmem:[%s3 + $0x98] sm:$0xff]
  %v201 = vld [vmem:[%s3 + $0xa0] sm:$0xff]
  %v202 = vld [vmem:[%s3 + $0xa8] sm:$0xff]
  %v203 = vld [vmem:[%s3 + $0xb0] sm:$0xff]
  %v204 = vld [vmem:[%s3 + $0xb8] sm:$0xff]
  %v205 = vld [vmem:[%s3 + $0xc0] sm:$0xff]
  %v206 = vld [vmem:[%s3 + $0xc8] sm:$0xff]
  %v207 = vld [vmem:[%s3 + $0xd0] sm:$0xff]
  %v208 = vld [vmem:[%s3 + $0xd8] sm:$0xff]
  %v209 = vld [vmem:[%s3 + $0xe0] sm:$0xff]
  %v210 = vld [vmem:[%s3 + $0xe8] sm:$0xff]
  %v211 = vld [vmem:[%s3 + $0xf0] sm:$0xff]
  %v212 = vld [vmem:[%s3 + $0xf8] sm:$0xff]
  %v213 = vld [vmem:[%s3 + $0x100] sm:$0xff]
  %v214 = vld [vmem:[%s3 + $0x108] sm:$0xff]
  %v215 = vld [vmem:[%s3 + $0x110] sm:$0xff]
  %v216 = vld [vmem:[%s3 + $0x118] sm:$0xff]
  %v217 = vld [vmem:[%s3 + $0x120] sm:$0xff]
  %v218 = vld [vmem:[%s3 + $0x128] sm:$0xff]
  %v219 = vld [vmem:[%s3 + $0x130] sm:$0xff]
  %v220 = vld [vmem:[%s3 + $0x138] sm:$0xff]
  %v221 = vld [vmem:[%s3 + $0x140] sm:$0xff]
  %v222 = vld [vmem:[%s3 + $0x148] sm:$0xff]
  %v223 = vld [vmem:[%s3 + $0x150] sm:$0xff]
  %v224 = vld [vmem:[%s3 + $0x158] sm:$0xff]
  %v225 = vld [vmem:[%s3 + $0x160] sm:$0xff]
  %v226 = vld [vmem:[%s3 + $0x168] sm:$0xff]
  %v227 = vld [vmem:[%s3 + $0x170] sm:$0xff]
  %v228 = vld [vmem:[%s3 + $0x178] sm:$0xff]
  %v229 = vld [vmem:[%s3 + $0x180] sm:$0xff]
  %v230 = vld [vmem:[%s3 + $0x188] sm:$0xff]
  %v231 = vld [vmem:[%s3 + $0x190] sm:$0xff]
  %v232 = vld [vmem:[%s3 + $0x198] sm:$0xff]
  %v233 = vld [vmem:[%s3 + $0x1a0] sm:$0xff]
  %v234 = vld [vmem:[%s3 + $0x1a8] sm:$0xff]
  %v235 = vld [vmem:[%s3 + $0x1b0] sm:$0xff]
  %v236 = vld [vmem:[%s3 + $0x1b8] sm:$0xff]
  %v237 = vld [vmem:[%s3 + $0x1c0] sm:$0xff]
  %v238 = vld [vmem:[%s3 + $0x1c8] sm:$0xff]
  %v239 = vld [vmem:[%s3 + $0x1d0] sm:$0xff]
  %v240 = vld [vmem:[%s3 + $0x1d8] sm:$0xff]
  %v241 = vld [vmem:[%s3 + $0x1e0] sm:$0xff]
  %v242 = vld [vmem:[%s3 + $0x1e8] sm:$0xff]
  %v243 = vld [vmem:[%s3 + $0x1f0] sm:$0xff]
  %v244 = vld [vmem:[%s3 + $0x1f8] sm:$0xff]
  %v245 = vld [vmem:[%s4] sm:$0xf]
  %v247 = vlaneseq
  %v248 = vshrl.u32 %v247, 7
  %v249 = vsub.s32 0, %v248
  %v250 = vrot.slane %v245, %v249
  %v251 = vlaneseq
  %v252 = vshrl.u32 %v251, 7
  %v253 = vsub.s32 1, %v252
  %v254 = vrot.slane %v245, %v253
  %v255 = vlaneseq
  %v256 = vshrl.u32 %v255, 7
  %v257 = vsub.s32 2, %v256
  %v258 = vrot.slane %v245, %v257
  %v259 = vlaneseq
  %v260 = vshrl.u32 %v259, 7
  %v261 = vsub.s32 3, %v260
  %v262 = vrot.slane %v245, %v261
  %v331 = vunpack.c.l.b16 %v181
  %v332 = vunpack.c.h.b16 %v181
  %v333 = vunpack.c.l.b16 %v182
  %v334 = vunpack.c.h.b16 %v182
  %v335 = vunpack.c.l.b16 %v183
  %v336 = vunpack.c.h.b16 %v183
  %v337 = vunpack.c.l.b16 %v184
  %v338 = vunpack.c.h.b16 %v184
  %v339 = vunpack.c.l.b16 %v185
  %v340 = vunpack.c.h.b16 %v185
  %v341 = vunpack.c.l.b16 %v186
  %v342 = vunpack.c.h.b16 %v186
  %v343 = vunpack.c.l.b16 %v187
  %v344 = vunpack.c.h.b16 %v187
  %v345 = vunpack.c.l.b16 %v188
  %v346 = vunpack.c.h.b16 %v188
  %v347 = vunpack.c.l.b16 %v189
  %v348 = vunpack.c.h.b16 %v189
  %v349 = vunpack.c.l.b16 %v190
  %v350 = vunpack.c.h.b16 %v190
  %v351 = vunpack.c.l.b16 %v191
  %v352 = vunpack.c.h.b16 %v191
  %v353 = vunpack.c.l.b16 %v192
  %v354 = vunpack.c.h.b16 %v192
  %v355 = vunpack.c.l.b16 %v193
  %v356 = vunpack.c.h.b16 %v193
  %v357 = vunpack.c.l.b16 %v194
  %v358 = vunpack.c.h.b16 %v194
  %v359 = vunpack.c.l.b16 %v195
  %v360 = vunpack.c.h.b16 %v195
  %v361 = vunpack.c.l.b16 %v196
  %v362 = vunpack.c.h.b16 %v196
  %v363 = vunpack.c.l.b16 %v197
  %v364 = vunpack.c.h.b16 %v197
  %v365 = vunpack.c.l.b16 %v198
  %v366 = vunpack.c.h.b16 %v198
  %v367 = vunpack.c.l.b16 %v199
  %v368 = vunpack.c.h.b16 %v199
  %v369 = vunpack.c.l.b16 %v200
  %v370 = vunpack.c.h.b16 %v200
  %v371 = vunpack.c.l.b16 %v201
  %v372 = vunpack.c.h.b16 %v201
  %v373 = vunpack.c.l.b16 %v202
  %v374 = vunpack.c.h.b16 %v202
  %v375 = vunpack.c.l.b16 %v203
  %v376 = vunpack.c.h.b16 %v203
  %v377 = vunpack.c.l.b16 %v204
  %v378 = vunpack.c.h.b16 %v204
  %v379 = vunpack.c.l.b16 %v205
  %v380 = vunpack.c.h.b16 %v205
  %v381 = vunpack.c.l.b16 %v206
  %v382 = vunpack.c.h.b16 %v206
  %v383 = vunpack.c.l.b16 %v207
  %v384 = vunpack.c.h.b16 %v207
  %v385 = vunpack.c.l.b16 %v208
  %v386 = vunpack.c.h.b16 %v208
  %v387 = vunpack.c.l.b16 %v209
  %v388 = vunpack.c.h.b16 %v209
  %v389 = vunpack.c.l.b16 %v210
  %v390 = vunpack.c.h.b16 %v210
  %v391 = vunpack.c.l.b16 %v211
  %v392 = vunpack.c.h.b16 %v211
  %v393 = vunpack.c.l.b16 %v212
  %v394 = vunpack.c.h.b16 %v212
  %v395 = vunpack.c.l.b16 %v213
  %v396 = vunpack.c.h.b16 %v213
  %v397 = vunpack.c.l.b16 %v214
  %v398 = vunpack.c.h.b16 %v214
  %v399 = vunpack.c.l.b16 %v215
  %v400 = vunpack.c.h.b16 %v215
  %v401 = vunpack.c.l.b16 %v216
  %v402 = vunpack.c.h.b16 %v216
  %v403 = vunpack.c.l.b16 %v217
  %v404 = vunpack.c.h.b16 %v217
  %v405 = vunpack.c.l.b16 %v218
  %v406 = vunpack.c.h.b16 %v218
  %v407 = vunpack.c.l.b16 %v219
  %v408 = vunpack.c.h.b16 %v219
  %v409 = vunpack.c.l.b16 %v220
  %v410 = vunpack.c.h.b16 %v220
  %v411 = vunpack.c.l.b16 %v221
  %v412 = vunpack.c.h.b16 %v221
  %v413 = vunpack.c.l.b16 %v222
  %v414 = vunpack.c.h.b16 %v222
  %v415 = vunpack.c.l.b16 %v223
  %v416 = vunpack.c.h.b16 %v223
  %v417 = vunpack.c.l.b16 %v224
  %v418 = vunpack.c.h.b16 %v224
  %v419 = vunpack.c.l.b16 %v225
  %v420 = vunpack.c.h.b16 %v225
  %v421 = vunpack.c.l.b16 %v226
  %v422 = vunpack.c.h.b16 %v226
  %v423 = vunpack.c.l.b16 %v227
  %v424 = vunpack.c.h.b16 %v227
  %v425 = vunpack.c.l.b16 %v228
  %v426 = vunpack.c.h.b16 %v228
  %v427 = vunpack.c.l.b16 %v229
  %v428 = vunpack.c.h.b16 %v229
  %v429 = vunpack.c.l.b16 %v230
  %v430 = vunpack.c.h.b16 %v230
  %v431 = vunpack.c.l.b16 %v231
  %v432 = vunpack.c.h.b16 %v231
  %v433 = vunpack.c.l.b16 %v232
  %v434 = vunpack.c.h.b16 %v232
  %v435 = vunpack.c.l.b16 %v233
  %v436 = vunpack.c.h.b16 %v233
  %v437 = vunpack.c.l.b16 %v234
  %v438 = vunpack.c.h.b16 %v234
  %v439 = vunpack.c.l.b16 %v235
  %v440 = vunpack.c.h.b16 %v235
  %v441 = vunpack.c.l.b16 %v236
  %v442 = vunpack.c.h.b16 %v236
  %v443 = vunpack.c.l.b16 %v237
  %v444 = vunpack.c.h.b16 %v237
  %v445 = vunpack.c.l.b16 %v238
  %v446 = vunpack.c.h.b16 %v238
  %v447 = vunpack.c.l.b16 %v239
  %v448 = vunpack.c.h.b16 %v239
  %v449 = vunpack.c.l.b16 %v240
  %v450 = vunpack.c.h.b16 %v240
  %v451 = vunpack.c.l.b16 %v241
  %v452 = vunpack.c.h.b16 %v241
  %v453 = vunpack.c.l.b16 %v242
  %v454 = vunpack.c.h.b16 %v242
  %v455 = vunpack.c.l.b16 %v243
  %v456 = vunpack.c.h.b16 %v243
  %v457 = vunpack.c.l.b16 %v244
  %v458 = vunpack.c.h.b16 %v244
  %v459 = vpack.c.b16 %v335, %v331
  %v460 = vpack.c.b16 %v336, %v332
  %v461 = vpack.c.b16 %v337, %v333
  %v462 = vpack.c.b16 %v338, %v334
  %v463 = vpack.c.b16 %v343, %v339
  %v464 = vpack.c.b16 %v344, %v340
  %v465 = vpack.c.b16 %v345, %v341
  %v466 = vpack.c.b16 %v346, %v342
  %v467 = vpack.c.b16 %v351, %v347
  %v468 = vpack.c.b16 %v352, %v348
  %v469 = vpack.c.b16 %v353, %v349
  %v470 = vpack.c.b16 %v354, %v350
  %v471 = vpack.c.b16 %v359, %v355
  %v472 = vpack.c.b16 %v360, %v356
  %v473 = vpack.c.b16 %v361, %v357
  %v474 = vpack.c.b16 %v362, %v358
  %v475 = vpack.c.b16 %v367, %v363
  %v476 = vpack.c.b16 %v368, %v364
  %v477 = vpack.c.b16 %v369, %v365
  %v478 = vpack.c.b16 %v370, %v366
  %v479 = vpack.c.b16 %v375, %v371
  %v480 = vpack.c.b16 %v376, %v372
  %v481 = vpack.c.b16 %v377, %v373
  %v482 = vpack.c.b16 %v378, %v374
  %v483 = vpack.c.b16 %v383, %v379
  %v484 = vpack.c.b16 %v384, %v380
  %v485 = vpack.c.b16 %v385, %v381
  %v486 = vpack.c.b16 %v386, %v382
  %v487 = vpack.c.b16 %v391, %v387
  %v488 = vpack.c.b16 %v392, %v388
  %v489 = vpack.c.b16 %v393, %v389
  %v490 = vpack.c.b16 %v394, %v390
  %v491 = vpack.c.b16 %v399, %v395
  %v492 = vpack.c.b16 %v400, %v396
  %v493 = vpack.c.b16 %v401, %v397
  %v494 = vpack.c.b16 %v402, %v398
  %v495 = vpack.c.b16 %v407, %v403
  %v496 = vpack.c.b16 %v408, %v404
  %v497 = vpack.c.b16 %v409, %v405
  %v498 = vpack.c.b16 %v410, %v406
  %v499 = vpack.c.b16 %v415, %v411
  %v500 = vpack.c.b16 %v416, %v412
  %v501 = vpack.c.b16 %v417, %v413
  %v502 = vpack.c.b16 %v418, %v414
  %v503 = vpack.c.b16 %v423, %v419
  %v504 = vpack.c.b16 %v424, %v420
  %v505 = vpack.c.b16 %v425, %v421
  %v506 = vpack.c.b16 %v426, %v422
  %v507 = vpack.c.b16 %v431, %v427
  %v508 = vpack.c.b16 %v432, %v428
  %v509 = vpack.c.b16 %v433, %v429
  %v510 = vpack.c.b16 %v434, %v430
  %v511 = vpack.c.b16 %v439, %v435
  %v512 = vpack.c.b16 %v440, %v436
  %v513 = vpack.c.b16 %v441, %v437
  %v514 = vpack.c.b16 %v442, %v438
  %v515 = vpack.c.b16 %v447, %v443
  %v516 = vpack.c.b16 %v448, %v444
  %v517 = vpack.c.b16 %v449, %v445
  %v518 = vpack.c.b16 %v450, %v446
  %v519 = vpack.c.b16 %v455, %v451
  %v520 = vpack.c.b16 %v456, %v452
  %v521 = vpack.c.b16 %v457, %v453
  %v522 = vpack.c.b16 %v458, %v454
  %587 = vmatprep.subr.bf16.mxu0 %v460
  %588 = vmatpush1.bf16.msra.mxu0 %v459
  %589 = vmatprep.subr.bf16.mxu0 %v464
  %590 = vmatpush1.bf16.msra.mxu0 %v463
  %591 = vmatprep.subr.bf16.mxu0 %v468
  %592 = vmatpush1.bf16.msra.mxu0 %v467
  %593 = vmatprep.subr.bf16.mxu0 %v472
  %594 = vmatpush1.bf16.msra.mxu0 %v471
  %595 = vmatprep.subr.bf16.mxu0 %v476
  %596 = vmatpush1.bf16.msra.mxu0 %v475
  %597 = vmatprep.subr.bf16.mxu0 %v480
  %598 = vmatpush1.bf16.msra.mxu0 %v479
  %599 = vmatprep.subr.bf16.mxu0 %v484
  %600 = vmatpush1.bf16.msra.mxu0 %v483
  %601 = vmatprep.subr.bf16.mxu0 %v488
  %602 = vmatpush1.bf16.msra.mxu0 %v487
  %603 = vmatprep.subr.bf16.mxu0 %v492
  %604 = vmatpush1.bf16.msra.mxu0 %v491
  %605 = vmatprep.subr.bf16.mxu0 %v496
  %606 = vmatpush1.bf16.msra.mxu0 %v495
  %607 = vmatprep.subr.bf16.mxu0 %v500
  %608 = vmatpush1.bf16.msra.mxu0 %v499
  %609 = vmatprep.subr.bf16.mxu0 %v504
  %610 = vmatpush1.bf16.msra.mxu0 %v503
  %611 = vmatprep.subr.bf16.mxu0 %v508
  %612 = vmatpush1.bf16.msra.mxu0 %v507
  %613 = vmatprep.subr.bf16.mxu0 %v512
  %614 = vmatpush1.bf16.msra.mxu0 %v511
  %615 = vmatprep.subr.bf16.mxu0 %v516
  %616 = vmatpush1.bf16.msra.mxu0 %v515
  %617 = vmatprep.subr.bf16.mxu0 %v520
  %618 = vmatpush1.bf16.msra.mxu0 %v519
  %619 = vmatprep.mubr.bf16.mxu0 %v180
  %620 = vmatmul.mubr.bf16.gmra.mrb[0].mxu0 %v179
  %v621 = vpop.f32.mrb[0].mxu0
  %v622 = vadd.f32 %v250, %v621
  %v623 = vpop.f32.mrb[0].mxu0
  %v624 = vadd.f32 %v254, %v623
  %v625 = vpop.f32.mrb[0].mxu0
  %v626 = vpop.f32.mrb[0].mxu0
  %627 = vdwg.mxu0
  %628 = vmatprep.subr.bf16.mxu0 %v462
  %629 = vmatpush1.bf16.msra.mxu0 %v461
  %630 = vmatprep.subr.bf16.mxu0 %v466
  %631 = vmatpush1.bf16.msra.mxu0 %v465
  %632 = vmatprep.subr.bf16.mxu0 %v470
  %633 = vmatpush1.bf16.msra.mxu0 %v469
  %634 = vmatprep.subr.bf16.mxu0 %v474
  %635 = vmatpush1.bf16.msra.mxu0 %v473
  %636 = vmatprep.subr.bf16.mxu0 %v478
  %637 = vmatpush1.bf16.msra.mxu0 %v477
  %638 = vmatprep.subr.bf16.mxu0 %v482
  %639 = vmatpush1.bf16.msra.mxu0 %v481
  %640 = vmatprep.subr.bf16.mxu0 %v486
  %641 = vmatpush1.bf16.msra.mxu0 %v485
  %642 = vmatprep.subr.bf16.mxu0 %v490
  %643 = vmatpush1.bf16.msra.mxu0 %v489
  %644 = vmatprep.subr.bf16.mxu0 %v494
  %645 = vmatpush1.bf16.msra.mxu0 %v493
  %646 = vmatprep.subr.bf16.mxu0 %v498
  %647 = vmatpush1.bf16.msra.mxu0 %v497
  %648 = vmatprep.subr.bf16.mxu0 %v502
  %649 = vmatpush1.bf16.msra.mxu0 %v501
  %650 = vmatprep.subr.bf16.mxu0 %v506
  %651 = vmatpush1.bf16.msra.mxu0 %v505
  %652 = vmatprep.subr.bf16.mxu0 %v510
  %653 = vmatpush1.bf16.msra.mxu0 %v509
  %654 = vmatprep.subr.bf16.mxu0 %v514
  %655 = vmatpush1.bf16.msra.mxu0 %v513
  %656 = vmatprep.subr.bf16.mxu0 %v518
  %657 = vmatpush1.bf16.msra.mxu0 %v517
  %658 = vmatprep.subr.bf16.mxu0 %v522
  %659 = vmatpush1.bf16.msra.mxu0 %v521
  %660 = vmatprep.mubr.bf16.mxu0 %v180
  %661 = vmatmul.mubr.bf16.gmra.mrb[0].mxu0 %v179
  %v662 = vpop.f32.mrb[0].mxu0
  %v663 = vadd.f32 %v258, %v662
  %v664 = vpop.f32.mrb[0].mxu0
  %v665 = vadd.f32 %v262, %v664
  %v666 = vpop.f32.mrb[0].mxu0
  %v667 = vpop.f32.mrb[0].mxu0
  %668 = vdwg.mxu0
  %v669 = vmax.f32 %v622, 0.0
  %v670 = vmax.f32 %v624, 0.0
  %v671 = vmax.f32 %v663, 0.0
  %v672 = vmax.f32 %v665, 0.0
  %v673 = vpack.c.bf16 %v669, %v669
  %v674 = vpack.c.bf16 %v670, %v670
  %v675 = vpack.c.bf16 %v671, %v671
  %v676 = vpack.c.bf16 %v672, %v672
  %v677 = vld [vmem:[%s5] sm:$0xf]
  %v678 = vld [vmem:[%s5 + $0x4] sm:$0xf]
  %v679 = vld [vmem:[%s5 + $0x8] sm:$0xf]
  %v680 = vld [vmem:[%s5 + $0xc] sm:$0xf]
  %v681 = vld [vmem:[%s5 + $0x10] sm:$0xf]
  %v682 = vld [vmem:[%s5 + $0x14] sm:$0xf]
  %v683 = vld [vmem:[%s5 + $0x18] sm:$0xf]
  %v684 = vld [vmem:[%s5 + $0x1c] sm:$0xf]
  %v685 = vld [vmem:[%s5 + $0x20] sm:$0xf]
  %v686 = vld [vmem:[%s5 + $0x24] sm:$0xf]
  %v687 = vld [vmem:[%s5 + $0x28] sm:$0xf]
  %v688 = vld [vmem:[%s5 + $0x2c] sm:$0xf]
  %v689 = vld [vmem:[%s5 + $0x30] sm:$0xf]
  %v690 = vld [vmem:[%s5 + $0x34] sm:$0xf]
  %v691 = vld [vmem:[%s5 + $0x38] sm:$0xf]
  %v692 = vld [vmem:[%s5 + $0x3c] sm:$0xf]
  %v693 = vld [vmem:[%s5 + $0x40] sm:$0xf]
  %v694 = vld [vmem:[%s5 + $0x44] sm:$0xf]
  %v695 = vld [vmem:[%s5 + $0x48] sm:$0xf]
  %v696 = vld [vmem:[%s5 + $0x4c] sm:$0xf]
  %v697 = vld [vmem:[%s5 + $0x50] sm:$0xf]
  %v698 = vld [vmem:[%s5 + $0x54] sm:$0xf]
  %v699 = vld [vmem:[%s5 + $0x58] sm:$0xf]
  %v700 = vld [vmem:[%s5 + $0x5c] sm:$0xf]
  %v701 = vld [vmem:[%s5 + $0x60] sm:$0xf]
  %v702 = vld [vmem:[%s5 + $0x64] sm:$0xf]
  %v703 = vld [vmem:[%s5 + $0x68] sm:$0xf]
  %v704 = vld [vmem:[%s5 + $0x6c] sm:$0xf]
  %v705 = vld [vmem:[%s5 + $0x70] sm:$0xf]
  %v706 = vld [vmem:[%s5 + $0x74] sm:$0xf]
  %v707 = vld [vmem:[%s5 + $0x78] sm:$0xf]
  %v708 = vld [vmem:[%s5 + $0x7c] sm:$0xf]
  %v709 = vld [vmem:[%s5 + $0x80] sm:$0xf]
  %v710 = vld [vmem:[%s5 + $0x84] sm:$0xf]
  %v711 = vld [vmem:[%s5 + $0x88] sm:$0xf]
  %v712 = vld [vmem:[%s5 + $0x8c] sm:$0xf]
  %v713 = vld [vmem:[%s5 + $0x90] sm:$0xf]
  %v714 = vld [vmem:[%s5 + $0x94] sm:$0xf]
  %v715 = vld [vmem:[%s5 + $0x98] sm:$0xf]
  %v716 = vld [vmem:[%s5 + $0x9c] sm:$0xf]
  %v717 = vld [vmem:[%s5 + $0xa0] sm:$0xf]
  %v718 = vld [vmem:[%s5 + $0xa4] sm:$0xf]
  %v719 = vld [vmem:[%s5 + $0xa8] sm:$0xf]
  %v720 = vld [vmem:[%s5 + $0xac] sm:$0xf]
  %v721 = vld [vmem:[%s5 + $0xb0] sm:$0xf]
  %v722 = vld [vmem:[%s5 + $0xb4] sm:$0xf]
  %v723 = vld [vmem:[%s5 + $0xb8] sm:$0xf]
  %v724 = vld [vmem:[%s5 + $0xbc] sm:$0xf]
  %v725 = vld [vmem:[%s5 + $0xc0] sm:$0xf]
  %v726 = vld [vmem:[%s5 + $0xc4] sm:$0xf]
  %v727 = vld [vmem:[%s5 + $0xc8] sm:$0xf]
  %v728 = vld [vmem:[%s5 + $0xcc] sm:$0xf]
  %v729 = vld [vmem:[%s5 + $0xd0] sm:$0xf]
  %v730 = vld [vmem:[%s5 + $0xd4] sm:$0xf]
  %v731 = vld [vmem:[%s5 + $0xd8] sm:$0xf]
  %v732 = vld [vmem:[%s5 + $0xdc] sm:$0xf]
  %v733 = vld [vmem:[%s5 + $0xe0] sm:$0xf]
  %v734 = vld [vmem:[%s5 + $0xe4] sm:$0xf]
  %v735 = vld [vmem:[%s5 + $0xe8] sm:$0xf]
  %v736 = vld [vmem:[%s5 + $0xec] sm:$0xf]
  %v737 = vld [vmem:[%s5 + $0xf0] sm:$0xf]
  %v738 = vld [vmem:[%s5 + $0xf4] sm:$0xf]
  %v739 = vld [vmem:[%s5 + $0xf8] sm:$0xf]
  %v740 = vld [vmem:[%s5 + $0xfc] sm:$0xf]
  %v741 = vld [vmem:[%s6] sm:$0x1]
  %v743 = vlaneseq
  %v744 = vshrl.u32 %v743, 7
  %v745 = vsub.s32 0, %v744
  %v746 = vrot.slane %v741, %v745
  %v812 = vunpack.c.l.b16 %v677
  %v813 = vunpack.c.l.b16 %v678
  %v814 = vunpack.c.l.b16 %v679
  %v815 = vunpack.c.l.b16 %v680
  %v816 = vunpack.c.l.b16 %v681
  %v817 = vunpack.c.l.b16 %v682
  %v818 = vunpack.c.l.b16 %v683
  %v819 = vunpack.c.l.b16 %v684
  %v820 = vunpack.c.l.b16 %v685
  %v821 = vunpack.c.l.b16 %v686
  %v822 = vunpack.c.l.b16 %v687
  %v823 = vunpack.c.l.b16 %v688
  %v824 = vunpack.c.l.b16 %v689
  %v825 = vunpack.c.l.b16 %v690
  %v826 = vunpack.c.l.b16 %v691
  %v827 = vunpack.c.l.b16 %v692
  %v828 = vunpack.c.l.b16 %v693
  %v829 = vunpack.c.l.b16 %v694
  %v830 = vunpack.c.l.b16 %v695
  %v831 = vunpack.c.l.b16 %v696
  %v832 = vunpack.c.l.b16 %v697
  %v833 = vunpack.c.l.b16 %v698
  %v834 = vunpack.c.l.b16 %v699
  %v835 = vunpack.c.l.b16 %v700
  %v836 = vunpack.c.l.b16 %v701
  %v837 = vunpack.c.l.b16 %v702
  %v838 = vunpack.c.l.b16 %v703
  %v839 = vunpack.c.l.b16 %v704
  %v840 = vunpack.c.l.b16 %v705
  %v841 = vunpack.c.l.b16 %v706
  %v842 = vunpack.c.l.b16 %v707
  %v843 = vunpack.c.l.b16 %v708
  %v844 = vunpack.c.l.b16 %v709
  %v845 = vunpack.c.l.b16 %v710
  %v846 = vunpack.c.l.b16 %v711
  %v847 = vunpack.c.l.b16 %v712
  %v848 = vunpack.c.l.b16 %v713
  %v849 = vunpack.c.l.b16 %v714
  %v850 = vunpack.c.l.b16 %v715
  %v851 = vunpack.c.l.b16 %v716
  %v852 = vunpack.c.l.b16 %v717
  %v853 = vunpack.c.l.b16 %v718
  %v854 = vunpack.c.l.b16 %v719
  %v855 = vunpack.c.l.b16 %v720
  %v856 = vunpack.c.l.b16 %v721
  %v857 = vunpack.c.l.b16 %v722
  %v858 = vunpack.c.l.b16 %v723
  %v859 = vunpack.c.l.b16 %v724
  %v860 = vunpack.c.l.b16 %v725
  %v861 = vunpack.c.l.b16 %v726
  %v862 = vunpack.c.l.b16 %v727
  %v863 = vunpack.c.l.b16 %v728
  %v864 = vunpack.c.l.b16 %v729
  %v865 = vunpack.c.l.b16 %v730
  %v866 = vunpack.c.l.b16 %v731
  %v867 = vunpack.c.l.b16 %v732
  %v868 = vunpack.c.l.b16 %v733
  %v869 = vunpack.c.l.b16 %v734
  %v870 = vunpack.c.l.b16 %v735
  %v871 = vunpack.c.l.b16 %v736
  %v872 = vunpack.c.l.b16 %v737
  %v873 = vunpack.c.l.b16 %v738
  %v874 = vunpack.c.l.b16 %v739
  %v875 = vunpack.c.l.b16 %v740
  %v876 = vpack.c.b16 %v813, %v812
  %v877 = vpack.c.b16 %v815, %v814
  %v878 = vpack.c.b16 %v817, %v816
  %v879 = vpack.c.b16 %v819, %v818
  %v880 = vpack.c.b16 %v821, %v820
  %v881 = vpack.c.b16 %v823, %v822
  %v882 = vpack.c.b16 %v825, %v824
  %v883 = vpack.c.b16 %v827, %v826
  %v884 = vpack.c.b16 %v829, %v828
  %v885 = vpack.c.b16 %v831, %v830
  %v886 = vpack.c.b16 %v833, %v832
  %v887 = vpack.c.b16 %v835, %v834
  %v888 = vpack.c.b16 %v837, %v836
  %v889 = vpack.c.b16 %v839, %v838
  %v890 = vpack.c.b16 %v841, %v840
  %v891 = vpack.c.b16 %v843, %v842
  %v892 = vpack.c.b16 %v845, %v844
  %v893 = vpack.c.b16 %v847, %v846
  %v894 = vpack.c.b16 %v849, %v848
  %v895 = vpack.c.b16 %v851, %v850
  %v896 = vpack.c.b16 %v853, %v852
  %v897 = vpack.c.b16 %v855, %v854
  %v898 = vpack.c.b16 %v857, %v856
  %v899 = vpack.c.b16 %v859, %v858
  %v900 = vpack.c.b16 %v861, %v860
  %v901 = vpack.c.b16 %v863, %v862
  %v902 = vpack.c.b16 %v865, %v864
  %v903 = vpack.c.b16 %v867, %v866
  %v904 = vpack.c.b16 %v869, %v868
  %v905 = vpack.c.b16 %v871, %v870
  %v906 = vpack.c.b16 %v873, %v872
  %v907 = vpack.c.b16 %v875, %v874
  %940 = vmatprep.subr.bf16.mxu0 0
  %941 = vmatpush1.bf16.msra.mxu0 %v876
  %942 = vmatprep.subr.bf16.mxu0 0
  %943 = vmatpush1.bf16.msra.mxu0 %v877
  %944 = vmatprep.subr.bf16.mxu0 0
  %945 = vmatpush1.bf16.msra.mxu0 %v878
  %946 = vmatprep.subr.bf16.mxu0 0
  %947 = vmatpush1.bf16.msra.mxu0 %v879
  %948 = vmatprep.subr.bf16.mxu0 0
  %949 = vmatpush1.bf16.msra.mxu0 %v880
  %950 = vmatprep.subr.bf16.mxu0 0
  %951 = vmatpush1.bf16.msra.mxu0 %v881
  %952 = vmatprep.subr.bf16.mxu0 0
  %953 = vmatpush1.bf16.msra.mxu0 %v882
  %954 = vmatprep.subr.bf16.mxu0 0
  %955 = vmatpush1.bf16.msra.mxu0 %v883
  %956 = vmatprep.subr.bf16.mxu0 0
  %957 = vmatpush1.bf16.msra.mxu0 %v884
  %958 = vmatprep.subr.bf16.mxu0 0
  %959 = vmatpush1.bf16.msra.mxu0 %v885
  %960 = vmatprep.subr.bf16.mxu0 0
  %961 = vmatpush1.bf16.msra.mxu0 %v886
  %962 = vmatprep.subr.bf16.mxu0 0
  %963 = vmatpush1.bf16.msra.mxu0 %v887
  %964 = vmatprep.subr.bf16.mxu0 0
  %965 = vmatpush1.bf16.msra.mxu0 %v888
  %966 = vmatprep.subr.bf16.mxu0 0
  %967 = vmatpush1.bf16.msra.mxu0 %v889
  %968 = vmatprep.subr.bf16.mxu0 0
  %969 = vmatpush1.bf16.msra.mxu0 %v890
  %970 = vmatprep.subr.bf16.mxu0 0
  %971 = vmatpush1.bf16.msra.mxu0 %v891
  %972 = vmatprep.mubr.bf16.mxu0 %v674
  %973 = vmatmul.mubr.bf16.gmra.mrb[0].mxu0 %v673
  %v974 = vpop.f32.mrb[0].mxu0
  %v975 = vadd.f32 %v746, %v974
  %v976 = vpop.f32.mrb[0].mxu0
  %v977 = vpop.f32.mrb[0].mxu0
  %v978 = vpop.f32.mrb[0].mxu0
  %979 = vdwg.mxu0
  %980 = vmatprep.subr.bf16.mxu0 0
  %981 = vmatpush1.bf16.msra.mxu0 %v892
  %982 = vmatprep.subr.bf16.mxu0 0
  %983 = vmatpush1.bf16.msra.mxu0 %v893
  %984 = vmatprep.subr.bf16.mxu0 0
  %985 = vmatpush1.bf16.msra.mxu0 %v894
  %986 = vmatprep.subr.bf16.mxu0 0
  %987 = vmatpush1.bf16.msra.mxu0 %v895
  %988 = vmatprep.subr.bf16.mxu0 0
  %989 = vmatpush1.bf16.msra.mxu0 %v896
  %990 = vmatprep.subr.bf16.mxu0 0
  %991 = vmatpush1.bf16.msra.mxu0 %v897
  %992 = vmatprep.subr.bf16.mxu0 0
  %993 = vmatpush1.bf16.msra.mxu0 %v898
  %994 = vmatprep.subr.bf16.mxu0 0
  %995 = vmatpush1.bf16.msra.mxu0 %v899
  %996 = vmatprep.subr.bf16.mxu0 0
  %997 = vmatpush1.bf16.msra.mxu0 %v900
  %998 = vmatprep.subr.bf16.mxu0 0
  %999 = vmatpush1.bf16.msra.mxu0 %v901
  %1000 = vmatprep.subr.bf16.mxu0 0
  %1001 = vmatpush1.bf16.msra.mxu0 %v902
  %1002 = vmatprep.subr.bf16.mxu0 0
  %1003 = vmatpush1.bf16.msra.mxu0 %v903
  %1004 = vmatprep.subr.bf16.mxu0 0
  %1005 = vmatpush1.bf16.msra.mxu0 %v904
  %1006 = vmatprep.subr.bf16.mxu0 0
  %1007 = vmatpush1.bf16.msra.mxu0 %v905
  %1008 = vmatprep.subr.bf16.mxu0 0
  %1009 = vmatpush1.bf16.msra.mxu0 %v906
  %1010 = vmatprep.subr.bf16.mxu0 0
  %1011 = vmatpush1.bf16.msra.mxu0 %v907
  %1012 = vmatprep.mubr.bf16.mxu0 %v676
  %1013 = vmatmul.mubr.bf16.gmra.mrb[0].mxu0 %v675
  %v1014 = vpop.f32.mrb[0].mxu0
  %v1015 = vadd.f32 %v975, %v1014
  %v1016 = vpop.f32.mrb[0].mxu0
  %v1017 = vpop.f32.mrb[0].mxu0
  %v1018 = vpop.f32.mrb[0].mxu0
  %1019 = vdwg.mxu0
  %v1020 = vsub.f32 0.0, %v1015
  %v1021 = vmul.f32 %v1020, 1.442695
  %v1022 = vpow.pop %v1021
  %v1023 = vadd.f32 %v1022, 1.0
  %v1024 = vrcp.pop %v1023
  %v1025 = vmax.f32 %v1024, 0.0
  %v1026 = vmin.f32 %v1025, 1.0
  %vm1027 = vcmask 523264
  %1028 = vst.msk [vmem:[%s7] sm:$0xff] %vm1027, %v1026
  // Predicated region
  $region30: #{unet_old_forward.7} parent=0 // pred_check
    _
  $region31: #{unet_old_forward.7} parent=0 // pred_check_branch
    %1030 = sbr.rel (0) target = $region33
  $region32: #{unet_old_forward.7} parent=0 // pred_region
    _
  $region33: #{unet_old_forward.7} parent=0 // pred_fallthru
    _
  // Predicated region
  $region34: #{unet_old_forward.7} parent=0 // pred_check
    _
  $region35: #{unet_old_forward.7} parent=0 // pred_check_branch
    %1032 = sbr.rel (0) target = $region37
  $region36: #{unet_old_forward.7} parent=0 // pred_region
    _
  $region37: #{unet_old_forward.7} parent=0 // pred_fallthru
    _

</llo_original>
